<compile_context>
chip_gen: v7x
topology: tpu7x:2x2x1
jax: 0.10.0
libtpu: 0.0.40
codegen_flags: <defaults>
</compile_context>

<pallas_src>
import functools

import jax
import jax.numpy as jnp
from jax.experimental import pallas as pl
from jax.experimental.pallas import tpu as pltpu

IN_DIM = 28 * 28        # 784
HIDDEN = 1400           # `num` in the reference
HIDDEN_PAD = 1408       # 1400 padded up to a multiple of 128
OUT_DIM = 20
OUT_PAD = 128           # lane-dense padded logits / output width
NEG_BIG = -1e30         # bias for padded logit columns -> exp() underflows to 0


def _round_up(n, m):
    return ((n + m - 1) // m) * m


def _mlp_kernel(x_ref, w1_ref, b1_ref, w2_ref, b2_ref, o_ref):
    # ---- fc1: cast x tile to bf16 in-kernel (VPU, hidden under MXU), then
    #      bf16 x bf16 -> f32 on the MXU, bias-add + sigmoid in f32 ----
    xb = x_ref[...].astype(jnp.bfloat16)
    h = jnp.dot(xb, w1_ref[...], preferred_element_type=jnp.float32)
    h = h + b1_ref[...]                                     # (TB,1408)+(1,1408)
    # sigmoid = 1 / (1 + exp(-h)); exp and the approx reciprocal both run on
    # the EUP slot, freeing VALU slots (error ~1e-4, below bf16 noise floor).
    h = pl.reciprocal(1.0 + jnp.exp(-h), approx=True)

    # ---- fc2: bf16 x bf16 -> f32 on the MXU (lane-dense 128-wide logits),
    #      bias (incl. -1e30 padded columns) added in f32, stable softmax ----
    hb = h.astype(jnp.bfloat16)
    logits = jnp.dot(hb, w2_ref[...], preferred_element_type=jnp.float32)
    logits = logits + b2_ref[...]                           # padded cols -> -1e30
    m = jnp.max(logits, axis=-1, keepdims=True)
    e = jnp.exp(logits - m)
    denom = jnp.sum(e, axis=-1, keepdims=True)
    # Exact reciprocal here keeps row-normalization at f32 precision.
    o_ref[...] = (e * pl.reciprocal(denom, approx=False)).astype(o_ref.dtype)


def prepare_params(w1, b1, w2, b2):
    """One-time conversion of f32 params to kernel-ready form.

    Returns (w1p bf16 (784,1408), b1p f32 (1,1408), w2p bf16 (1408,128),
    b2p f32 (1,128)).  Padded hidden columns are zero (sigmoid -> 0.5) and the
    matching w2 rows are zero, so they contribute nothing; padded output
    columns carry a -1e30 bias so softmax assigns them exactly zero.
    """
    w1p = jnp.pad(w1, ((0, 0), (0, HIDDEN_PAD - HIDDEN))).astype(jnp.bfloat16)
    b1p = jnp.pad(b1, ((0, 0), (0, HIDDEN_PAD - HIDDEN)))
    w2p = jnp.pad(w2, ((0, HIDDEN_PAD - HIDDEN), (0, OUT_PAD - OUT_DIM))).astype(
        jnp.bfloat16)
    b2p = jnp.pad(b2, ((0, 0), (0, OUT_PAD - OUT_DIM)), constant_values=NEG_BIG)
    return w1p, b1p, w2p, b2p


@functools.partial(jax.jit, static_argnames=("tb",))
def net_forward(x, w1p, b1p, w2p, b2p, *, tb=1024):
    """x: (B, 784) f32; params from prepare_params. Returns (B, 20) f32 probs.

    tb: max batch tile. Real VMEM footprint at TB=1024 is ~25 MiB, safe on
    v7x (64 MiB physical); v5e/v6e (128 MiB) can go larger.
    """
    B = x.shape[0]

    # Batch tile: multiple of 8 (sublane); aim for >=2 grid tiles so the
    # "parallel" batch axis can shard across v7x's two TensorCores.
    B8 = _round_up(B, 8)
    if B8 >= 16:
        TB = min(tb, _round_up(B8 // 2, 8))
    else:
        TB = B8
    B_pad = _round_up(B8, TB)
    if B_pad != B:
        x = jnp.pad(x, ((0, B_pad - B), (0, 0)))

    grid = (B_pad // TB,)
    out_pad = pl.pallas_call(
        _mlp_kernel,
        out_shape=jax.ShapeDtypeStruct((B_pad, OUT_PAD), jnp.float32),
        grid_spec=pltpu.PrefetchScalarGridSpec(
            num_scalar_prefetch=0,
            grid=grid,
            in_specs=[
                # x tile marches over the batch (double-buffered by the pipeline)
                pl.BlockSpec((TB, IN_DIM), lambda i: (i, 0)),
                # weights / biases: constant index_map -> resident in VMEM
                pl.BlockSpec((IN_DIM, HIDDEN_PAD), lambda i: (0, 0)),
                pl.BlockSpec((1, HIDDEN_PAD), lambda i: (0, 0)),
                pl.BlockSpec((HIDDEN_PAD, OUT_PAD), lambda i: (0, 0)),
                pl.BlockSpec((1, OUT_PAD), lambda i: (0, 0)),
            ],
            out_specs=pl.BlockSpec((TB, OUT_PAD), lambda i: (i, 0)),
        ),
        compiler_params=pltpu.CompilerParams(
            # independent batch tiles -> megacore sharding on v7x (2 TCs/chip)
            dimension_semantics=("parallel",),
            vmem_limit_bytes=48 << 20,
        ),
    )(x, w1p, b1p, w2p, b2p)

    return out_pad[:B, :OUT_DIM]


def init_params(key):
    """Deterministic init mimicking nn.Linear's U(-1/sqrt(fan_in), +1/sqrt(fan_in)).

    Note: biases are kept as (1, N) (vs PyTorch's (N,)); transpose/reshape when
    porting real checkpoints.
    """
    k1, k2, k3, k4 = jax.random.split(key, 4)
    s1 = 1.0 / jnp.sqrt(jnp.float32(IN_DIM))
    s2 = 1.0 / jnp.sqrt(jnp.float32(HIDDEN))
    w1 = jax.random.uniform(k1, (IN_DIM, HIDDEN), jnp.float32, -s1, s1)
    b1 = jax.random.uniform(k2, (1, HIDDEN), jnp.float32, -s1, s1)
    w2 = jax.random.uniform(k3, (HIDDEN, OUT_DIM), jnp.float32, -s2, s2)
    b2 = jax.random.uniform(k4, (1, OUT_DIM), jnp.float32, -s2, s2)
    return w1, b1, w2, b2


def _reference(x, w1, b1, w2, b2):
    """Pure-JAX reference using the same bf16-matmul / f32-accumulate contract."""
    xb = x.astype(jnp.bfloat16)
    w1b = w1.astype(jnp.bfloat16)
    pre = jnp.dot(xb, w1b, preferred_element_type=jnp.float32) + b1
    h = (1.0 / (1.0 + jnp.exp(-pre))).astype(jnp.bfloat16)
    logits = jnp.dot(h, w2.astype(jnp.bfloat16),
                     preferred_element_type=jnp.float32) + b2
    return jax.nn.softmax(logits, axis=-1)


if __name__ == "__main__":
    key = jax.random.PRNGKey(0)
    k_x, k_p = jax.random.split(key)
    w1, b1, w2, b2 = init_params(k_p)
    w1p, b1p, w2p, b2p = prepare_params(w1, b1, w2, b2)   # one-time, reused

    # Small case (single tile, B=8).
    B = 8
    x = jax.random.normal(k_x, (B, IN_DIM), jnp.float32)
    out = jax.block_until_ready(net_forward(x, w1p, b1p, w2p, b2p))
    ref = _reference(x, w1, b1, w2, b2)
    assert out.shape == (B, OUT_DIM)
    assert jnp.allclose(out, ref, atol=2e-3, rtol=2e-2), float(jnp.max(jnp.abs(out - ref)))
    assert jnp.allclose(jnp.sum(out, axis=-1), 1.0, atol=1e-5)

    # Larger case exercising the 2-tile parallel grid + padding path
    # (B=384 -> TB=192, grid=(2,)).
    B2 = 384
    x2 = jax.random.normal(jax.random.PRNGKey(1), (B2, IN_DIM), jnp.float32)
    out2 = jax.block_until_ready(net_forward(x2, w1p, b1p, w2p, b2p))
    ref2 = _reference(x2, w1, b1, w2, b2)
    assert out2.shape == (B2, OUT_DIM)
    assert jnp.allclose(out2, ref2, atol=2e-3, rtol=2e-2), float(jnp.max(jnp.abs(out2 - ref2)))
    assert jnp.allclose(jnp.sum(out2, axis=-1), 1.0, atol=1e-5)

    print("KERNEL_OK")
</pallas_src>

<mosaic_0001>
module attributes {stable_mosaic.version = 11 : i64} {
  func.func @_mlp_kernel(%arg0: i32, %arg1: memref<8x784xf32, #tpu.memory_space<vmem>>, %arg2: memref<784x1408xbf16, #tpu.memory_space<vmem>>, %arg3: memref<1x1408xf32, #tpu.memory_space<vmem>>, %arg4: memref<1408x128xbf16, #tpu.memory_space<vmem>>, %arg5: memref<1x128xf32, #tpu.memory_space<vmem>>, %arg6: memref<8x128xf32, #tpu.memory_space<vmem>>) attributes {dimension_semantics = [#tpu.dimension_semantics<parallel>], iteration_bounds = array<i64: 1>, scalar_prefetch = 0 : i64, scratch_operands = 0 : i64, tpu.core_type = #tpu.core_type<tc>, window_params = [{transform_indices = @transform_0, window_bounds = array<i64: 8, 784>}, {pipeline_mode = #tpu.pipeline_mode<synchronous>, transform_indices = @transform_1, window_bounds = array<i64: 784, 1408>}, {pipeline_mode = #tpu.pipeline_mode<synchronous>, transform_indices = @transform_2, window_bounds = array<i64: 1, 1408>}, {pipeline_mode = #tpu.pipeline_mode<synchronous>, transform_indices = @transform_3, window_bounds = array<i64: 1408, 128>}, {pipeline_mode = #tpu.pipeline_mode<synchronous>, transform_indices = @transform_4, window_bounds = array<i64: 1, 128>}, {transform_indices = @transform_5, window_bounds = array<i64: 8, 128>}]} {
    %c0 = arith.constant 0 : index
    %c0_0 = arith.constant 0 : index
    %0 = vector.load %arg1[%c0, %c0_0] : memref<8x784xf32, #tpu.memory_space<vmem>>, vector<8x784xf32>
    %1 = arith.truncf %0 : vector<8x784xf32> to vector<8x784xbf16>
    %c0_1 = arith.constant 0 : index
    %c0_2 = arith.constant 0 : index
    %2 = vector.load %arg2[%c0_1, %c0_2] : memref<784x1408xbf16, #tpu.memory_space<vmem>>, vector<784x1408xbf16>
    %cst = arith.constant dense<0.000000e+00> : vector<8x1408xf32>
    %3 = tpu.matmul %1, %2, %cst {dimension_numbers = #tpu.dot_dimension_numbers<[1], [0], [0], [1], [0, 0, 1, 1], [], []>} : vector<8x784xbf16>, vector<784x1408xbf16>, vector<8x1408xf32> -> vector<8x1408xf32>
    %c0_3 = arith.constant 0 : index
    %c0_4 = arith.constant 0 : index
    %4 = vector.load %arg3[%c0_3, %c0_4] : memref<1x1408xf32, #tpu.memory_space<vmem>>, vector<1x1408xf32>
    %5 = vector.broadcast %4 : vector<1x1408xf32> to vector<8x1408xf32>
    %6 = arith.addf %3, %5 : vector<8x1408xf32>
    %cst_5 = arith.constant 0.000000e+00 : f32
    %7 = vector.broadcast %cst_5 : f32 to vector<8x1408xf32>
    %8 = arith.subf %7, %6 : vector<8x1408xf32>
    %9 = math.exp %8 : vector<8x1408xf32>
    %cst_6 = arith.constant 1.000000e+00 : f32
    %10 = vector.broadcast %cst_6 : f32 to vector<8x1408xf32>
    %11 = arith.addf %10, %9 : vector<8x1408xf32>
    %12 = tpu.reciprocal %11 {approx = true} : vector<8x1408xf32> -> vector<8x1408xf32>
    %13 = arith.truncf %12 : vector<8x1408xf32> to vector<8x1408xbf16>
    %c0_7 = arith.constant 0 : index
    %c0_8 = arith.constant 0 : index
    %14 = vector.load %arg4[%c0_7, %c0_8] : memref<1408x128xbf16, #tpu.memory_space<vmem>>, vector<1408x128xbf16>
    %cst_9 = arith.constant dense<0.000000e+00> : vector<8x128xf32>
    %15 = tpu.matmul %13, %14, %cst_9 {dimension_numbers = #tpu.dot_dimension_numbers<[1], [0], [0], [1], [0, 0, 1, 1], [], []>} : vector<8x1408xbf16>, vector<1408x128xbf16>, vector<8x128xf32> -> vector<8x128xf32>
    %c0_10 = arith.constant 0 : index
    %c0_11 = arith.constant 0 : index
    %16 = vector.load %arg5[%c0_10, %c0_11] : memref<1x128xf32, #tpu.memory_space<vmem>>, vector<1x128xf32>
    %17 = vector.broadcast %16 : vector<1x128xf32> to vector<8x128xf32>
    %18 = arith.addf %15, %17 : vector<8x128xf32>
    %cst_12 = arith.constant dense<0xFF800000> : vector<8xf32>
    %19 = vector.multi_reduction <maximumf>, %18, %cst_12 [1] : vector<8x128xf32> to vector<8xf32>
    %20 = vector.shape_cast %19 : vector<8xf32> to vector<8x1xf32>
    %21 = vector.broadcast %20 : vector<8x1xf32> to vector<8x128xf32>
    %22 = arith.subf %18, %21 : vector<8x128xf32>
    %23 = math.exp %22 : vector<8x128xf32>
    %cst_13 = arith.constant dense<0.000000e+00> : vector<8xf32>
    %24 = vector.multi_reduction <add>, %23, %cst_13 [1] : vector<8x128xf32> to vector<8xf32>
    %25 = vector.shape_cast %24 : vector<8xf32> to vector<8x1xf32>
    %26 = tpu.reciprocal %25 : vector<8x1xf32> -> vector<8x1xf32>
    %27 = vector.broadcast %26 : vector<8x1xf32> to vector<8x128xf32>
    %28 = arith.mulf %23, %27 : vector<8x128xf32>
    %c0_14 = arith.constant 0 : index
    %c0_15 = arith.constant 0 : index
    %29 = vector.load %arg6[%c0_14, %c0_15] : memref<8x128xf32, #tpu.memory_space<vmem>>, vector<8x128xf32>
    tpu.vector_store %arg6[%c0_14, %c0_15], %28 {strides = array<i32>} : memref<8x128xf32, #tpu.memory_space<vmem>>, vector<8x128xf32>,
    return
  }
  func.func @transform_0(%arg0: i32) -> (i32, i32) {
    %c0_i32 = arith.constant 0 : i32
    %c0_i32_0 = arith.constant 0 : i32
    return %arg0, %c0_i32 : i32, i32
  }
  func.func @transform_1(%arg0: i32) -> (i32, i32) {
    %c0_i32 = arith.constant 0 : i32
    %c0_i32_0 = arith.constant 0 : i32
    %c0_i32_1 = arith.constant 0 : i32
    return %c0_i32, %c0_i32_0 : i32, i32
  }
  func.func @transform_2(%arg0: i32) -> (i32, i32) {
    %c0_i32 = arith.constant 0 : i32
    %c0_i32_0 = arith.constant 0 : i32
    %c0_i32_1 = arith.constant 0 : i32
    return %c0_i32, %c0_i32_0 : i32, i32
  }
  func.func @transform_3(%arg0: i32) -> (i32, i32) {
    %c0_i32 = arith.constant 0 : i32
    %c0_i32_0 = arith.constant 0 : i32
    %c0_i32_1 = arith.constant 0 : i32
    return %c0_i32, %c0_i32_0 : i32, i32
  }
  func.func @transform_4(%arg0: i32) -> (i32, i32) {
    %c0_i32 = arith.constant 0 : i32
    %c0_i32_0 = arith.constant 0 : i32
    %c0_i32_1 = arith.constant 0 : i32
    return %c0_i32, %c0_i32_0 : i32, i32
  }
  func.func @transform_5(%arg0: i32) -> (i32, i32) {
    %c0_i32 = arith.constant 0 : i32
    %c0_i32_0 = arith.constant 0 : i32
    return %arg0, %c0_i32 : i32, i32
  }
}

</mosaic_0001>

<llo_original>
// kernel: net_forward.1
$region0: #{net_forward.1}
  #allocation0 [shape = 'u32[]', space=smem, size = 0x4, offset = 0x4, fixed_abs, tag = 'smem constant byte address 0x4 - core index']
  #allocation1 [shape = 'u32[144,128]{1,0:T(1,128)}', space=vmem, size = 0x12000, scoped, tag = 'internal scratch']
  %s0 = inlined_call_operand.hbm [shape: f32[8,784], index: 0, kind: input, shape index: {}]
  %s1 = inlined_call_operand.hbm [shape: bf16[784,1408], index: 1, kind: input, shape index: {}]
  %s2 = inlined_call_operand.hbm [shape: f32[1,1408], index: 2, kind: input, shape index: {}]
  %s3 = inlined_call_operand.hbm [shape: bf16[1408,128], index: 3, kind: input, shape index: {}]
  %s4 = inlined_call_operand.hbm [shape: f32[1,128], index: 4, kind: input, shape index: {}]
  %s5 = inlined_call_operand.hbm [shape: f32[8,128], index: 5, kind: output, shape index: {}]
  %s6 = sld [smem:[#allocation0]]
  $region50: #{net_forward.1} parent=0
    _
  %s8 = ssub.s32 1, %s6
  %s9 = scalar_select 0, %s8, %s6
  $region1: #{net_forward.1} parent=0
    #allocation2 [shape = 'u8[28672]{0}', space=vmem, size = 0x7000, scoped, tag = 'input window, operand 0, single buffered']
    #allocation3 [shape = 's32[1]{0}', space=sflag, size = 0x4, scoped, tag = 'scoped memory for net_forward.1']
    #allocation4 [shape = 's32[1]{0}', space=sflag, size = 0x4, scoped, tag = 'scoped memory for net_forward.1']
    #allocation5 [shape = 'u8[2207744]{0}', space=vmem, size = 0x21b000, scoped, tag = 'input window, operand 1, single buffered']
    #allocation6 [shape = 's32[1]{0}', space=sflag, size = 0x4, scoped, tag = 'scoped memory for net_forward.1']
    #allocation7 [shape = 'u8[5632]{0}', space=vmem, size = 0x1800, scoped, tag = 'input window, operand 2, single buffered']
    #allocation8 [shape = 'u8[360448]{0}', space=vmem, size = 0x58000, scoped, tag = 'input window, operand 3, single buffered']
    #allocation9 [shape = 's32[1]{0}', space=sflag, size = 0x4, scoped, tag = 'scoped memory for net_forward.1']
    #allocation10 [shape = 'u8[512]{0}', space=vmem, size = 0x400, scoped, tag = 'input window, operand 4, single buffered']
    #allocation11 [shape = 'u8[4096]{0}', space=vmem, size = 0x1000, scoped, tag = 'output window, operand 0, single buffered']
    %10 = vsyncpa [#allocation3], 0
    %11 = vsyncpa [#allocation6], 0
    %12 = vsyncpa [#allocation9], 0
    %13 = vsyncpa [#allocation4], 0
    // Predicated region
    $region2: #{net_forward.1} parent=1 // pred_check
      _
    $region3: #{net_forward.1} parent=1 // pred_check_branch
      %15 = sbr.rel (0) target = $region5
    $region4: #{net_forward.1} parent=1 // pred_region
      %s17 = ssub.s32 896, 896
      %18 = vsyncadd [#allocation3], %s17
      %s20 = sshll.u32 [#allocation2], 4
      %s21 = int_to_ptr.vmem [resolvable:$true] %s20
      %23 = dma.hbm_to_vmem [thread:$0]  %s0, 896, %s21, [#allocation3]
    $region5: #{net_forward.1} parent=1 // pred_fallthru
      _
    // Predicated region
    $region6: #{net_forward.1} parent=1 // pred_check
      _
    $region7: #{net_forward.1} parent=1 // pred_check_branch
      %25 = sbr.rel (0) target = $region9
    $region8: #{net_forward.1} parent=1 // pred_region
      %s27 = ssub.s32 68992, 68992
      %28 = vsyncadd [#allocation6], %s27
      %s29 = sshll.u32 [#allocation5], 4
      %s30 = int_to_ptr.vmem [resolvable:$true] %s29
      %35 = dma.hbm_to_vmem [thread:$0]  %s1, 68992, %s30, [#allocation6], 704, 704, 44
    $region9: #{net_forward.1} parent=1 // pred_fallthru
      _
    // Predicated region
    $region10: #{net_forward.1} parent=1 // pred_check
      _
    $region11: #{net_forward.1} parent=1 // pred_check_branch
      %37 = sbr.rel (0) target = $region13
    $region12: #{net_forward.1} parent=1 // pred_region
      %s39 = ssub.s32 176, 176
      %40 = vsyncadd [#allocation6], %s39
      %s42 = sshll.u32 [#allocation7], 4
      %s43 = int_to_ptr.vmem [resolvable:$true] %s42
      %45 = dma.hbm_to_vmem [thread:$0]  %s2, 176, %s43, [#allocation6]
    $region13: #{net_forward.1} parent=1 // pred_fallthru
      _
    // Predicated region
    $region14: #{net_forward.1} parent=1 // pred_check
      _
    $region15: #{net_forward.1} parent=1 // pred_check_branch
      %47 = sbr.rel (0) target = $region17
    $region16: #{net_forward.1} parent=1 // pred_region
      %s49 = ssub.s32 11264, 11264
      %50 = vsyncadd [#allocation9], %s49
      %s51 = sshll.u32 [#allocation8], 4
      %s52 = int_to_ptr.vmem [resolvable:$true] %s51
      %57 = dma.hbm_to_vmem [thread:$0]  %s3, 11264, %s52, [#allocation9], 64, 64, 4
    $region17: #{net_forward.1} parent=1 // pred_fallthru
      _
    // Predicated region
    $region18: #{net_forward.1} parent=1 // pred_check
      _
    $region19: #{net_forward.1} parent=1 // pred_check_branch
      %59 = sbr.rel (0) target = $region21
    $region20: #{net_forward.1} parent=1 // pred_region
      %s61 = ssub.s32 16, 16
      %62 = vsyncadd [#allocation9], %s61
      %s64 = sshll.u32 [#allocation10], 4
      %s65 = int_to_ptr.vmem [resolvable:$true] %s64
      %67 = dma.hbm_to_vmem [thread:$0]  %s4, 16, %s65, [#allocation9]
    $region21: #{net_forward.1} parent=1 // pred_fallthru
      _
    // Predicated region
    $region22: #{net_forward.1} parent=1 // pred_check
      _
    $region23: #{net_forward.1} parent=1 // pred_check_branch
      %69 = sbr.rel (0) target = $region25
    $region24: #{net_forward.1} parent=1 // pred_region
      %70 = dma.done [#allocation3], 896
    $region25: #{net_forward.1} parent=1 // pred_fallthru
      _
    // Predicated region
    $region26: #{net_forward.1} parent=1 // pred_check
      _
    $region27: #{net_forward.1} parent=1 // pred_check_branch
      %72 = sbr.rel (0) target = $region29
    $region28: #{net_forward.1} parent=1 // pred_region
      %73 = dma.done [#allocation6], 68992
    $region29: #{net_forward.1} parent=1 // pred_fallthru
      _
    // Predicated region
    $region30: #{net_forward.1} parent=1 // pred_check
      _
    $region31: #{net_forward.1} parent=1 // pred_check_branch
      %75 = sbr.rel (0) target = $region33
    $region32: #{net_forward.1} parent=1 // pred_region
      %76 = dma.done [#allocation6], 176
    $region33: #{net_forward.1} parent=1 // pred_fallthru
      _
    // Predicated region
    $region34: #{net_forward.1} parent=1 // pred_check
      _
    $region35: #{net_forward.1} parent=1 // pred_check_branch
      %78 = sbr.rel (0) target = $region37
    $region36: #{net_forward.1} parent=1 // pred_region
      %79 = dma.done [#allocation9], 11264
    $region37: #{net_forward.1} parent=1 // pred_fallthru
      _
    // Predicated region
    $region38: #{net_forward.1} parent=1 // pred_check
      _
    $region39: #{net_forward.1} parent=1 // pred_check_branch
      %81 = sbr.rel (0) target = $region41
    $region40: #{net_forward.1} parent=1 // pred_region
      %82 = dma.done [#allocation9], 16
    $region41: #{net_forward.1} parent=1 // pred_fallthru
      _
    %v84 = vld [vmem:[#allocation2] sm:$0xff]
    %v85 = vld [vmem:[#allocation2 + $0x8] sm:$0xff]
    %v86 = vld [vmem:[#allocation2 + $0x10] sm:$0xff]
    %v87 = vld [vmem:[#allocation2 + $0x18] sm:$0xff]
    %v88 = vld [vmem:[#allocation2 + $0x20] sm:$0xff]
    %v89 = vld [vmem:[#allocation2 + $0x28] sm:$0xff]
    %v90 = vld [vmem:[#allocation2 + $0x30] sm:$0xff]
    %v91 = vpack.c.bf16 %v84, %v84
    %v92 = vpack.c.bf16 %v85, %v85
    %v93 = vpack.c.bf16 %v86, %v86
    %v94 = vpack.c.bf16 %v87, %v87
    %v95 = vpack.c.bf16 %v88, %v88
    %v96 = vpack.c.bf16 %v89, %v89
    %v97 = vpack.c.bf16 %v90, %v90
    %v98 = vld [vmem:[#allocation5] sm:$0xff]
    %v99 = vld [vmem:[#allocation5 + $0x8] sm:$0xff]
    %v100 = vld [vmem:[#allocation5 + $0x10] sm:$0xff]
    %v101 = vld [vmem:[#allocation5 + $0x18] sm:$0xff]
    %v102 = vld [vmem:[#allocation5 + $0x20] sm:$0xff]
    %v103 = vld [vmem:[#allocation5 + $0x28] sm:$0xf]
    %v104 = vld [vmem:[#allocation5 + $0x2c] sm:$0xff]
    %v105 = vld [vmem:[#allocation5 + $0x34] sm:$0xff]
    %v106 = vld [vmem:[#allocation5 + $0x3c] sm:$0xff]
    %v107 = vld [vmem:[#allocation5 + $0x44] sm:$0xff]
    %v108 = vld [vmem:[#allocation5 + $0x4c] sm:$0xff]
    %v109 = vld [vmem:[#allocation5 + $0x54] sm:$0xf]
    %v110 = vld [vmem:[#allocation5 + $0x58] sm:$0xff]
    %v111 = vld [vmem:[#allocation5 + $0x60] sm:$0xff]
    %v112 = vld [vmem:[#allocation5 + $0x68] sm:$0xff]
    %v113 = vld [vmem:[#allocation5 + $0x70] sm:$0xff]
    %v114 = vld [vmem:[#allocation5 + $0x78] sm:$0xff]
    %v115 = vld [vmem:[#allocation5 + $0x80] sm:$0xf]
    %v116 = vld [vmem:[#allocation5 + $0x84] sm:$0xff]
    %v117 = vld [vmem:[#allocation5 + $0x8c] sm:$0xff]
    %v118 = vld [vmem:[#allocation5 + $0x94] sm:$0xff]
    %v119 = vld [vmem:[#allocation5 + $0x9c] sm:$0xff]
    %v120 = vld [vmem:[#allocation5 + $0xa4] sm:$0xff]
    %v121 = vld [vmem:[#allocation5 + $0xac] sm:$0xf]
    %v122 = vld [vmem:[#allocation5 + $0xb0] sm:$0xff]
    %v123 = vld [vmem:[#allocation5 + $0xb8] sm:$0xff]
    %v124 = vld [vmem:[#allocation5 + $0xc0] sm:$0xff]
    %v125 = vld [vmem:[#allocation5 + $0xc8] sm:$0xff]
    %v126 = vld [vmem:[#allocation5 + $0xd0] sm:$0xff]
    %v127 = vld [vmem:[#allocation5 + $0xd8] sm:$0xf]
    %v128 = vld [vmem:[#allocation5 + $0xdc] sm:$0xff]
    %v129 = vld [vmem:[#allocation5 + $0xe4] sm:$0xff]
    %v130 = vld [vmem:[#allocation5 + $0xec] sm:$0xff]
    %v131 = vld [vmem:[#allocation5 + $0xf4] sm:$0xff]
    %v132 = vld [vmem:[#allocation5 + $0xfc] sm:$0xff]
    %v133 = vld [vmem:[#allocation5 + $0x104] sm:$0xf]
    %v134 = vld [vmem:[#allocation5 + $0x108] sm:$0xff]
    %v135 = vld [vmem:[#allocation5 + $0x110] sm:$0xff]
    %v136 = vld [vmem:[#allocation5 + $0x118] sm:$0xff]
    %v137 = vld [vmem:[#allocation5 + $0x120] sm:$0xff]
    %v138 = vld [vmem:[#allocation5 + $0x128] sm:$0xff]
    %v139 = vld [vmem:[#allocation5 + $0x130] sm:$0xf]
    %v140 = vld [vmem:[#allocation5 + $0x134] sm:$0xff]
    %v141 = vld [vmem:[#allocation5 + $0x13c] sm:$0xff]
    %v142 = vld [vmem:[#allocation5 + $0x144] sm:$0xff]
    %v143 = vld [vmem:[#allocation5 + $0x14c] sm:$0xff]
    %v144 = vld [vmem:[#allocation5 + $0x154] sm:$0xff]
    %v145 = vld [vmem:[#allocation5 + $0x15c] sm:$0xf]
    %v146 = vld [vmem:[#allocation5 + $0x160] sm:$0xff]
    %v147 = vld [vmem:[#allocation5 + $0x168] sm:$0xff]
    %v148 = vld [vmem:[#allocation5 + $0x170] sm:$0xff]
    %v149 = vld [vmem:[#allocation5 + $0x178] sm:$0xff]
    %v150 = vld [vmem:[#allocation5 + $0x180] sm:$0xff]
    %v151 = vld [vmem:[#allocation5 + $0x188] sm:$0xf]
    %v152 = vld [vmem:[#allocation5 + $0x18c] sm:$0xff]
    %v153 = vld [vmem:[#allocation5 + $0x194] sm:$0xff]
    %v154 = vld [vmem:[#allocation5 + $0x19c] sm:$0xff]
    %v155 = vld [vmem:[#allocation5 + $0x1a4] sm:$0xff]
    %v156 = vld [vmem:[#allocation5 + $0x1ac] sm:$0xff]
    %v157 = vld [vmem:[#allocation5 + $0x1b4] sm:$0xf]
    %v158 = vld [vmem:[#allocation5 + $0x1b8] sm:$0xff]
    %v159 = vld [vmem:[#allocation5 + $0x1c0] sm:$0xff]
    %v160 = vld [vmem:[#allocation5 + $0x1c8] sm:$0xff]
    %v161 = vld [vmem:[#allocation5 + $0x1d0] sm:$0xff]
    %v162 = vld [vmem:[#allocation5 + $0x1d8] sm:$0xff]
    %v163 = vld [vmem:[#allocation5 + $0x1e0] sm:$0xf]
    %v164 = vld [vmem:[#allocation5 + $0x1e4] sm:$0xff]
    %v165 = vld [vmem:[#allocation5 + $0x1ec] sm:$0xff]
    %v166 = vld [vmem:[#allocation5 + $0x1f4] sm:$0xff]
    %v167 = vld [vmem:[#allocation5 + $0x1fc] sm:$0xff]
    %v168 = vld [vmem:[#allocation5 + $0x204] sm:$0xff]
    %v169 = vld [vmem:[#allocation5 + $0x20c] sm:$0xf]
    %v170 = vld [vmem:[#allocation5 + $0x210] sm:$0xff]
    %v171 = vld [vmem:[#allocation5 + $0x218] sm:$0xff]
    %v172 = vld [vmem:[#allocation5 + $0x220] sm:$0xff]
    %v173 = vld [vmem:[#allocation5 + $0x228] sm:$0xff]
    %v174 = vld [vmem:[#allocation5 + $0x230] sm:$0xff]
    %v175 = vld [vmem:[#allocation5 + $0x238] sm:$0xf]
    %v176 = vld [vmem:[#allocation5 + $0x23c] sm:$0xff]
    %v177 = vld [vmem:[#allocation5 + $0x244] sm:$0xff]
    %v178 = vld [vmem:[#allocation5 + $0x24c] sm:$0xff]
    %v179 = vld [vmem:[#allocation5 + $0x254] sm:$0xff]
    %v180 = vld [vmem:[#allocation5 + $0x25c] sm:$0xff]
    %v181 = vld [vmem:[#allocation5 + $0x264] sm:$0xf]
    %v182 = vld [vmem:[#allocation5 + $0x268] sm:$0xff]
    %v183 = vld [vmem:[#allocation5 + $0x270] sm:$0xff]
    %v184 = vld [vmem:[#allocation5 + $0x278] sm:$0xff]
    %v185 = vld [vmem:[#allocation5 + $0x280] sm:$0xff]
    %v186 = vld [vmem:[#allocation5 + $0x288] sm:$0xff]
    %v187 = vld [vmem:[#allocation5 + $0x290] sm:$0xf]
    %v188 = vld [vmem:[#allocation5 + $0x294] sm:$0xff]
    %v189 = vld [vmem:[#allocation5 + $0x29c] sm:$0xff]
    %v190 = vld [vmem:[#allocation5 + $0x2a4] sm:$0xff]
    %v191 = vld [vmem:[#allocation5 + $0x2ac] sm:$0xff]
    %v192 = vld [vmem:[#allocation5 + $0x2b4] sm:$0xff]
    %v193 = vld [vmem:[#allocation5 + $0x2bc] sm:$0xf]
    %v194 = vld [vmem:[#allocation5 + $0x2c0] sm:$0xff]
    %v195 = vld [vmem:[#allocation5 + $0x2c8] sm:$0xff]
    %v196 = vld [vmem:[#allocation5 + $0x2d0] sm:$0xff]
    %v197 = vld [vmem:[#allocation5 + $0x2d8] sm:$0xff]
    %v198 = vld [vmem:[#allocation5 + $0x2e0] sm:$0xff]
    %v199 = vld [vmem:[#allocation5 + $0x2e8] sm:$0xf]
    %v200 = vld [vmem:[#allocation5 + $0x2ec] sm:$0xff]
    %v201 = vld [vmem:[#allocation5 + $0x2f4] sm:$0xff]
    %v202 = vld [vmem:[#allocation5 + $0x2fc] sm:$0xff]
    %v203 = vld [vmem:[#allocation5 + $0x304] sm:$0xff]
    %v204 = vld [vmem:[#allocation5 + $0x30c] sm:$0xff]
    %v205 = vld [vmem:[#allocation5 + $0x314] sm:$0xf]
    %v206 = vld [vmem:[#allocation5 + $0x318] sm:$0xff]
    %v207 = vld [vmem:[#allocation5 + $0x320] sm:$0xff]
    %v208 = vld [vmem:[#allocation5 + $0x328] sm:$0xff]
    %v209 = vld [vmem:[#allocation5 + $0x330] sm:$0xff]
    %v210 = vld [vmem:[#allocation5 + $0x338] sm:$0xff]
    %v211 = vld [vmem:[#allocation5 + $0x340] sm:$0xf]
    %v212 = vld [vmem:[#allocation5 + $0x344] sm:$0xff]
    %v213 = vld [vmem:[#allocation5 + $0x34c] sm:$0xff]
    %v214 = vld [vmem:[#allocation5 + $0x354] sm:$0xff]
    %v215 = vld [vmem:[#allocation5 + $0x35c] sm:$0xff]
    %v216 = vld [vmem:[#allocation5 + $0x364] sm:$0xff]
    %v217 = vld [vmem:[#allocation5 + $0x36c] sm:$0xf]
    %v218 = vld [vmem:[#allocation5 + $0x370] sm:$0xff]
    %v219 = vld [vmem:[#allocation5 + $0x378] sm:$0xff]
    %v220 = vld [vmem:[#allocation5 + $0x380] sm:$0xff]
    %v221 = vld [vmem:[#allocation5 + $0x388] sm:$0xff]
    %v222 = vld [vmem:[#allocation5 + $0x390] sm:$0xff]
    %v223 = vld [vmem:[#allocation5 + $0x398] sm:$0xf]
    %v224 = vld [vmem:[#allocation5 + $0x39c] sm:$0xff]
    %v225 = vld [vmem:[#allocation5 + $0x3a4] sm:$0xff]
    %v226 = vld [vmem:[#allocation5 + $0x3ac] sm:$0xff]
    %v227 = vld [vmem:[#allocation5 + $0x3b4] sm:$0xff]
    %v228 = vld [vmem:[#allocation5 + $0x3bc] sm:$0xff]
    %v229 = vld [vmem:[#allocation5 + $0x3c4] sm:$0xf]
    %v230 = vld [vmem:[#allocation5 + $0x3c8] sm:$0xff]
    %v231 = vld [vmem:[#allocation5 + $0x3d0] sm:$0xff]
    %v232 = vld [vmem:[#allocation5 + $0x3d8] sm:$0xff]
    %v233 = vld [vmem:[#allocation5 + $0x3e0] sm:$0xff]
    %v234 = vld [vmem:[#allocation5 + $0x3e8] sm:$0xff]
    %v235 = vld [vmem:[#allocation5 + $0x3f0] sm:$0xf]
    %v236 = vld [vmem:[#allocation5 + $0x3f4] sm:$0xff]
    %v237 = vld [vmem:[#allocation5 + $0x3fc] sm:$0xff]
    %v238 = vld [vmem:[#allocation5 + $0x404] sm:$0xff]
    %v239 = vld [vmem:[#allocation5 + $0x40c] sm:$0xff]
    %v240 = vld [vmem:[#allocation5 + $0x414] sm:$0xff]
    %v241 = vld [vmem:[#allocation5 + $0x41c] sm:$0xf]
    %v242 = vld [vmem:[#allocation5 + $0x420] sm:$0xff]
    %v243 = vld [vmem:[#allocation5 + $0x428] sm:$0xff]
    %v244 = vld [vmem:[#allocation5 + $0x430] sm:$0xff]
    %v245 = vld [vmem:[#allocation5 + $0x438] sm:$0xff]
    %v246 = vld [vmem:[#allocation5 + $0x440] sm:$0xff]
    %v247 = vld [vmem:[#allocation5 + $0x448] sm:$0xf]
    %v248 = vld [vmem:[#allocation5 + $0x44c] sm:$0xff]
    %v249 = vld [vmem:[#allocation5 + $0x454] sm:$0xff]
    %v250 = vld [vmem:[#allocation5 + $0x45c] sm:$0xff]
    %v251 = vld [vmem:[#allocation5 + $0x464] sm:$0xff]
    %v252 = vld [vmem:[#allocation5 + $0x46c] sm:$0xff]
    %v253 = vld [vmem:[#allocation5 + $0x474] sm:$0xf]
    %v254 = vld [vmem:[#allocation5 + $0x478] sm:$0xff]
    %v255 = vld [vmem:[#allocation5 + $0x480] sm:$0xff]
    %v256 = vld [vmem:[#allocation5 + $0x488] sm:$0xff]
    %v257 = vld [vmem:[#allocation5 + $0x490] sm:$0xff]
    %v258 = vld [vmem:[#allocation5 + $0x498] sm:$0xff]
    %v259 = vld [vmem:[#allocation5 + $0x4a0] sm:$0xf]
    %v260 = vld [vmem:[#allocation5 + $0x4a4] sm:$0xff]
    %v261 = vld [vmem:[#allocation5 + $0x4ac] sm:$0xff]
    %v262 = vld [vmem:[#allocation5 + $0x4b4] sm:$0xff]
    %v263 = vld [vmem:[#allocation5 + $0x4bc] sm:$0xff]
    %v264 = vld [vmem:[#allocation5 + $0x4c4] sm:$0xff]
    %v265 = vld [vmem:[#allocation5 + $0x4cc] sm:$0xf]
    %v266 = vld [vmem:[#allocation5 + $0x4d0] sm:$0xff]
    %v267 = vld [vmem:[#allocation5 + $0x4d8] sm:$0xff]
    %v268 = vld [vmem:[#allocation5 + $0x4e0] sm:$0xff]
    %v269 = vld [vmem:[#allocation5 + $0x4e8] sm:$0xff]
    %v270 = vld [vmem:[#allocation5 + $0x4f0] sm:$0xff]
    %v271 = vld [vmem:[#allocation5 + $0x4f8] sm:$0xf]
    %v272 = vld [vmem:[#allocation5 + $0x4fc] sm:$0xff]
    %v273 = vld [vmem:[#allocation5 + $0x504] sm:$0xff]
    %v274 = vld [vmem:[#allocation5 + $0x50c] sm:$0xff]
    %v275 = vld [vmem:[#allocation5 + $0x514] sm:$0xff]
    %v276 = vld [vmem:[#allocation5 + $0x51c] sm:$0xff]
    %v277 = vld [vmem:[#allocation5 + $0x524] sm:$0xf]
    %v278 = vld [vmem:[#allocation5 + $0x528] sm:$0xff]
    %v279 = vld [vmem:[#allocation5 + $0x530] sm:$0xff]
    %v280 = vld [vmem:[#allocation5 + $0x538] sm:$0xff]
    %v281 = vld [vmem:[#allocation5 + $0x540] sm:$0xff]
    %v282 = vld [vmem:[#allocation5 + $0x548] sm:$0xff]
    %v283 = vld [vmem:[#allocation5 + $0x550] sm:$0xf]
    %v284 = vld [vmem:[#allocation5 + $0x554] sm:$0xff]
    %v285 = vld [vmem:[#allocation5 + $0x55c] sm:$0xff]
    %v286 = vld [vmem:[#allocation5 + $0x564] sm:$0xff]
    %v287 = vld [vmem:[#allocation5 + $0x56c] sm:$0xff]
    %v288 = vld [vmem:[#allocation5 + $0x574] sm:$0xff]
    %v289 = vld [vmem:[#allocation5 + $0x57c] sm:$0xf]
    %v290 = vld [vmem:[#allocation5 + $0x580] sm:$0xff]
    %v291 = vld [vmem:[#allocation5 + $0x588] sm:$0xff]
    %v292 = vld [vmem:[#allocation5 + $0x590] sm:$0xff]
    %v293 = vld [vmem:[#allocation5 + $0x598] sm:$0xff]
    %v294 = vld [vmem:[#allocation5 + $0x5a0] sm:$0xff]
    %v295 = vld [vmem:[#allocation5 + $0x5a8] sm:$0xf]
    %v296 = vld [vmem:[#allocation5 + $0x5ac] sm:$0xff]
    %v297 = vld [vmem:[#allocation5 + $0x5b4] sm:$0xff]
    %v298 = vld [vmem:[#allocation5 + $0x5bc] sm:$0xff]
    %v299 = vld [vmem:[#allocation5 + $0x5c4] sm:$0xff]
    %v300 = vld [vmem:[#allocation5 + $0x5cc] sm:$0xff]
    %v301 = vld [vmem:[#allocation5 + $0x5d4] sm:$0xf]
    %v302 = vld [vmem:[#allocation5 + $0x5d8] sm:$0xff]
    %v303 = vld [vmem:[#allocation5 + $0x5e0] sm:$0xff]
    %v304 = vld [vmem:[#allocation5 + $0x5e8] sm:$0xff]
    %v305 = vld [vmem:[#allocation5 + $0x5f0] sm:$0xff]
    %v306 = vld [vmem:[#allocation5 + $0x5f8] sm:$0xff]
    %v307 = vld [vmem:[#allocation5 + $0x600] sm:$0xf]
    %v308 = vld [vmem:[#allocation5 + $0x604] sm:$0xff]
    %v309 = vld [vmem:[#allocation5 + $0x60c] sm:$0xff]
    %v310 = vld [vmem:[#allocation5 + $0x614] sm:$0xff]
    %v311 = vld [vmem:[#allocation5 + $0x61c] sm:$0xff]
    %v312 = vld [vmem:[#allocation5 + $0x624] sm:$0xff]
    %v313 = vld [vmem:[#allocation5 + $0x62c] sm:$0xf]
    %v314 = vld [vmem:[#allocation5 + $0x630] sm:$0xff]
    %v315 = vld [vmem:[#allocation5 + $0x638] sm:$0xff]
    %v316 = vld [vmem:[#allocation5 + $0x640] sm:$0xff]
    %v317 = vld [vmem:[#allocation5 + $0x648] sm:$0xff]
    %v318 = vld [vmem:[#allocation5 + $0x650] sm:$0xff]
    %v319 = vld [vmem:[#allocation5 + $0x658] sm:$0xf]
    %v320 = vld [vmem:[#allocation5 + $0x65c] sm:$0xff]
    %v321 = vld [vmem:[#allocation5 + $0x664] sm:$0xff]
    %v322 = vld [vmem:[#allocation5 + $0x66c] sm:$0xff]
    %v323 = vld [vmem:[#allocation5 + $0x674] sm:$0xff]
    %v324 = vld [vmem:[#allocation5 + $0x67c] sm:$0xff]
    %v325 = vld [vmem:[#allocation5 + $0x684] sm:$0xf]
    %v326 = vld [vmem:[#allocation5 + $0x688] sm:$0xff]
    %v327 = vld [vmem:[#allocation5 + $0x690] sm:$0xff]
    %v328 = vld [vmem:[#allocation5 + $0x698] sm:$0xff]
    %v329 = vld [vmem:[#allocation5 + $0x6a0] sm:$0xff]
    %v330 = vld [vmem:[#allocation5 + $0x6a8] sm:$0xff]
    %v331 = vld [vmem:[#allocation5 + $0x6b0] sm:$0xf]
    %v332 = vld [vmem:[#allocation5 + $0x6b4] sm:$0xff]
    %v333 = vld [vmem:[#allocation5 + $0x6bc] sm:$0xff]
    %v334 = vld [vmem:[#allocation5 + $0x6c4] sm:$0xff]
    %v335 = vld [vmem:[#allocation5 + $0x6cc] sm:$0xff]
    %v336 = vld [vmem:[#allocation5 + $0x6d4] sm:$0xff]
    %v337 = vld [vmem:[#allocation5 + $0x6dc] sm:$0xf]
    %v338 = vld [vmem:[#allocation5 + $0x6e0] sm:$0xff]
    %v339 = vld [vmem:[#allocation5 + $0x6e8] sm:$0xff]
    %v340 = vld [vmem:[#allocation5 + $0x6f0] sm:$0xff]
    %v341 = vld [vmem:[#allocation5 + $0x6f8] sm:$0xff]
    %v342 = vld [vmem:[#allocation5 + $0x700] sm:$0xff]
    %v343 = vld [vmem:[#allocation5 + $0x708] sm:$0xf]
    %v344 = vld [vmem:[#allocation5 + $0x70c] sm:$0xff]
    %v345 = vld [vmem:[#allocation5 + $0x714] sm:$0xff]
    %v346 = vld [vmem:[#allocation5 + $0x71c] sm:$0xff]
    %v347 = vld [vmem:[#allocation5 + $0x724] sm:$0xff]
    %v348 = vld [vmem:[#allocation5 + $0x72c] sm:$0xff]
    %v349 = vld [vmem:[#allocation5 + $0x734] sm:$0xf]
    %v350 = vld [vmem:[#allocation5 + $0x738] sm:$0xff]
    %v351 = vld [vmem:[#allocation5 + $0x740] sm:$0xff]
    %v352 = vld [vmem:[#allocation5 + $0x748] sm:$0xff]
    %v353 = vld [vmem:[#allocation5 + $0x750] sm:$0xff]
    %v354 = vld [vmem:[#allocation5 + $0x758] sm:$0xff]
    %v355 = vld [vmem:[#allocation5 + $0x760] sm:$0xf]
    %v356 = vld [vmem:[#allocation5 + $0x764] sm:$0xff]
    %v357 = vld [vmem:[#allocation5 + $0x76c] sm:$0xff]
    %v358 = vld [vmem:[#allocation5 + $0x774] sm:$0xff]
    %v359 = vld [vmem:[#allocation5 + $0x77c] sm:$0xff]
    %v360 = vld [vmem:[#allocation5 + $0x784] sm:$0xff]
    %v361 = vld [vmem:[#allocation5 + $0x78c] sm:$0xf]
    %v362 = vld [vmem:[#allocation5 + $0x790] sm:$0xff]
    %v363 = vld [vmem:[#allocation5 + $0x798] sm:$0xff]
    %v364 = vld [vmem:[#allocation5 + $0x7a0] sm:$0xff]
    %v365 = vld [vmem:[#allocation5 + $0x7a8] sm:$0xff]
    %v366 = vld [vmem:[#allocation5 + $0x7b0] sm:$0xff]
    %v367 = vld [vmem:[#allocation5 + $0x7b8] sm:$0xf]
    %v368 = vld [vmem:[#allocation5 + $0x7bc] sm:$0xff]
    %v369 = vld [vmem:[#allocation5 + $0x7c4] sm:$0xff]
    %v370 = vld [vmem:[#allocation5 + $0x7cc] sm:$0xff]
    %v371 = vld [vmem:[#allocation5 + $0x7d4] sm:$0xff]
    %v372 = vld [vmem:[#allocation5 + $0x7dc] sm:$0xff]
    %v373 = vld [vmem:[#allocation5 + $0x7e4] sm:$0xf]
    %v374 = vld [vmem:[#allocation5 + $0x7e8] sm:$0xff]
    %v375 = vld [vmem:[#allocation5 + $0x7f0] sm:$0xff]
    %v376 = vld [vmem:[#allocation5 + $0x7f8] sm:$0xff]
    %v377 = vld [vmem:[#allocation5 + $0x800] sm:$0xff]
    %v378 = vld [vmem:[#allocation5 + $0x808] sm:$0xff]
    %v379 = vld [vmem:[#allocation5 + $0x810] sm:$0xf]
    %v380 = vld [vmem:[#allocation5 + $0x814] sm:$0xff]
    %v381 = vld [vmem:[#allocation5 + $0x81c] sm:$0xff]
    %v382 = vld [vmem:[#allocation5 + $0x824] sm:$0xff]
    %v383 = vld [vmem:[#allocation5 + $0x82c] sm:$0xff]
    %v384 = vld [vmem:[#allocation5 + $0x834] sm:$0xff]
    %v385 = vld [vmem:[#allocation5 + $0x83c] sm:$0xf]
    %v386 = vld [vmem:[#allocation5 + $0x840] sm:$0xff]
    %v387 = vld [vmem:[#allocation5 + $0x848] sm:$0xff]
    %v388 = vld [vmem:[#allocation5 + $0x850] sm:$0xff]
    %v389 = vld [vmem:[#allocation5 + $0x858] sm:$0xff]
    %v390 = vld [vmem:[#allocation5 + $0x860] sm:$0xff]
    %v391 = vld [vmem:[#allocation5 + $0x868] sm:$0xf]
    %v392 = vld [vmem:[#allocation5 + $0x86c] sm:$0xff]
    %v393 = vld [vmem:[#allocation5 + $0x874] sm:$0xff]
    %v394 = vld [vmem:[#allocation5 + $0x87c] sm:$0xff]
    %v395 = vld [vmem:[#allocation5 + $0x884] sm:$0xff]
    %v396 = vld [vmem:[#allocation5 + $0x88c] sm:$0xff]
    %v397 = vld [vmem:[#allocation5 + $0x894] sm:$0xf]
    %v398 = vld [vmem:[#allocation5 + $0x898] sm:$0xff]
    %v399 = vld [vmem:[#allocation5 + $0x8a0] sm:$0xff]
    %v400 = vld [vmem:[#allocation5 + $0x8a8] sm:$0xff]
    %v401 = vld [vmem:[#allocation5 + $0x8b0] sm:$0xff]
    %v402 = vld [vmem:[#allocation5 + $0x8b8] sm:$0xff]
    %v403 = vld [vmem:[#allocation5 + $0x8c0] sm:$0xf]
    %v404 = vld [vmem:[#allocation5 + $0x8c4] sm:$0xff]
    %v405 = vld [vmem:[#allocation5 + $0x8cc] sm:$0xff]
    %v406 = vld [vmem:[#allocation5 + $0x8d4] sm:$0xff]
    %v407 = vld [vmem:[#allocation5 + $0x8dc] sm:$0xff]
    %v408 = vld [vmem:[#allocation5 + $0x8e4] sm:$0xff]
    %v409 = vld [vmem:[#allocation5 + $0x8ec] sm:$0xf]
    %v410 = vld [vmem:[#allocation5 + $0x8f0] sm:$0xff]
    %v411 = vld [vmem:[#allocation5 + $0x8f8] sm:$0xff]
    %v412 = vld [vmem:[#allocation5 + $0x900] sm:$0xff]
    %v413 = vld [vmem:[#allocation5 + $0x908] sm:$0xff]
    %v414 = vld [vmem:[#allocation5 + $0x910] sm:$0xff]
    %v415 = vld [vmem:[#allocation5 + $0x918] sm:$0xf]
    %v416 = vld [vmem:[#allocation5 + $0x91c] sm:$0xff]
    %v417 = vld [vmem:[#allocation5 + $0x924] sm:$0xff]
    %v418 = vld [vmem:[#allocation5 + $0x92c] sm:$0xff]
    %v419 = vld [vmem:[#allocation5 + $0x934] sm:$0xff]
    %v420 = vld [vmem:[#allocation5 + $0x93c] sm:$0xff]
    %v421 = vld [vmem:[#allocation5 + $0x944] sm:$0xf]
    %v422 = vld [vmem:[#allocation5 + $0x948] sm:$0xff]
    %v423 = vld [vmem:[#allocation5 + $0x950] sm:$0xff]
    %v424 = vld [vmem:[#allocation5 + $0x958] sm:$0xff]
    %v425 = vld [vmem:[#allocation5 + $0x960] sm:$0xff]
    %v426 = vld [vmem:[#allocation5 + $0x968] sm:$0xff]
    %v427 = vld [vmem:[#allocation5 + $0x970] sm:$0xf]
    %v428 = vld [vmem:[#allocation5 + $0x974] sm:$0xff]
    %v429 = vld [vmem:[#allocation5 + $0x97c] sm:$0xff]
    %v430 = vld [vmem:[#allocation5 + $0x984] sm:$0xff]
    %v431 = vld [vmem:[#allocation5 + $0x98c] sm:$0xff]
    %v432 = vld [vmem:[#allocation5 + $0x994] sm:$0xff]
    %v433 = vld [vmem:[#allocation5 + $0x99c] sm:$0xf]
    %v434 = vld [vmem:[#allocation5 + $0x9a0] sm:$0xff]
    %v435 = vld [vmem:[#allocation5 + $0x9a8] sm:$0xff]
    %v436 = vld [vmem:[#allocation5 + $0x9b0] sm:$0xff]
    %v437 = vld [vmem:[#allocation5 + $0x9b8] sm:$0xff]
    %v438 = vld [vmem:[#allocation5 + $0x9c0] sm:$0xff]
    %v439 = vld [vmem:[#allocation5 + $0x9c8] sm:$0xf]
    %v440 = vld [vmem:[#allocation5 + $0x9cc] sm:$0xff]
    %v441 = vld [vmem:[#allocation5 + $0x9d4] sm:$0xff]
    %v442 = vld [vmem:[#allocation5 + $0x9dc] sm:$0xff]
    %v443 = vld [vmem:[#allocation5 + $0x9e4] sm:$0xff]
    %v444 = vld [vmem:[#allocation5 + $0x9ec] sm:$0xff]
    %v445 = vld [vmem:[#allocation5 + $0x9f4] sm:$0xf]
    %v446 = vld [vmem:[#allocation5 + $0x9f8] sm:$0xff]
    %v447 = vld [vmem:[#allocation5 + $0xa00] sm:$0xff]
    %v448 = vld [vmem:[#allocation5 + $0xa08] sm:$0xff]
    %v449 = vld [vmem:[#allocation5 + $0xa10] sm:$0xff]
    %v450 = vld [vmem:[#allocation5 + $0xa18] sm:$0xff]
    %v451 = vld [vmem:[#allocation5 + $0xa20] sm:$0xf]
    %v452 = vld [vmem:[#allocation5 + $0xa24] sm:$0xff]
    %v453 = vld [vmem:[#allocation5 + $0xa2c] sm:$0xff]
    %v454 = vld [vmem:[#allocation5 + $0xa34] sm:$0xff]
    %v455 = vld [vmem:[#allocation5 + $0xa3c] sm:$0xff]
    %v456 = vld [vmem:[#allocation5 + $0xa44] sm:$0xff]
    %v457 = vld [vmem:[#allocation5 + $0xa4c] sm:$0xf]
    %v458 = vld [vmem:[#allocation5 + $0xa50] sm:$0xff]
    %v459 = vld [vmem:[#allocation5 + $0xa58] sm:$0xff]
    %v460 = vld [vmem:[#allocation5 + $0xa60] sm:$0xff]
    %v461 = vld [vmem:[#allocation5 + $0xa68] sm:$0xff]
    %v462 = vld [vmem:[#allocation5 + $0xa70] sm:$0xff]
    %v463 = vld [vmem:[#allocation5 + $0xa78] sm:$0xf]
    %v464 = vld [vmem:[#allocation5 + $0xa7c] sm:$0xff]
    %v465 = vld [vmem:[#allocation5 + $0xa84] sm:$0xff]
    %v466 = vld [vmem:[#allocation5 + $0xa8c] sm:$0xff]
    %v467 = vld [vmem:[#allocation5 + $0xa94] sm:$0xff]
    %v468 = vld [vmem:[#allocation5 + $0xa9c] sm:$0xff]
    %v469 = vld [vmem:[#allocation5 + $0xaa4] sm:$0xf]
    %v470 = vld [vmem:[#allocation5 + $0xaa8] sm:$0xff]
    %v471 = vld [vmem:[#allocation5 + $0xab0] sm:$0xff]
    %v472 = vld [vmem:[#allocation5 + $0xab8] sm:$0xff]
    %v473 = vld [vmem:[#allocation5 + $0xac0] sm:$0xff]
    %v474 = vld [vmem:[#allocation5 + $0xac8] sm:$0xff]
    %v475 = vld [vmem:[#allocation5 + $0xad0] sm:$0xf]
    %v476 = vld [vmem:[#allocation5 + $0xad4] sm:$0xff]
    %v477 = vld [vmem:[#allocation5 + $0xadc] sm:$0xff]
    %v478 = vld [vmem:[#allocation5 + $0xae4] sm:$0xff]
    %v479 = vld [vmem:[#allocation5 + $0xaec] sm:$0xff]
    %v480 = vld [vmem:[#allocation5 + $0xaf4] sm:$0xff]
    %v481 = vld [vmem:[#allocation5 + $0xafc] sm:$0xf]
    %v482 = vld [vmem:[#allocation5 + $0xb00] sm:$0xff]
    %v483 = vld [vmem:[#allocation5 + $0xb08] sm:$0xff]
    %v484 = vld [vmem:[#allocation5 + $0xb10] sm:$0xff]
    %v485 = vld [vmem:[#allocation5 + $0xb18] sm:$0xff]
    %v486 = vld [vmem:[#allocation5 + $0xb20] sm:$0xff]
    %v487 = vld [vmem:[#allocation5 + $0xb28] sm:$0xf]
    %v488 = vld [vmem:[#allocation5 + $0xb2c] sm:$0xff]
    %v489 = vld [vmem:[#allocation5 + $0xb34] sm:$0xff]
    %v490 = vld [vmem:[#allocation5 + $0xb3c] sm:$0xff]
    %v491 = vld [vmem:[#allocation5 + $0xb44] sm:$0xff]
    %v492 = vld [vmem:[#allocation5 + $0xb4c] sm:$0xff]
    %v493 = vld [vmem:[#allocation5 + $0xb54] sm:$0xf]
    %v494 = vld [vmem:[#allocation5 + $0xb58] sm:$0xff]
    %v495 = vld [vmem:[#allocation5 + $0xb60] sm:$0xff]
    %v496 = vld [vmem:[#allocation5 + $0xb68] sm:$0xff]
    %v497 = vld [vmem:[#allocation5 + $0xb70] sm:$0xff]
    %v498 = vld [vmem:[#allocation5 + $0xb78] sm:$0xff]
    %v499 = vld [vmem:[#allocation5 + $0xb80] sm:$0xf]
    %v500 = vld [vmem:[#allocation5 + $0xb84] sm:$0xff]
    %v501 = vld [vmem:[#allocation5 + $0xb8c] sm:$0xff]
    %v502 = vld [vmem:[#allocation5 + $0xb94] sm:$0xff]
    %v503 = vld [vmem:[#allocation5 + $0xb9c] sm:$0xff]
    %v504 = vld [vmem:[#allocation5 + $0xba4] sm:$0xff]
    %v505 = vld [vmem:[#allocation5 + $0xbac] sm:$0xf]
    %v506 = vld [vmem:[#allocation5 + $0xbb0] sm:$0xff]
    %v507 = vld [vmem:[#allocation5 + $0xbb8] sm:$0xff]
    %v508 = vld [vmem:[#allocation5 + $0xbc0] sm:$0xff]
    %v509 = vld [vmem:[#allocation5 + $0xbc8] sm:$0xff]
    %v510 = vld [vmem:[#allocation5 + $0xbd0] sm:$0xff]
    %v511 = vld [vmem:[#allocation5 + $0xbd8] sm:$0xf]
    %v512 = vld [vmem:[#allocation5 + $0xbdc] sm:$0xff]
    %v513 = vld [vmem:[#allocation5 + $0xbe4] sm:$0xff]
    %v514 = vld [vmem:[#allocation5 + $0xbec] sm:$0xff]
    %v515 = vld [vmem:[#allocation5 + $0xbf4] sm:$0xff]
    %v516 = vld [vmem:[#allocation5 + $0xbfc] sm:$0xff]
    %v517 = vld [vmem:[#allocation5 + $0xc04] sm:$0xf]
    %v518 = vld [vmem:[#allocation5 + $0xc08] sm:$0xff]
    %v519 = vld [vmem:[#allocation5 + $0xc10] sm:$0xff]
    %v520 = vld [vmem:[#allocation5 + $0xc18] sm:$0xff]
    %v521 = vld [vmem:[#allocation5 + $0xc20] sm:$0xff]
    %v522 = vld [vmem:[#allocation5 + $0xc28] sm:$0xff]
    %v523 = vld [vmem:[#allocation5 + $0xc30] sm:$0xf]
    %v524 = vld [vmem:[#allocation5 + $0xc34] sm:$0xff]
    %v525 = vld [vmem:[#allocation5 + $0xc3c] sm:$0xff]
    %v526 = vld [vmem:[#allocation5 + $0xc44] sm:$0xff]
    %v527 = vld [vmem:[#allocation5 + $0xc4c] sm:$0xff]
    %v528 = vld [vmem:[#allocation5 + $0xc54] sm:$0xff]
    %v529 = vld [vmem:[#allocation5 + $0xc5c] sm:$0xf]
    %v530 = vld [vmem:[#allocation5 + $0xc60] sm:$0xff]
    %v531 = vld [vmem:[#allocation5 + $0xc68] sm:$0xff]
    %v532 = vld [vmem:[#allocation5 + $0xc70] sm:$0xff]
    %v533 = vld [vmem:[#allocation5 + $0xc78] sm:$0xff]
    %v534 = vld [vmem:[#allocation5 + $0xc80] sm:$0xff]
    %v535 = vld [vmem:[#allocation5 + $0xc88] sm:$0xf]
    %v536 = vld [vmem:[#allocation5 + $0xc8c] sm:$0xff]
    %v537 = vld [vmem:[#allocation5 + $0xc94] sm:$0xff]
    %v538 = vld [vmem:[#allocation5 + $0xc9c] sm:$0xff]
    %v539 = vld [vmem:[#allocation5 + $0xca4] sm:$0xff]
    %v540 = vld [vmem:[#allocation5 + $0xcac] sm:$0xff]
    %v541 = vld [vmem:[#allocation5 + $0xcb4] sm:$0xf]
    %v542 = vld [vmem:[#allocation5 + $0xcb8] sm:$0xff]
    %v543 = vld [vmem:[#allocation5 + $0xcc0] sm:$0xff]
    %v544 = vld [vmem:[#allocation5 + $0xcc8] sm:$0xff]
    %v545 = vld [vmem:[#allocation5 + $0xcd0] sm:$0xff]
    %v546 = vld [vmem:[#allocation5 + $0xcd8] sm:$0xff]
    %v547 = vld [vmem:[#allocation5 + $0xce0] sm:$0xf]
    %v548 = vld [vmem:[#allocation5 + $0xce4] sm:$0xff]
    %v549 = vld [vmem:[#allocation5 + $0xcec] sm:$0xff]
    %v550 = vld [vmem:[#allocation5 + $0xcf4] sm:$0xff]
    %v551 = vld [vmem:[#allocation5 + $0xcfc] sm:$0xff]
    %v552 = vld [vmem:[#allocation5 + $0xd04] sm:$0xff]
    %v553 = vld [vmem:[#allocation5 + $0xd0c] sm:$0xf]
    %v554 = vld [vmem:[#allocation5 + $0xd10] sm:$0xff]
    %v555 = vld [vmem:[#allocation5 + $0xd18] sm:$0xff]
    %v556 = vld [vmem:[#allocation5 + $0xd20] sm:$0xff]
    %v557 = vld [vmem:[#allocation5 + $0xd28] sm:$0xff]
    %v558 = vld [vmem:[#allocation5 + $0xd30] sm:$0xff]
    %v559 = vld [vmem:[#allocation5 + $0xd38] sm:$0xf]
    %v560 = vld [vmem:[#allocation5 + $0xd3c] sm:$0xff]
    %v561 = vld [vmem:[#allocation5 + $0xd44] sm:$0xff]
    %v562 = vld [vmem:[#allocation5 + $0xd4c] sm:$0xff]
    %v563 = vld [vmem:[#allocation5 + $0xd54] sm:$0xff]
    %v564 = vld [vmem:[#allocation5 + $0xd5c] sm:$0xff]
    %v565 = vld [vmem:[#allocation5 + $0xd64] sm:$0xf]
    %v566 = vld [vmem:[#allocation5 + $0xd68] sm:$0xff]
    %v567 = vld [vmem:[#allocation5 + $0xd70] sm:$0xff]
    %v568 = vld [vmem:[#allocation5 + $0xd78] sm:$0xff]
    %v569 = vld [vmem:[#allocation5 + $0xd80] sm:$0xff]
    %v570 = vld [vmem:[#allocation5 + $0xd88] sm:$0xff]
    %v571 = vld [vmem:[#allocation5 + $0xd90] sm:$0xf]
    %v572 = vld [vmem:[#allocation5 + $0xd94] sm:$0xff]
    %v573 = vld [vmem:[#allocation5 + $0xd9c] sm:$0xff]
    %v574 = vld [vmem:[#allocation5 + $0xda4] sm:$0xff]
    %v575 = vld [vmem:[#allocation5 + $0xdac] sm:$0xff]
    %v576 = vld [vmem:[#allocation5 + $0xdb4] sm:$0xff]
    %v577 = vld [vmem:[#allocation5 + $0xdbc] sm:$0xf]
    %v578 = vld [vmem:[#allocation5 + $0xdc0] sm:$0xff]
    %v579 = vld [vmem:[#allocation5 + $0xdc8] sm:$0xff]
    %v580 = vld [vmem:[#allocation5 + $0xdd0] sm:$0xff]
    %v581 = vld [vmem:[#allocation5 + $0xdd8] sm:$0xff]
    %v582 = vld [vmem:[#allocation5 + $0xde0] sm:$0xff]
    %v583 = vld [vmem:[#allocation5 + $0xde8] sm:$0xf]
    %v584 = vld [vmem:[#allocation5 + $0xdec] sm:$0xff]
    %v585 = vld [vmem:[#allocation5 + $0xdf4] sm:$0xff]
    %v586 = vld [vmem:[#allocation5 + $0xdfc] sm:$0xff]
    %v587 = vld [vmem:[#allocation5 + $0xe04] sm:$0xff]
    %v588 = vld [vmem:[#allocation5 + $0xe0c] sm:$0xff]
    %v589 = vld [vmem:[#allocation5 + $0xe14] sm:$0xf]
    %v590 = vld [vmem:[#allocation5 + $0xe18] sm:$0xff]
    %v591 = vld [vmem:[#allocation5 + $0xe20] sm:$0xff]
    %v592 = vld [vmem:[#allocation5 + $0xe28] sm:$0xff]
    %v593 = vld [vmem:[#allocation5 + $0xe30] sm:$0xff]
    %v594 = vld [vmem:[#allocation5 + $0xe38] sm:$0xff]
    %v595 = vld [vmem:[#allocation5 + $0xe40] sm:$0xf]
    %v596 = vld [vmem:[#allocation5 + $0xe44] sm:$0xff]
    %v597 = vld [vmem:[#allocation5 + $0xe4c] sm:$0xff]
    %v598 = vld [vmem:[#allocation5 + $0xe54] sm:$0xff]
    %v599 = vld [vmem:[#allocation5 + $0xe5c] sm:$0xff]
    %v600 = vld [vmem:[#allocation5 + $0xe64] sm:$0xff]
    %v601 = vld [vmem:[#allocation5 + $0xe6c] sm:$0xf]
    %v602 = vld [vmem:[#allocation5 + $0xe70] sm:$0xff]
    %v603 = vld [vmem:[#allocation5 + $0xe78] sm:$0xff]
    %v604 = vld [vmem:[#allocation5 + $0xe80] sm:$0xff]
    %v605 = vld [vmem:[#allocation5 + $0xe88] sm:$0xff]
    %v606 = vld [vmem:[#allocation5 + $0xe90] sm:$0xff]
    %v607 = vld [vmem:[#allocation5 + $0xe98] sm:$0xf]
    %v608 = vld [vmem:[#allocation5 + $0xe9c] sm:$0xff]
    %v609 = vld [vmem:[#allocation5 + $0xea4] sm:$0xff]
    %v610 = vld [vmem:[#allocation5 + $0xeac] sm:$0xff]
    %v611 = vld [vmem:[#allocation5 + $0xeb4] sm:$0xff]
    %v612 = vld [vmem:[#allocation5 + $0xebc] sm:$0xff]
    %v613 = vld [vmem:[#allocation5 + $0xec4] sm:$0xf]
    %v614 = vld [vmem:[#allocation5 + $0xec8] sm:$0xff]
    %v615 = vld [vmem:[#allocation5 + $0xed0] sm:$0xff]
    %v616 = vld [vmem:[#allocation5 + $0xed8] sm:$0xff]
    %v617 = vld [vmem:[#allocation5 + $0xee0] sm:$0xff]
    %v618 = vld [vmem:[#allocation5 + $0xee8] sm:$0xff]
    %v619 = vld [vmem:[#allocation5 + $0xef0] sm:$0xf]
    %v620 = vld [vmem:[#allocation5 + $0xef4] sm:$0xff]
    %v621 = vld [vmem:[#allocation5 + $0xefc] sm:$0xff]
    %v622 = vld [vmem:[#allocation5 + $0xf04] sm:$0xff]
    %v623 = vld [vmem:[#allocation5 + $0xf0c] sm:$0xff]
    %v624 = vld [vmem:[#allocation5 + $0xf14] sm:$0xff]
    %v625 = vld [vmem:[#allocation5 + $0xf1c] sm:$0xf]
    %v626 = vld [vmem:[#allocation5 + $0xf20] sm:$0xff]
    %v627 = vld [vmem:[#allocation5 + $0xf28] sm:$0xff]
    %v628 = vld [vmem:[#allocation5 + $0xf30] sm:$0xff]
    %v629 = vld [vmem:[#allocation5 + $0xf38] sm:$0xff]
    %v630 = vld [vmem:[#allocation5 + $0xf40] sm:$0xff]
    %v631 = vld [vmem:[#allocation5 + $0xf48] sm:$0xf]
    %v632 = vld [vmem:[#allocation5 + $0xf4c] sm:$0xff]
    %v633 = vld [vmem:[#allocation5 + $0xf54] sm:$0xff]
    %v634 = vld [vmem:[#allocation5 + $0xf5c] sm:$0xff]
    %v635 = vld [vmem:[#allocation5 + $0xf64] sm:$0xff]
    %v636 = vld [vmem:[#allocation5 + $0xf6c] sm:$0xff]
    %v637 = vld [vmem:[#allocation5 + $0xf74] sm:$0xf]
    %v638 = vld [vmem:[#allocation5 + $0xf78] sm:$0xff]
    %v639 = vld [vmem:[#allocation5 + $0xf80] sm:$0xff]
    %v640 = vld [vmem:[#allocation5 + $0xf88] sm:$0xff]
    %v641 = vld [vmem:[#allocation5 + $0xf90] sm:$0xff]
    %v642 = vld [vmem:[#allocation5 + $0xf98] sm:$0xff]
    %v643 = vld [vmem:[#allocation5 + $0xfa0] sm:$0xf]
    %v644 = vld [vmem:[#allocation5 + $0xfa4] sm:$0xff]
    %v645 = vld [vmem:[#allocation5 + $0xfac] sm:$0xff]
    %v646 = vld [vmem:[#allocation5 + $0xfb4] sm:$0xff]
    %v647 = vld [vmem:[#allocation5 + $0xfbc] sm:$0xff]
    %v648 = vld [vmem:[#allocation5 + $0xfc4] sm:$0xff]
    %v649 = vld [vmem:[#allocation5 + $0xfcc] sm:$0xf]
    %v650 = vld [vmem:[#allocation5 + $0xfd0] sm:$0xff]
    %v651 = vld [vmem:[#allocation5 + $0xfd8] sm:$0xff]
    %v652 = vld [vmem:[#allocation5 + $0xfe0] sm:$0xff]
    %v653 = vld [vmem:[#allocation5 + $0xfe8] sm:$0xff]
    %v654 = vld [vmem:[#allocation5 + $0xff0] sm:$0xff]
    %v655 = vld [vmem:[#allocation5 + $0xff8] sm:$0xf]
    %v656 = vld [vmem:[#allocation5 + $0xffc] sm:$0xff]
    %v657 = vld [vmem:[#allocation5 + $0x1004] sm:$0xff]
    %v658 = vld [vmem:[#allocation5 + $0x100c] sm:$0xff]
    %v659 = vld [vmem:[#allocation5 + $0x1014] sm:$0xff]
    %v660 = vld [vmem:[#allocation5 + $0x101c] sm:$0xff]
    %v661 = vld [vmem:[#allocation5 + $0x1024] sm:$0xf]
    %v662 = vld [vmem:[#allocation5 + $0x1028] sm:$0xff]
    %v663 = vld [vmem:[#allocation5 + $0x1030] sm:$0xff]
    %v664 = vld [vmem:[#allocation5 + $0x1038] sm:$0xff]
    %v665 = vld [vmem:[#allocation5 + $0x1040] sm:$0xff]
    %v666 = vld [vmem:[#allocation5 + $0x1048] sm:$0xff]
    %v667 = vld [vmem:[#allocation5 + $0x1050] sm:$0xf]
    %v668 = vld [vmem:[#allocation5 + $0x1054] sm:$0xff]
    %v669 = vld [vmem:[#allocation5 + $0x105c] sm:$0xff]
    %v670 = vld [vmem:[#allocation5 + $0x1064] sm:$0xff]
    %v671 = vld [vmem:[#allocation5 + $0x106c] sm:$0xff]
    %v672 = vld [vmem:[#allocation5 + $0x1074] sm:$0xff]
    %v673 = vld [vmem:[#allocation5 + $0x107c] sm:$0xf]
    %v674 = vld [vmem:[#allocation5 + $0x1080] sm:$0xff]
    %v675 = vld [vmem:[#allocation5 + $0x1088] sm:$0xff]
    %v676 = vld [vmem:[#allocation5 + $0x1090] sm:$0xff]
    %v677 = vld [vmem:[#allocation5 + $0x1098] sm:$0xff]
    %v678 = vld [vmem:[#allocation5 + $0x10a0] sm:$0xff]
    %v679 = vld [vmem:[#allocation5 + $0x10a8] sm:$0xf]
    %v680 = vld [vmem:[#allocation5 + $0x10ac] sm:$0xff]
    %v681 = vld [vmem:[#allocation5 + $0x10b4] sm:$0xff]
    %v682 = vld [vmem:[#allocation5 + $0x10bc] sm:$0xff]
    %v683 = vld [vmem:[#allocation5 + $0x10c4] sm:$0xff]
    %v684 = vld [vmem:[#allocation5 + $0x10cc] sm:$0xff]
    %v685 = vld [vmem:[#allocation5 + $0x10d4] sm:$0xf]
    %v686 = vld [vmem:[#allocation7] sm:$0xff]
    %v687 = vld [vmem:[#allocation7 + $0x8] sm:$0x7]
    %v690 = vlaneseq
    %v691 = vshrl.u32 %v690, 7
    %v692 = vsub.s32 0, %v691
    %v693 = vrot.slane %v686, %v692
    %v694 = vlaneseq
    %v695 = vshrl.u32 %v694, 7
    %v696 = vsub.s32 1, %v695
    %v697 = vrot.slane %v686, %v696
    %v698 = vlaneseq
    %v699 = vshrl.u32 %v698, 7
    %v700 = vsub.s32 2, %v699
    %v701 = vrot.slane %v686, %v700
    %v702 = vlaneseq
    %v703 = vshrl.u32 %v702, 7
    %v704 = vsub.s32 3, %v703
    %v705 = vrot.slane %v686, %v704
    %v706 = vlaneseq
    %v707 = vshrl.u32 %v706, 7
    %v708 = vsub.s32 4, %v707
    %v709 = vrot.slane %v686, %v708
    %v710 = vlaneseq
    %v711 = vshrl.u32 %v710, 7
    %v712 = vsub.s32 5, %v711
    %v713 = vrot.slane %v686, %v712
    %v714 = vlaneseq
    %v715 = vshrl.u32 %v714, 7
    %v716 = vsub.s32 6, %v715
    %v717 = vrot.slane %v686, %v716
    %v718 = vlaneseq
    %v719 = vshrl.u32 %v718, 7
    %v720 = vsub.s32 7, %v719
    %v721 = vrot.slane %v686, %v720
    %v722 = vlaneseq
    %v723 = vshrl.u32 %v722, 7
    %v724 = vsub.s32 0, %v723
    %v725 = vrot.slane %v687, %v724
    %v726 = vlaneseq
    %v727 = vshrl.u32 %v726, 7
    %v728 = vsub.s32 1, %v727
    %v729 = vrot.slane %v687, %v728
    %v730 = vlaneseq
    %v731 = vshrl.u32 %v730, 7
    %v732 = vsub.s32 2, %v731
    %v733 = vrot.slane %v687, %v732
    %v1333 = vunpack.c.l.b16 %v98
    %v1334 = vunpack.c.h.b16 %v98
    %v1335 = vunpack.c.l.b16 %v99
    %v1336 = vunpack.c.h.b16 %v99
    %v1337 = vunpack.c.l.b16 %v100
    %v1338 = vunpack.c.h.b16 %v100
    %v1339 = vunpack.c.l.b16 %v101
    %v1340 = vunpack.c.h.b16 %v101
    %v1341 = vunpack.c.l.b16 %v102
    %v1342 = vunpack.c.h.b16 %v102
    %v1343 = vunpack.c.l.b16 %v103
    %v1344 = vunpack.c.l.b16 %v104
    %v1345 = vunpack.c.h.b16 %v104
    %v1346 = vunpack.c.l.b16 %v105
    %v1347 = vunpack.c.h.b16 %v105
    %v1348 = vunpack.c.l.b16 %v106
    %v1349 = vunpack.c.h.b16 %v106
    %v1350 = vunpack.c.l.b16 %v107
    %v1351 = vunpack.c.h.b16 %v107
    %v1352 = vunpack.c.l.b16 %v108
    %v1353 = vunpack.c.h.b16 %v108
    %v1354 = vunpack.c.l.b16 %v109
    %v1355 = vunpack.c.l.b16 %v110
    %v1356 = vunpack.c.h.b16 %v110
    %v1357 = vunpack.c.l.b16 %v111
    %v1358 = vunpack.c.h.b16 %v111
    %v1359 = vunpack.c.l.b16 %v112
    %v1360 = vunpack.c.h.b16 %v112
    %v1361 = vunpack.c.l.b16 %v113
    %v1362 = vunpack.c.h.b16 %v113
    %v1363 = vunpack.c.l.b16 %v114
    %v1364 = vunpack.c.h.b16 %v114
    %v1365 = vunpack.c.l.b16 %v115
    %v1366 = vunpack.c.l.b16 %v116
    %v1367 = vunpack.c.h.b16 %v116
    %v1368 = vunpack.c.l.b16 %v117
    %v1369 = vunpack.c.h.b16 %v117
    %v1370 = vunpack.c.l.b16 %v118
    %v1371 = vunpack.c.h.b16 %v118
    %v1372 = vunpack.c.l.b16 %v119
    %v1373 = vunpack.c.h.b16 %v119
    %v1374 = vunpack.c.l.b16 %v120
    %v1375 = vunpack.c.h.b16 %v120
    %v1376 = vunpack.c.l.b16 %v121
    %v1377 = vunpack.c.l.b16 %v122
    %v1378 = vunpack.c.h.b16 %v122
    %v1379 = vunpack.c.l.b16 %v123
    %v1380 = vunpack.c.h.b16 %v123
    %v1381 = vunpack.c.l.b16 %v124
    %v1382 = vunpack.c.h.b16 %v124
    %v1383 = vunpack.c.l.b16 %v125
    %v1384 = vunpack.c.h.b16 %v125
    %v1385 = vunpack.c.l.b16 %v126
    %v1386 = vunpack.c.h.b16 %v126
    %v1387 = vunpack.c.l.b16 %v127
    %v1388 = vunpack.c.l.b16 %v128
    %v1389 = vunpack.c.h.b16 %v128
    %v1390 = vunpack.c.l.b16 %v129
    %v1391 = vunpack.c.h.b16 %v129
    %v1392 = vunpack.c.l.b16 %v130
    %v1393 = vunpack.c.h.b16 %v130
    %v1394 = vunpack.c.l.b16 %v131
    %v1395 = vunpack.c.h.b16 %v131
    %v1396 = vunpack.c.l.b16 %v132
    %v1397 = vunpack.c.h.b16 %v132
    %v1398 = vunpack.c.l.b16 %v133
    %v1399 = vunpack.c.l.b16 %v134
    %v1400 = vunpack.c.h.b16 %v134
    %v1401 = vunpack.c.l.b16 %v135
    %v1402 = vunpack.c.h.b16 %v135
    %v1403 = vunpack.c.l.b16 %v136
    %v1404 = vunpack.c.h.b16 %v136
    %v1405 = vunpack.c.l.b16 %v137
    %v1406 = vunpack.c.h.b16 %v137
    %v1407 = vunpack.c.l.b16 %v138
    %v1408 = vunpack.c.h.b16 %v138
    %v1409 = vunpack.c.l.b16 %v139
    %v1410 = vunpack.c.l.b16 %v140
    %v1411 = vunpack.c.h.b16 %v140
    %v1412 = vunpack.c.l.b16 %v141
    %v1413 = vunpack.c.h.b16 %v141
    %v1414 = vunpack.c.l.b16 %v142
    %v1415 = vunpack.c.h.b16 %v142
    %v1416 = vunpack.c.l.b16 %v143
    %v1417 = vunpack.c.h.b16 %v143
    %v1418 = vunpack.c.l.b16 %v144
    %v1419 = vunpack.c.h.b16 %v144
    %v1420 = vunpack.c.l.b16 %v145
    %v1421 = vunpack.c.l.b16 %v146
    %v1422 = vunpack.c.h.b16 %v146
    %v1423 = vunpack.c.l.b16 %v147
    %v1424 = vunpack.c.h.b16 %v147
    %v1425 = vunpack.c.l.b16 %v148
    %v1426 = vunpack.c.h.b16 %v148
    %v1427 = vunpack.c.l.b16 %v149
    %v1428 = vunpack.c.h.b16 %v149
    %v1429 = vunpack.c.l.b16 %v150
    %v1430 = vunpack.c.h.b16 %v150
    %v1431 = vunpack.c.l.b16 %v151
    %v1432 = vunpack.c.l.b16 %v152
    %v1433 = vunpack.c.h.b16 %v152
    %v1434 = vunpack.c.l.b16 %v153
    %v1435 = vunpack.c.h.b16 %v153
    %v1436 = vunpack.c.l.b16 %v154
    %v1437 = vunpack.c.h.b16 %v154
    %v1438 = vunpack.c.l.b16 %v155
    %v1439 = vunpack.c.h.b16 %v155
    %v1440 = vunpack.c.l.b16 %v156
    %v1441 = vunpack.c.h.b16 %v156
    %v1442 = vunpack.c.l.b16 %v157
    %v1443 = vunpack.c.l.b16 %v158
    %v1444 = vunpack.c.h.b16 %v158
    %v1445 = vunpack.c.l.b16 %v159
    %v1446 = vunpack.c.h.b16 %v159
    %v1447 = vunpack.c.l.b16 %v160
    %v1448 = vunpack.c.h.b16 %v160
    %v1449 = vunpack.c.l.b16 %v161
    %v1450 = vunpack.c.h.b16 %v161
    %v1451 = vunpack.c.l.b16 %v162
    %v1452 = vunpack.c.h.b16 %v162
    %v1453 = vunpack.c.l.b16 %v163
    %v1454 = vunpack.c.l.b16 %v164
    %v1455 = vunpack.c.h.b16 %v164
    %v1456 = vunpack.c.l.b16 %v165
    %v1457 = vunpack.c.h.b16 %v165
    %v1458 = vunpack.c.l.b16 %v166
    %v1459 = vunpack.c.h.b16 %v166
    %v1460 = vunpack.c.l.b16 %v167
    %v1461 = vunpack.c.h.b16 %v167
    %v1462 = vunpack.c.l.b16 %v168
    %v1463 = vunpack.c.h.b16 %v168
    %v1464 = vunpack.c.l.b16 %v169
    %v1465 = vunpack.c.l.b16 %v170
    %v1466 = vunpack.c.h.b16 %v170
    %v1467 = vunpack.c.l.b16 %v171
    %v1468 = vunpack.c.h.b16 %v171
    %v1469 = vunpack.c.l.b16 %v172
    %v1470 = vunpack.c.h.b16 %v172
    %v1471 = vunpack.c.l.b16 %v173
    %v1472 = vunpack.c.h.b16 %v173
    %v1473 = vunpack.c.l.b16 %v174
    %v1474 = vunpack.c.h.b16 %v174
    %v1475 = vunpack.c.l.b16 %v175
    %v1476 = vunpack.c.l.b16 %v176
    %v1477 = vunpack.c.h.b16 %v176
    %v1478 = vunpack.c.l.b16 %v177
    %v1479 = vunpack.c.h.b16 %v177
    %v1480 = vunpack.c.l.b16 %v178
    %v1481 = vunpack.c.h.b16 %v178
    %v1482 = vunpack.c.l.b16 %v179
    %v1483 = vunpack.c.h.b16 %v179
    %v1484 = vunpack.c.l.b16 %v180
    %v1485 = vunpack.c.h.b16 %v180
    %v1486 = vunpack.c.l.b16 %v181
    %v1487 = vunpack.c.l.b16 %v182
    %v1488 = vunpack.c.h.b16 %v182
    %v1489 = vunpack.c.l.b16 %v183
    %v1490 = vunpack.c.h.b16 %v183
    %v1491 = vunpack.c.l.b16 %v184
    %v1492 = vunpack.c.h.b16 %v184
    %v1493 = vunpack.c.l.b16 %v185
    %v1494 = vunpack.c.h.b16 %v185
    %v1495 = vunpack.c.l.b16 %v186
    %v1496 = vunpack.c.h.b16 %v186
    %v1497 = vunpack.c.l.b16 %v187
    %v1498 = vunpack.c.l.b16 %v188
    %v1499 = vunpack.c.h.b16 %v188
    %v1500 = vunpack.c.l.b16 %v189
    %v1501 = vunpack.c.h.b16 %v189
    %v1502 = vunpack.c.l.b16 %v190
    %v1503 = vunpack.c.h.b16 %v190
    %v1504 = vunpack.c.l.b16 %v191
    %v1505 = vunpack.c.h.b16 %v191
    %v1506 = vunpack.c.l.b16 %v192
    %v1507 = vunpack.c.h.b16 %v192
    %v1508 = vunpack.c.l.b16 %v193
    %v1509 = vunpack.c.l.b16 %v194
    %v1510 = vunpack.c.h.b16 %v194
    %v1511 = vunpack.c.l.b16 %v195
    %v1512 = vunpack.c.h.b16 %v195
    %v1513 = vunpack.c.l.b16 %v196
    %v1514 = vunpack.c.h.b16 %v196
    %v1515 = vunpack.c.l.b16 %v197
    %v1516 = vunpack.c.h.b16 %v197
    %v1517 = vunpack.c.l.b16 %v198
    %v1518 = vunpack.c.h.b16 %v198
    %v1519 = vunpack.c.l.b16 %v199
    %v1520 = vunpack.c.l.b16 %v200
    %v1521 = vunpack.c.h.b16 %v200
    %v1522 = vunpack.c.l.b16 %v201
    %v1523 = vunpack.c.h.b16 %v201
    %v1524 = vunpack.c.l.b16 %v202
    %v1525 = vunpack.c.h.b16 %v202
    %v1526 = vunpack.c.l.b16 %v203
    %v1527 = vunpack.c.h.b16 %v203
    %v1528 = vunpack.c.l.b16 %v204
    %v1529 = vunpack.c.h.b16 %v204
    %v1530 = vunpack.c.l.b16 %v205
    %v1531 = vunpack.c.l.b16 %v206
    %v1532 = vunpack.c.h.b16 %v206
    %v1533 = vunpack.c.l.b16 %v207
    %v1534 = vunpack.c.h.b16 %v207
    %v1535 = vunpack.c.l.b16 %v208
    %v1536 = vunpack.c.h.b16 %v208
    %v1537 = vunpack.c.l.b16 %v209
    %v1538 = vunpack.c.h.b16 %v209
    %v1539 = vunpack.c.l.b16 %v210
    %v1540 = vunpack.c.h.b16 %v210
    %v1541 = vunpack.c.l.b16 %v211
    %v1542 = vunpack.c.l.b16 %v212
    %v1543 = vunpack.c.h.b16 %v212
    %v1544 = vunpack.c.l.b16 %v213
    %v1545 = vunpack.c.h.b16 %v213
    %v1546 = vunpack.c.l.b16 %v214
    %v1547 = vunpack.c.h.b16 %v214
    %v1548 = vunpack.c.l.b16 %v215
    %v1549 = vunpack.c.h.b16 %v215
    %v1550 = vunpack.c.l.b16 %v216
    %v1551 = vunpack.c.h.b16 %v216
    %v1552 = vunpack.c.l.b16 %v217
    %v1553 = vunpack.c.l.b16 %v218
    %v1554 = vunpack.c.h.b16 %v218
    %v1555 = vunpack.c.l.b16 %v219
    %v1556 = vunpack.c.h.b16 %v219
    %v1557 = vunpack.c.l.b16 %v220
    %v1558 = vunpack.c.h.b16 %v220
    %v1559 = vunpack.c.l.b16 %v221
    %v1560 = vunpack.c.h.b16 %v221
    %v1561 = vunpack.c.l.b16 %v222
    %v1562 = vunpack.c.h.b16 %v222
    %v1563 = vunpack.c.l.b16 %v223
    %v1564 = vunpack.c.l.b16 %v224
    %v1565 = vunpack.c.h.b16 %v224
    %v1566 = vunpack.c.l.b16 %v225
    %v1567 = vunpack.c.h.b16 %v225
    %v1568 = vunpack.c.l.b16 %v226
    %v1569 = vunpack.c.h.b16 %v226
    %v1570 = vunpack.c.l.b16 %v227
    %v1571 = vunpack.c.h.b16 %v227
    %v1572 = vunpack.c.l.b16 %v228
    %v1573 = vunpack.c.h.b16 %v228
    %v1574 = vunpack.c.l.b16 %v229
    %v1575 = vunpack.c.l.b16 %v230
    %v1576 = vunpack.c.h.b16 %v230
    %v1577 = vunpack.c.l.b16 %v231
    %v1578 = vunpack.c.h.b16 %v231
    %v1579 = vunpack.c.l.b16 %v232
    %v1580 = vunpack.c.h.b16 %v232
    %v1581 = vunpack.c.l.b16 %v233
    %v1582 = vunpack.c.h.b16 %v233
    %v1583 = vunpack.c.l.b16 %v234
    %v1584 = vunpack.c.h.b16 %v234
    %v1585 = vunpack.c.l.b16 %v235
    %v1586 = vunpack.c.l.b16 %v236
    %v1587 = vunpack.c.h.b16 %v236
    %v1588 = vunpack.c.l.b16 %v237
    %v1589 = vunpack.c.h.b16 %v237
    %v1590 = vunpack.c.l.b16 %v238
    %v1591 = vunpack.c.h.b16 %v238
    %v1592 = vunpack.c.l.b16 %v239
    %v1593 = vunpack.c.h.b16 %v239
    %v1594 = vunpack.c.l.b16 %v240
    %v1595 = vunpack.c.h.b16 %v240
    %v1596 = vunpack.c.l.b16 %v241
    %v1597 = vunpack.c.l.b16 %v242
    %v1598 = vunpack.c.h.b16 %v242
    %v1599 = vunpack.c.l.b16 %v243
    %v1600 = vunpack.c.h.b16 %v243
    %v1601 = vunpack.c.l.b16 %v244
    %v1602 = vunpack.c.h.b16 %v244
    %v1603 = vunpack.c.l.b16 %v245
    %v1604 = vunpack.c.h.b16 %v245
    %v1605 = vunpack.c.l.b16 %v246
    %v1606 = vunpack.c.h.b16 %v246
    %v1607 = vunpack.c.l.b16 %v247
    %v1608 = vunpack.c.l.b16 %v248
    %v1609 = vunpack.c.h.b16 %v248
    %v1610 = vunpack.c.l.b16 %v249
    %v1611 = vunpack.c.h.b16 %v249
    %v1612 = vunpack.c.l.b16 %v250
    %v1613 = vunpack.c.h.b16 %v250
    %v1614 = vunpack.c.l.b16 %v251
    %v1615 = vunpack.c.h.b16 %v251
    %v1616 = vunpack.c.l.b16 %v252
    %v1617 = vunpack.c.h.b16 %v252
    %v1618 = vunpack.c.l.b16 %v253
    %v1619 = vunpack.c.l.b16 %v254
    %v1620 = vunpack.c.h.b16 %v254
    %v1621 = vunpack.c.l.b16 %v255
    %v1622 = vunpack.c.h.b16 %v255
    %v1623 = vunpack.c.l.b16 %v256
    %v1624 = vunpack.c.h.b16 %v256
    %v1625 = vunpack.c.l.b16 %v257
    %v1626 = vunpack.c.h.b16 %v257
    %v1627 = vunpack.c.l.b16 %v258
    %v1628 = vunpack.c.h.b16 %v258
    %v1629 = vunpack.c.l.b16 %v259
    %v1630 = vunpack.c.l.b16 %v260
    %v1631 = vunpack.c.h.b16 %v260
    %v1632 = vunpack.c.l.b16 %v261
    %v1633 = vunpack.c.h.b16 %v261
    %v1634 = vunpack.c.l.b16 %v262
    %v1635 = vunpack.c.h.b16 %v262
    %v1636 = vunpack.c.l.b16 %v263
    %v1637 = vunpack.c.h.b16 %v263
    %v1638 = vunpack.c.l.b16 %v264
    %v1639 = vunpack.c.h.b16 %v264
    %v1640 = vunpack.c.l.b16 %v265
    %v1641 = vunpack.c.l.b16 %v266
    %v1642 = vunpack.c.h.b16 %v266
    %v1643 = vunpack.c.l.b16 %v267
    %v1644 = vunpack.c.h.b16 %v267
    %v1645 = vunpack.c.l.b16 %v268
    %v1646 = vunpack.c.h.b16 %v268
    %v1647 = vunpack.c.l.b16 %v269
    %v1648 = vunpack.c.h.b16 %v269
    %v1649 = vunpack.c.l.b16 %v270
    %v1650 = vunpack.c.h.b16 %v270
    %v1651 = vunpack.c.l.b16 %v271
    %v1652 = vunpack.c.l.b16 %v272
    %v1653 = vunpack.c.h.b16 %v272
    %v1654 = vunpack.c.l.b16 %v273
    %v1655 = vunpack.c.h.b16 %v273
    %v1656 = vunpack.c.l.b16 %v274
    %v1657 = vunpack.c.h.b16 %v274
    %v1658 = vunpack.c.l.b16 %v275
    %v1659 = vunpack.c.h.b16 %v275
    %v1660 = vunpack.c.l.b16 %v276
    %v1661 = vunpack.c.h.b16 %v276
    %v1662 = vunpack.c.l.b16 %v277
    %v1663 = vunpack.c.l.b16 %v278
    %v1664 = vunpack.c.h.b16 %v278
    %v1665 = vunpack.c.l.b16 %v279
    %v1666 = vunpack.c.h.b16 %v279
    %v1667 = vunpack.c.l.b16 %v280
    %v1668 = vunpack.c.h.b16 %v280
    %v1669 = vunpack.c.l.b16 %v281
    %v1670 = vunpack.c.h.b16 %v281
    %v1671 = vunpack.c.l.b16 %v282
    %v1672 = vunpack.c.h.b16 %v282
    %v1673 = vunpack.c.l.b16 %v283
    %v1674 = vunpack.c.l.b16 %v284
    %v1675 = vunpack.c.h.b16 %v284
    %v1676 = vunpack.c.l.b16 %v285
    %v1677 = vunpack.c.h.b16 %v285
    %v1678 = vunpack.c.l.b16 %v286
    %v1679 = vunpack.c.h.b16 %v286
    %v1680 = vunpack.c.l.b16 %v287
    %v1681 = vunpack.c.h.b16 %v287
    %v1682 = vunpack.c.l.b16 %v288
    %v1683 = vunpack.c.h.b16 %v288
    %v1684 = vunpack.c.l.b16 %v289
    %v1685 = vunpack.c.l.b16 %v290
    %v1686 = vunpack.c.h.b16 %v290
    %v1687 = vunpack.c.l.b16 %v291
    %v1688 = vunpack.c.h.b16 %v291
    %v1689 = vunpack.c.l.b16 %v292
    %v1690 = vunpack.c.h.b16 %v292
    %v1691 = vunpack.c.l.b16 %v293
    %v1692 = vunpack.c.h.b16 %v293
    %v1693 = vunpack.c.l.b16 %v294
    %v1694 = vunpack.c.h.b16 %v294
    %v1695 = vunpack.c.l.b16 %v295
    %v1696 = vunpack.c.l.b16 %v296
    %v1697 = vunpack.c.h.b16 %v296
    %v1698 = vunpack.c.l.b16 %v297
    %v1699 = vunpack.c.h.b16 %v297
    %v1700 = vunpack.c.l.b16 %v298
    %v1701 = vunpack.c.h.b16 %v298
    %v1702 = vunpack.c.l.b16 %v299
    %v1703 = vunpack.c.h.b16 %v299
    %v1704 = vunpack.c.l.b16 %v300
    %v1705 = vunpack.c.h.b16 %v300
    %v1706 = vunpack.c.l.b16 %v301
    %v1707 = vunpack.c.l.b16 %v302
    %v1708 = vunpack.c.h.b16 %v302
    %v1709 = vunpack.c.l.b16 %v303
    %v1710 = vunpack.c.h.b16 %v303
    %v1711 = vunpack.c.l.b16 %v304
    %v1712 = vunpack.c.h.b16 %v304
    %v1713 = vunpack.c.l.b16 %v305
    %v1714 = vunpack.c.h.b16 %v305
    %v1715 = vunpack.c.l.b16 %v306
    %v1716 = vunpack.c.h.b16 %v306
    %v1717 = vunpack.c.l.b16 %v307
    %v1718 = vunpack.c.l.b16 %v308
    %v1719 = vunpack.c.h.b16 %v308
    %v1720 = vunpack.c.l.b16 %v309
    %v1721 = vunpack.c.h.b16 %v309
    %v1722 = vunpack.c.l.b16 %v310
    %v1723 = vunpack.c.h.b16 %v310
    %v1724 = vunpack.c.l.b16 %v311
    %v1725 = vunpack.c.h.b16 %v311
    %v1726 = vunpack.c.l.b16 %v312
    %v1727 = vunpack.c.h.b16 %v312
    %v1728 = vunpack.c.l.b16 %v313
    %v1729 = vunpack.c.l.b16 %v314
    %v1730 = vunpack.c.h.b16 %v314
    %v1731 = vunpack.c.l.b16 %v315
    %v1732 = vunpack.c.h.b16 %v315
    %v1733 = vunpack.c.l.b16 %v316
    %v1734 = vunpack.c.h.b16 %v316
    %v1735 = vunpack.c.l.b16 %v317
    %v1736 = vunpack.c.h.b16 %v317
    %v1737 = vunpack.c.l.b16 %v318
    %v1738 = vunpack.c.h.b16 %v318
    %v1739 = vunpack.c.l.b16 %v319
    %v1740 = vunpack.c.l.b16 %v320
    %v1741 = vunpack.c.h.b16 %v320
    %v1742 = vunpack.c.l.b16 %v321
    %v1743 = vunpack.c.h.b16 %v321
    %v1744 = vunpack.c.l.b16 %v322
    %v1745 = vunpack.c.h.b16 %v322
    %v1746 = vunpack.c.l.b16 %v323
    %v1747 = vunpack.c.h.b16 %v323
    %v1748 = vunpack.c.l.b16 %v324
    %v1749 = vunpack.c.h.b16 %v324
    %v1750 = vunpack.c.l.b16 %v325
    %v1751 = vunpack.c.l.b16 %v326
    %v1752 = vunpack.c.h.b16 %v326
    %v1753 = vunpack.c.l.b16 %v327
    %v1754 = vunpack.c.h.b16 %v327
    %v1755 = vunpack.c.l.b16 %v328
    %v1756 = vunpack.c.h.b16 %v328
    %v1757 = vunpack.c.l.b16 %v329
    %v1758 = vunpack.c.h.b16 %v329
    %v1759 = vunpack.c.l.b16 %v330
    %v1760 = vunpack.c.h.b16 %v330
    %v1761 = vunpack.c.l.b16 %v331
    %v1762 = vunpack.c.l.b16 %v332
    %v1763 = vunpack.c.h.b16 %v332
    %v1764 = vunpack.c.l.b16 %v333
    %v1765 = vunpack.c.h.b16 %v333
    %v1766 = vunpack.c.l.b16 %v334
    %v1767 = vunpack.c.h.b16 %v334
    %v1768 = vunpack.c.l.b16 %v335
    %v1769 = vunpack.c.h.b16 %v335
    %v1770 = vunpack.c.l.b16 %v336
    %v1771 = vunpack.c.h.b16 %v336
    %v1772 = vunpack.c.l.b16 %v337
    %v1773 = vunpack.c.l.b16 %v338
    %v1774 = vunpack.c.h.b16 %v338
    %v1775 = vunpack.c.l.b16 %v339
    %v1776 = vunpack.c.h.b16 %v339
    %v1777 = vunpack.c.l.b16 %v340
    %v1778 = vunpack.c.h.b16 %v340
    %v1779 = vunpack.c.l.b16 %v341
    %v1780 = vunpack.c.h.b16 %v341
    %v1781 = vunpack.c.l.b16 %v342
    %v1782 = vunpack.c.h.b16 %v342
    %v1783 = vunpack.c.l.b16 %v343
    %v1784 = vunpack.c.l.b16 %v344
    %v1785 = vunpack.c.h.b16 %v344
    %v1786 = vunpack.c.l.b16 %v345
    %v1787 = vunpack.c.h.b16 %v345
    %v1788 = vunpack.c.l.b16 %v346
    %v1789 = vunpack.c.h.b16 %v346
    %v1790 = vunpack.c.l.b16 %v347
    %v1791 = vunpack.c.h.b16 %v347
    %v1792 = vunpack.c.l.b16 %v348
    %v1793 = vunpack.c.h.b16 %v348
    %v1794 = vunpack.c.l.b16 %v349
    %v1795 = vunpack.c.l.b16 %v350
    %v1796 = vunpack.c.h.b16 %v350
    %v1797 = vunpack.c.l.b16 %v351
    %v1798 = vunpack.c.h.b16 %v351
    %v1799 = vunpack.c.l.b16 %v352
    %v1800 = vunpack.c.h.b16 %v352
    %v1801 = vunpack.c.l.b16 %v353
    %v1802 = vunpack.c.h.b16 %v353
    %v1803 = vunpack.c.l.b16 %v354
    %v1804 = vunpack.c.h.b16 %v354
    %v1805 = vunpack.c.l.b16 %v355
    %v1806 = vunpack.c.l.b16 %v356
    %v1807 = vunpack.c.h.b16 %v356
    %v1808 = vunpack.c.l.b16 %v357
    %v1809 = vunpack.c.h.b16 %v357
    %v1810 = vunpack.c.l.b16 %v358
    %v1811 = vunpack.c.h.b16 %v358
    %v1812 = vunpack.c.l.b16 %v359
    %v1813 = vunpack.c.h.b16 %v359
    %v1814 = vunpack.c.l.b16 %v360
    %v1815 = vunpack.c.h.b16 %v360
    %v1816 = vunpack.c.l.b16 %v361
    %v1817 = vunpack.c.l.b16 %v362
    %v1818 = vunpack.c.h.b16 %v362
    %v1819 = vunpack.c.l.b16 %v363
    %v1820 = vunpack.c.h.b16 %v363
    %v1821 = vunpack.c.l.b16 %v364
    %v1822 = vunpack.c.h.b16 %v364
    %v1823 = vunpack.c.l.b16 %v365
    %v1824 = vunpack.c.h.b16 %v365
    %v1825 = vunpack.c.l.b16 %v366
    %v1826 = vunpack.c.h.b16 %v366
    %v1827 = vunpack.c.l.b16 %v367
    %v1828 = vunpack.c.l.b16 %v368
    %v1829 = vunpack.c.h.b16 %v368
    %v1830 = vunpack.c.l.b16 %v369
    %v1831 = vunpack.c.h.b16 %v369
    %v1832 = vunpack.c.l.b16 %v370
    %v1833 = vunpack.c.h.b16 %v370
    %v1834 = vunpack.c.l.b16 %v371
    %v1835 = vunpack.c.h.b16 %v371
    %v1836 = vunpack.c.l.b16 %v372
    %v1837 = vunpack.c.h.b16 %v372
    %v1838 = vunpack.c.l.b16 %v373
    %v1839 = vunpack.c.l.b16 %v374
    %v1840 = vunpack.c.h.b16 %v374
    %v1841 = vunpack.c.l.b16 %v375
    %v1842 = vunpack.c.h.b16 %v375
    %v1843 = vunpack.c.l.b16 %v376
    %v1844 = vunpack.c.h.b16 %v376
    %v1845 = vunpack.c.l.b16 %v377
    %v1846 = vunpack.c.h.b16 %v377
    %v1847 = vunpack.c.l.b16 %v378
    %v1848 = vunpack.c.h.b16 %v378
    %v1849 = vunpack.c.l.b16 %v379
    %v1850 = vunpack.c.l.b16 %v380
    %v1851 = vunpack.c.h.b16 %v380
    %v1852 = vunpack.c.l.b16 %v381
    %v1853 = vunpack.c.h.b16 %v381
    %v1854 = vunpack.c.l.b16 %v382
    %v1855 = vunpack.c.h.b16 %v382
    %v1856 = vunpack.c.l.b16 %v383
    %v1857 = vunpack.c.h.b16 %v383
    %v1858 = vunpack.c.l.b16 %v384
    %v1859 = vunpack.c.h.b16 %v384
    %v1860 = vunpack.c.l.b16 %v385
    %v1861 = vunpack.c.l.b16 %v386
    %v1862 = vunpack.c.h.b16 %v386
    %v1863 = vunpack.c.l.b16 %v387
    %v1864 = vunpack.c.h.b16 %v387
    %v1865 = vunpack.c.l.b16 %v388
    %v1866 = vunpack.c.h.b16 %v388
    %v1867 = vunpack.c.l.b16 %v389
    %v1868 = vunpack.c.h.b16 %v389
    %v1869 = vunpack.c.l.b16 %v390
    %v1870 = vunpack.c.h.b16 %v390
    %v1871 = vunpack.c.l.b16 %v391
    %v1872 = vunpack.c.l.b16 %v392
    %v1873 = vunpack.c.h.b16 %v392
    %v1874 = vunpack.c.l.b16 %v393
    %v1875 = vunpack.c.h.b16 %v393
    %v1876 = vunpack.c.l.b16 %v394
    %v1877 = vunpack.c.h.b16 %v394
    %v1878 = vunpack.c.l.b16 %v395
    %v1879 = vunpack.c.h.b16 %v395
    %v1880 = vunpack.c.l.b16 %v396
    %v1881 = vunpack.c.h.b16 %v396
    %v1882 = vunpack.c.l.b16 %v397
    %v1883 = vunpack.c.l.b16 %v398
    %v1884 = vunpack.c.h.b16 %v398
    %v1885 = vunpack.c.l.b16 %v399
    %v1886 = vunpack.c.h.b16 %v399
    %v1887 = vunpack.c.l.b16 %v400
    %v1888 = vunpack.c.h.b16 %v400
    %v1889 = vunpack.c.l.b16 %v401
    %v1890 = vunpack.c.h.b16 %v401
    %v1891 = vunpack.c.l.b16 %v402
    %v1892 = vunpack.c.h.b16 %v402
    %v1893 = vunpack.c.l.b16 %v403
    %v1894 = vunpack.c.l.b16 %v404
    %v1895 = vunpack.c.h.b16 %v404
    %v1896 = vunpack.c.l.b16 %v405
    %v1897 = vunpack.c.h.b16 %v405
    %v1898 = vunpack.c.l.b16 %v406
    %v1899 = vunpack.c.h.b16 %v406
    %v1900 = vunpack.c.l.b16 %v407
    %v1901 = vunpack.c.h.b16 %v407
    %v1902 = vunpack.c.l.b16 %v408
    %v1903 = vunpack.c.h.b16 %v408
    %v1904 = vunpack.c.l.b16 %v409
    %v1905 = vunpack.c.l.b16 %v410
    %v1906 = vunpack.c.h.b16 %v410
    %v1907 = vunpack.c.l.b16 %v411
    %v1908 = vunpack.c.h.b16 %v411
    %v1909 = vunpack.c.l.b16 %v412
    %v1910 = vunpack.c.h.b16 %v412
    %v1911 = vunpack.c.l.b16 %v413
    %v1912 = vunpack.c.h.b16 %v413
    %v1913 = vunpack.c.l.b16 %v414
    %v1914 = vunpack.c.h.b16 %v414
    %v1915 = vunpack.c.l.b16 %v415
    %v1916 = vunpack.c.l.b16 %v416
    %v1917 = vunpack.c.h.b16 %v416
    %v1918 = vunpack.c.l.b16 %v417
    %v1919 = vunpack.c.h.b16 %v417
    %v1920 = vunpack.c.l.b16 %v418
    %v1921 = vunpack.c.h.b16 %v418
    %v1922 = vunpack.c.l.b16 %v419
    %v1923 = vunpack.c.h.b16 %v419
    %v1924 = vunpack.c.l.b16 %v420
    %v1925 = vunpack.c.h.b16 %v420
    %v1926 = vunpack.c.l.b16 %v421
    %v1927 = vunpack.c.l.b16 %v422
    %v1928 = vunpack.c.h.b16 %v422
    %v1929 = vunpack.c.l.b16 %v423
    %v1930 = vunpack.c.h.b16 %v423
    %v1931 = vunpack.c.l.b16 %v424
    %v1932 = vunpack.c.h.b16 %v424
    %v1933 = vunpack.c.l.b16 %v425
    %v1934 = vunpack.c.h.b16 %v425
    %v1935 = vunpack.c.l.b16 %v426
    %v1936 = vunpack.c.h.b16 %v426
    %v1937 = vunpack.c.l.b16 %v427
    %v1938 = vunpack.c.l.b16 %v428
    %v1939 = vunpack.c.h.b16 %v428
    %v1940 = vunpack.c.l.b16 %v429
    %v1941 = vunpack.c.h.b16 %v429
    %v1942 = vunpack.c.l.b16 %v430
    %v1943 = vunpack.c.h.b16 %v430
    %v1944 = vunpack.c.l.b16 %v431
    %v1945 = vunpack.c.h.b16 %v431
    %v1946 = vunpack.c.l.b16 %v432
    %v1947 = vunpack.c.h.b16 %v432
    %v1948 = vunpack.c.l.b16 %v433
    %v1949 = vunpack.c.l.b16 %v434
    %v1950 = vunpack.c.h.b16 %v434
    %v1951 = vunpack.c.l.b16 %v435
    %v1952 = vunpack.c.h.b16 %v435
    %v1953 = vunpack.c.l.b16 %v436
    %v1954 = vunpack.c.h.b16 %v436
    %v1955 = vunpack.c.l.b16 %v437
    %v1956 = vunpack.c.h.b16 %v437
    %v1957 = vunpack.c.l.b16 %v438
    %v1958 = vunpack.c.h.b16 %v438
    %v1959 = vunpack.c.l.b16 %v439
    %v1960 = vunpack.c.l.b16 %v440
    %v1961 = vunpack.c.h.b16 %v440
    %v1962 = vunpack.c.l.b16 %v441
    %v1963 = vunpack.c.h.b16 %v441
    %v1964 = vunpack.c.l.b16 %v442
    %v1965 = vunpack.c.h.b16 %v442
    %v1966 = vunpack.c.l.b16 %v443
    %v1967 = vunpack.c.h.b16 %v443
    %v1968 = vunpack.c.l.b16 %v444
    %v1969 = vunpack.c.h.b16 %v444
    %v1970 = vunpack.c.l.b16 %v445
    %v1971 = vunpack.c.l.b16 %v446
    %v1972 = vunpack.c.h.b16 %v446
    %v1973 = vunpack.c.l.b16 %v447
    %v1974 = vunpack.c.h.b16 %v447
    %v1975 = vunpack.c.l.b16 %v448
    %v1976 = vunpack.c.h.b16 %v448
    %v1977 = vunpack.c.l.b16 %v449
    %v1978 = vunpack.c.h.b16 %v449
    %v1979 = vunpack.c.l.b16 %v450
    %v1980 = vunpack.c.h.b16 %v450
    %v1981 = vunpack.c.l.b16 %v451
    %v1982 = vunpack.c.l.b16 %v452
    %v1983 = vunpack.c.h.b16 %v452
    %v1984 = vunpack.c.l.b16 %v453
    %v1985 = vunpack.c.h.b16 %v453
    %v1986 = vunpack.c.l.b16 %v454
    %v1987 = vunpack.c.h.b16 %v454
    %v1988 = vunpack.c.l.b16 %v455
    %v1989 = vunpack.c.h.b16 %v455
    %v1990 = vunpack.c.l.b16 %v456
    %v1991 = vunpack.c.h.b16 %v456
    %v1992 = vunpack.c.l.b16 %v457
    %v1993 = vunpack.c.l.b16 %v458
    %v1994 = vunpack.c.h.b16 %v458
    %v1995 = vunpack.c.l.b16 %v459
    %v1996 = vunpack.c.h.b16 %v459
    %v1997 = vunpack.c.l.b16 %v460
    %v1998 = vunpack.c.h.b16 %v460
    %v1999 = vunpack.c.l.b16 %v461
    %v2000 = vunpack.c.h.b16 %v461
    %v2001 = vunpack.c.l.b16 %v462
    %v2002 = vunpack.c.h.b16 %v462
    %v2003 = vunpack.c.l.b16 %v463
    %v2004 = vunpack.c.l.b16 %v464
    %v2005 = vunpack.c.h.b16 %v464
    %v2006 = vunpack.c.l.b16 %v465
    %v2007 = vunpack.c.h.b16 %v465
    %v2008 = vunpack.c.l.b16 %v466
    %v2009 = vunpack.c.h.b16 %v466
    %v2010 = vunpack.c.l.b16 %v467
    %v2011 = vunpack.c.h.b16 %v467
    %v2012 = vunpack.c.l.b16 %v468
    %v2013 = vunpack.c.h.b16 %v468
    %v2014 = vunpack.c.l.b16 %v469
    %v2015 = vunpack.c.l.b16 %v470
    %v2016 = vunpack.c.h.b16 %v470
    %v2017 = vunpack.c.l.b16 %v471
    %v2018 = vunpack.c.h.b16 %v471
    %v2019 = vunpack.c.l.b16 %v472
    %v2020 = vunpack.c.h.b16 %v472
    %v2021 = vunpack.c.l.b16 %v473
    %v2022 = vunpack.c.h.b16 %v473
    %v2023 = vunpack.c.l.b16 %v474
    %v2024 = vunpack.c.h.b16 %v474
    %v2025 = vunpack.c.l.b16 %v475
    %v2026 = vunpack.c.l.b16 %v476
    %v2027 = vunpack.c.h.b16 %v476
    %v2028 = vunpack.c.l.b16 %v477
    %v2029 = vunpack.c.h.b16 %v477
    %v2030 = vunpack.c.l.b16 %v478
    %v2031 = vunpack.c.h.b16 %v478
    %v2032 = vunpack.c.l.b16 %v479
    %v2033 = vunpack.c.h.b16 %v479
    %v2034 = vunpack.c.l.b16 %v480
    %v2035 = vunpack.c.h.b16 %v480
    %v2036 = vunpack.c.l.b16 %v481
    %v2037 = vunpack.c.l.b16 %v482
    %v2038 = vunpack.c.h.b16 %v482
    %v2039 = vunpack.c.l.b16 %v483
    %v2040 = vunpack.c.h.b16 %v483
    %v2041 = vunpack.c.l.b16 %v484
    %v2042 = vunpack.c.h.b16 %v484
    %v2043 = vunpack.c.l.b16 %v485
    %v2044 = vunpack.c.h.b16 %v485
    %v2045 = vunpack.c.l.b16 %v486
    %v2046 = vunpack.c.h.b16 %v486
    %v2047 = vunpack.c.l.b16 %v487
    %v2048 = vunpack.c.l.b16 %v488
    %v2049 = vunpack.c.h.b16 %v488
    %v2050 = vunpack.c.l.b16 %v489
    %v2051 = vunpack.c.h.b16 %v489
    %v2052 = vunpack.c.l.b16 %v490
    %v2053 = vunpack.c.h.b16 %v490
    %v2054 = vunpack.c.l.b16 %v491
    %v2055 = vunpack.c.h.b16 %v491
    %v2056 = vunpack.c.l.b16 %v492
    %v2057 = vunpack.c.h.b16 %v492
    %v2058 = vunpack.c.l.b16 %v493
    %v2059 = vunpack.c.l.b16 %v494
    %v2060 = vunpack.c.h.b16 %v494
    %v2061 = vunpack.c.l.b16 %v495
    %v2062 = vunpack.c.h.b16 %v495
    %v2063 = vunpack.c.l.b16 %v496
    %v2064 = vunpack.c.h.b16 %v496
    %v2065 = vunpack.c.l.b16 %v497
    %v2066 = vunpack.c.h.b16 %v497
    %v2067 = vunpack.c.l.b16 %v498
    %v2068 = vunpack.c.h.b16 %v498
    %v2069 = vunpack.c.l.b16 %v499
    %v2070 = vunpack.c.l.b16 %v500
    %v2071 = vunpack.c.h.b16 %v500
    %v2072 = vunpack.c.l.b16 %v501
    %v2073 = vunpack.c.h.b16 %v501
    %v2074 = vunpack.c.l.b16 %v502
    %v2075 = vunpack.c.h.b16 %v502
    %v2076 = vunpack.c.l.b16 %v503
    %v2077 = vunpack.c.h.b16 %v503
    %v2078 = vunpack.c.l.b16 %v504
    %v2079 = vunpack.c.h.b16 %v504
    %v2080 = vunpack.c.l.b16 %v505
    %v2081 = vunpack.c.l.b16 %v506
    %v2082 = vunpack.c.h.b16 %v506
    %v2083 = vunpack.c.l.b16 %v507
    %v2084 = vunpack.c.h.b16 %v507
    %v2085 = vunpack.c.l.b16 %v508
    %v2086 = vunpack.c.h.b16 %v508
    %v2087 = vunpack.c.l.b16 %v509
    %v2088 = vunpack.c.h.b16 %v509
    %v2089 = vunpack.c.l.b16 %v510
    %v2090 = vunpack.c.h.b16 %v510
    %v2091 = vunpack.c.l.b16 %v511
    %v2092 = vunpack.c.l.b16 %v512
    %v2093 = vunpack.c.h.b16 %v512
    %v2094 = vunpack.c.l.b16 %v513
    %v2095 = vunpack.c.h.b16 %v513
    %v2096 = vunpack.c.l.b16 %v514
    %v2097 = vunpack.c.h.b16 %v514
    %v2098 = vunpack.c.l.b16 %v515
    %v2099 = vunpack.c.h.b16 %v515
    %v2100 = vunpack.c.l.b16 %v516
    %v2101 = vunpack.c.h.b16 %v516
    %v2102 = vunpack.c.l.b16 %v517
    %v2103 = vunpack.c.l.b16 %v518
    %v2104 = vunpack.c.h.b16 %v518
    %v2105 = vunpack.c.l.b16 %v519
    %v2106 = vunpack.c.h.b16 %v519
    %v2107 = vunpack.c.l.b16 %v520
    %v2108 = vunpack.c.h.b16 %v520
    %v2109 = vunpack.c.l.b16 %v521
    %v2110 = vunpack.c.h.b16 %v521
    %v2111 = vunpack.c.l.b16 %v522
    %v2112 = vunpack.c.h.b16 %v522
    %v2113 = vunpack.c.l.b16 %v523
    %v2114 = vunpack.c.l.b16 %v524
    %v2115 = vunpack.c.h.b16 %v524
    %v2116 = vunpack.c.l.b16 %v525
    %v2117 = vunpack.c.h.b16 %v525
    %v2118 = vunpack.c.l.b16 %v526
    %v2119 = vunpack.c.h.b16 %v526
    %v2120 = vunpack.c.l.b16 %v527
    %v2121 = vunpack.c.h.b16 %v527
    %v2122 = vunpack.c.l.b16 %v528
    %v2123 = vunpack.c.h.b16 %v528
    %v2124 = vunpack.c.l.b16 %v529
    %v2125 = vunpack.c.l.b16 %v530
    %v2126 = vunpack.c.h.b16 %v530
    %v2127 = vunpack.c.l.b16 %v531
    %v2128 = vunpack.c.h.b16 %v531
    %v2129 = vunpack.c.l.b16 %v532
    %v2130 = vunpack.c.h.b16 %v532
    %v2131 = vunpack.c.l.b16 %v533
    %v2132 = vunpack.c.h.b16 %v533
    %v2133 = vunpack.c.l.b16 %v534
    %v2134 = vunpack.c.h.b16 %v534
    %v2135 = vunpack.c.l.b16 %v535
    %v2136 = vunpack.c.l.b16 %v536
    %v2137 = vunpack.c.h.b16 %v536
    %v2138 = vunpack.c.l.b16 %v537
    %v2139 = vunpack.c.h.b16 %v537
    %v2140 = vunpack.c.l.b16 %v538
    %v2141 = vunpack.c.h.b16 %v538
    %v2142 = vunpack.c.l.b16 %v539
    %v2143 = vunpack.c.h.b16 %v539
    %v2144 = vunpack.c.l.b16 %v540
    %v2145 = vunpack.c.h.b16 %v540
    %v2146 = vunpack.c.l.b16 %v541
    %v2147 = vunpack.c.l.b16 %v542
    %v2148 = vunpack.c.h.b16 %v542
    %v2149 = vunpack.c.l.b16 %v543
    %v2150 = vunpack.c.h.b16 %v543
    %v2151 = vunpack.c.l.b16 %v544
    %v2152 = vunpack.c.h.b16 %v544
    %v2153 = vunpack.c.l.b16 %v545
    %v2154 = vunpack.c.h.b16 %v545
    %v2155 = vunpack.c.l.b16 %v546
    %v2156 = vunpack.c.h.b16 %v546
    %v2157 = vunpack.c.l.b16 %v547
    %v2158 = vunpack.c.l.b16 %v548
    %v2159 = vunpack.c.h.b16 %v548
    %v2160 = vunpack.c.l.b16 %v549
    %v2161 = vunpack.c.h.b16 %v549
    %v2162 = vunpack.c.l.b16 %v550
    %v2163 = vunpack.c.h.b16 %v550
    %v2164 = vunpack.c.l.b16 %v551
    %v2165 = vunpack.c.h.b16 %v551
    %v2166 = vunpack.c.l.b16 %v552
    %v2167 = vunpack.c.h.b16 %v552
    %v2168 = vunpack.c.l.b16 %v553
    %v2169 = vunpack.c.l.b16 %v554
    %v2170 = vunpack.c.h.b16 %v554
    %v2171 = vunpack.c.l.b16 %v555
    %v2172 = vunpack.c.h.b16 %v555
    %v2173 = vunpack.c.l.b16 %v556
    %v2174 = vunpack.c.h.b16 %v556
    %v2175 = vunpack.c.l.b16 %v557
    %v2176 = vunpack.c.h.b16 %v557
    %v2177 = vunpack.c.l.b16 %v558
    %v2178 = vunpack.c.h.b16 %v558
    %v2179 = vunpack.c.l.b16 %v559
    %v2180 = vunpack.c.l.b16 %v560
    %v2181 = vunpack.c.h.b16 %v560
    %v2182 = vunpack.c.l.b16 %v561
    %v2183 = vunpack.c.h.b16 %v561
    %v2184 = vunpack.c.l.b16 %v562
    %v2185 = vunpack.c.h.b16 %v562
    %v2186 = vunpack.c.l.b16 %v563
    %v2187 = vunpack.c.h.b16 %v563
    %v2188 = vunpack.c.l.b16 %v564
    %v2189 = vunpack.c.h.b16 %v564
    %v2190 = vunpack.c.l.b16 %v565
    %v2191 = vunpack.c.l.b16 %v566
    %v2192 = vunpack.c.h.b16 %v566
    %v2193 = vunpack.c.l.b16 %v567
    %v2194 = vunpack.c.h.b16 %v567
    %v2195 = vunpack.c.l.b16 %v568
    %v2196 = vunpack.c.h.b16 %v568
    %v2197 = vunpack.c.l.b16 %v569
    %v2198 = vunpack.c.h.b16 %v569
    %v2199 = vunpack.c.l.b16 %v570
    %v2200 = vunpack.c.h.b16 %v570
    %v2201 = vunpack.c.l.b16 %v571
    %v2202 = vunpack.c.l.b16 %v572
    %v2203 = vunpack.c.h.b16 %v572
    %v2204 = vunpack.c.l.b16 %v573
    %v2205 = vunpack.c.h.b16 %v573
    %v2206 = vunpack.c.l.b16 %v574
    %v2207 = vunpack.c.h.b16 %v574
    %v2208 = vunpack.c.l.b16 %v575
    %v2209 = vunpack.c.h.b16 %v575
    %v2210 = vunpack.c.l.b16 %v576
    %v2211 = vunpack.c.h.b16 %v576
    %v2212 = vunpack.c.l.b16 %v577
    %v2213 = vunpack.c.l.b16 %v578
    %v2214 = vunpack.c.h.b16 %v578
    %v2215 = vunpack.c.l.b16 %v579
    %v2216 = vunpack.c.h.b16 %v579
    %v2217 = vunpack.c.l.b16 %v580
    %v2218 = vunpack.c.h.b16 %v580
    %v2219 = vunpack.c.l.b16 %v581
    %v2220 = vunpack.c.h.b16 %v581
    %v2221 = vunpack.c.l.b16 %v582
    %v2222 = vunpack.c.h.b16 %v582
    %v2223 = vunpack.c.l.b16 %v583
    %v2224 = vunpack.c.l.b16 %v584
    %v2225 = vunpack.c.h.b16 %v584
    %v2226 = vunpack.c.l.b16 %v585
    %v2227 = vunpack.c.h.b16 %v585
    %v2228 = vunpack.c.l.b16 %v586
    %v2229 = vunpack.c.h.b16 %v586
    %v2230 = vunpack.c.l.b16 %v587
    %v2231 = vunpack.c.h.b16 %v587
    %v2232 = vunpack.c.l.b16 %v588
    %v2233 = vunpack.c.h.b16 %v588
    %v2234 = vunpack.c.l.b16 %v589
    %v2235 = vunpack.c.l.b16 %v590
    %v2236 = vunpack.c.h.b16 %v590
    %v2237 = vunpack.c.l.b16 %v591
    %v2238 = vunpack.c.h.b16 %v591
    %v2239 = vunpack.c.l.b16 %v592
    %v2240 = vunpack.c.h.b16 %v592
    %v2241 = vunpack.c.l.b16 %v593
    %v2242 = vunpack.c.h.b16 %v593
    %v2243 = vunpack.c.l.b16 %v594
    %v2244 = vunpack.c.h.b16 %v594
    %v2245 = vunpack.c.l.b16 %v595
    %v2246 = vunpack.c.l.b16 %v596
    %v2247 = vunpack.c.h.b16 %v596
    %v2248 = vunpack.c.l.b16 %v597
    %v2249 = vunpack.c.h.b16 %v597
    %v2250 = vunpack.c.l.b16 %v598
    %v2251 = vunpack.c.h.b16 %v598
    %v2252 = vunpack.c.l.b16 %v599
    %v2253 = vunpack.c.h.b16 %v599
    %v2254 = vunpack.c.l.b16 %v600
    %v2255 = vunpack.c.h.b16 %v600
    %v2256 = vunpack.c.l.b16 %v601
    %v2257 = vunpack.c.l.b16 %v602
    %v2258 = vunpack.c.h.b16 %v602
    %v2259 = vunpack.c.l.b16 %v603
    %v2260 = vunpack.c.h.b16 %v603
    %v2261 = vunpack.c.l.b16 %v604
    %v2262 = vunpack.c.h.b16 %v604
    %v2263 = vunpack.c.l.b16 %v605
    %v2264 = vunpack.c.h.b16 %v605
    %v2265 = vunpack.c.l.b16 %v606
    %v2266 = vunpack.c.h.b16 %v606
    %v2267 = vunpack.c.l.b16 %v607
    %v2268 = vunpack.c.l.b16 %v608
    %v2269 = vunpack.c.h.b16 %v608
    %v2270 = vunpack.c.l.b16 %v609
    %v2271 = vunpack.c.h.b16 %v609
    %v2272 = vunpack.c.l.b16 %v610
    %v2273 = vunpack.c.h.b16 %v610
    %v2274 = vunpack.c.l.b16 %v611
    %v2275 = vunpack.c.h.b16 %v611
    %v2276 = vunpack.c.l.b16 %v612
    %v2277 = vunpack.c.h.b16 %v612
    %v2278 = vunpack.c.l.b16 %v613
    %v2279 = vunpack.c.l.b16 %v614
    %v2280 = vunpack.c.h.b16 %v614
    %v2281 = vunpack.c.l.b16 %v615
    %v2282 = vunpack.c.h.b16 %v615
    %v2283 = vunpack.c.l.b16 %v616
    %v2284 = vunpack.c.h.b16 %v616
    %v2285 = vunpack.c.l.b16 %v617
    %v2286 = vunpack.c.h.b16 %v617
    %v2287 = vunpack.c.l.b16 %v618
    %v2288 = vunpack.c.h.b16 %v618
    %v2289 = vunpack.c.l.b16 %v619
    %v2290 = vunpack.c.l.b16 %v620
    %v2291 = vunpack.c.h.b16 %v620
    %v2292 = vunpack.c.l.b16 %v621
    %v2293 = vunpack.c.h.b16 %v621
    %v2294 = vunpack.c.l.b16 %v622
    %v2295 = vunpack.c.h.b16 %v622
    %v2296 = vunpack.c.l.b16 %v623
    %v2297 = vunpack.c.h.b16 %v623
    %v2298 = vunpack.c.l.b16 %v624
    %v2299 = vunpack.c.h.b16 %v624
    %v2300 = vunpack.c.l.b16 %v625
    %v2301 = vunpack.c.l.b16 %v626
    %v2302 = vunpack.c.h.b16 %v626
    %v2303 = vunpack.c.l.b16 %v627
    %v2304 = vunpack.c.h.b16 %v627
    %v2305 = vunpack.c.l.b16 %v628
    %v2306 = vunpack.c.h.b16 %v628
    %v2307 = vunpack.c.l.b16 %v629
    %v2308 = vunpack.c.h.b16 %v629
    %v2309 = vunpack.c.l.b16 %v630
    %v2310 = vunpack.c.h.b16 %v630
    %v2311 = vunpack.c.l.b16 %v631
    %v2312 = vunpack.c.l.b16 %v632
    %v2313 = vunpack.c.h.b16 %v632
    %v2314 = vunpack.c.l.b16 %v633
    %v2315 = vunpack.c.h.b16 %v633
    %v2316 = vunpack.c.l.b16 %v634
    %v2317 = vunpack.c.h.b16 %v634
    %v2318 = vunpack.c.l.b16 %v635
    %v2319 = vunpack.c.h.b16 %v635
    %v2320 = vunpack.c.l.b16 %v636
    %v2321 = vunpack.c.h.b16 %v636
    %v2322 = vunpack.c.l.b16 %v637
    %v2323 = vunpack.c.l.b16 %v638
    %v2324 = vunpack.c.h.b16 %v638
    %v2325 = vunpack.c.l.b16 %v639
    %v2326 = vunpack.c.h.b16 %v639
    %v2327 = vunpack.c.l.b16 %v640
    %v2328 = vunpack.c.h.b16 %v640
    %v2329 = vunpack.c.l.b16 %v641
    %v2330 = vunpack.c.h.b16 %v641
    %v2331 = vunpack.c.l.b16 %v642
    %v2332 = vunpack.c.h.b16 %v642
    %v2333 = vunpack.c.l.b16 %v643
    %v2334 = vunpack.c.l.b16 %v644
    %v2335 = vunpack.c.h.b16 %v644
    %v2336 = vunpack.c.l.b16 %v645
    %v2337 = vunpack.c.h.b16 %v645
    %v2338 = vunpack.c.l.b16 %v646
    %v2339 = vunpack.c.h.b16 %v646
    %v2340 = vunpack.c.l.b16 %v647
    %v2341 = vunpack.c.h.b16 %v647
    %v2342 = vunpack.c.l.b16 %v648
    %v2343 = vunpack.c.h.b16 %v648
    %v2344 = vunpack.c.l.b16 %v649
    %v2345 = vunpack.c.l.b16 %v650
    %v2346 = vunpack.c.h.b16 %v650
    %v2347 = vunpack.c.l.b16 %v651
    %v2348 = vunpack.c.h.b16 %v651
    %v2349 = vunpack.c.l.b16 %v652
    %v2350 = vunpack.c.h.b16 %v652
    %v2351 = vunpack.c.l.b16 %v653
    %v2352 = vunpack.c.h.b16 %v653
    %v2353 = vunpack.c.l.b16 %v654
    %v2354 = vunpack.c.h.b16 %v654
    %v2355 = vunpack.c.l.b16 %v655
    %v2356 = vunpack.c.l.b16 %v656
    %v2357 = vunpack.c.h.b16 %v656
    %v2358 = vunpack.c.l.b16 %v657
    %v2359 = vunpack.c.h.b16 %v657
    %v2360 = vunpack.c.l.b16 %v658
    %v2361 = vunpack.c.h.b16 %v658
    %v2362 = vunpack.c.l.b16 %v659
    %v2363 = vunpack.c.h.b16 %v659
    %v2364 = vunpack.c.l.b16 %v660
    %v2365 = vunpack.c.h.b16 %v660
    %v2366 = vunpack.c.l.b16 %v661
    %v2367 = vunpack.c.l.b16 %v662
    %v2368 = vunpack.c.h.b16 %v662
    %v2369 = vunpack.c.l.b16 %v663
    %v2370 = vunpack.c.h.b16 %v663
    %v2371 = vunpack.c.l.b16 %v664
    %v2372 = vunpack.c.h.b16 %v664
    %v2373 = vunpack.c.l.b16 %v665
    %v2374 = vunpack.c.h.b16 %v665
    %v2375 = vunpack.c.l.b16 %v666
    %v2376 = vunpack.c.h.b16 %v666
    %v2377 = vunpack.c.l.b16 %v667
    %v2378 = vunpack.c.l.b16 %v668
    %v2379 = vunpack.c.h.b16 %v668
    %v2380 = vunpack.c.l.b16 %v669
    %v2381 = vunpack.c.h.b16 %v669
    %v2382 = vunpack.c.l.b16 %v670
    %v2383 = vunpack.c.h.b16 %v670
    %v2384 = vunpack.c.l.b16 %v671
    %v2385 = vunpack.c.h.b16 %v671
    %v2386 = vunpack.c.l.b16 %v672
    %v2387 = vunpack.c.h.b16 %v672
    %v2388 = vunpack.c.l.b16 %v673
    %v2389 = vunpack.c.l.b16 %v674
    %v2390 = vunpack.c.h.b16 %v674
    %v2391 = vunpack.c.l.b16 %v675
    %v2392 = vunpack.c.h.b16 %v675
    %v2393 = vunpack.c.l.b16 %v676
    %v2394 = vunpack.c.h.b16 %v676
    %v2395 = vunpack.c.l.b16 %v677
    %v2396 = vunpack.c.h.b16 %v677
    %v2397 = vunpack.c.l.b16 %v678
    %v2398 = vunpack.c.h.b16 %v678
    %v2399 = vunpack.c.l.b16 %v679
    %v2400 = vunpack.c.l.b16 %v680
    %v2401 = vunpack.c.h.b16 %v680
    %v2402 = vunpack.c.l.b16 %v681
    %v2403 = vunpack.c.h.b16 %v681
    %v2404 = vunpack.c.l.b16 %v682
    %v2405 = vunpack.c.h.b16 %v682
    %v2406 = vunpack.c.l.b16 %v683
    %v2407 = vunpack.c.h.b16 %v683
    %v2408 = vunpack.c.l.b16 %v684
    %v2409 = vunpack.c.h.b16 %v684
    %v2410 = vunpack.c.l.b16 %v685
    %v2411 = vpack.c.b16 %v1344, %v1333
    %v2412 = vpack.c.b16 %v1345, %v1334
    %v2413 = vpack.c.b16 %v1346, %v1335
    %v2414 = vpack.c.b16 %v1347, %v1336
    %v2415 = vpack.c.b16 %v1348, %v1337
    %v2416 = vpack.c.b16 %v1349, %v1338
    %v2417 = vpack.c.b16 %v1350, %v1339
    %v2418 = vpack.c.b16 %v1351, %v1340
    %v2419 = vpack.c.b16 %v1352, %v1341
    %v2420 = vpack.c.b16 %v1353, %v1342
    %v2421 = vpack.c.b16 %v1354, %v1343
    %v2422 = vpack.c.b16 %v1366, %v1355
    %v2423 = vpack.c.b16 %v1367, %v1356
    %v2424 = vpack.c.b16 %v1368, %v1357
    %v2425 = vpack.c.b16 %v1369, %v1358
    %v2426 = vpack.c.b16 %v1370, %v1359
    %v2427 = vpack.c.b16 %v1371, %v1360
    %v2428 = vpack.c.b16 %v1372, %v1361
    %v2429 = vpack.c.b16 %v1373, %v1362
    %v2430 = vpack.c.b16 %v1374, %v1363
    %v2431 = vpack.c.b16 %v1375, %v1364
    %v2432 = vpack.c.b16 %v1376, %v1365
    %v2433 = vpack.c.b16 %v1388, %v1377
    %v2434 = vpack.c.b16 %v1389, %v1378
    %v2435 = vpack.c.b16 %v1390, %v1379
    %v2436 = vpack.c.b16 %v1391, %v1380
    %v2437 = vpack.c.b16 %v1392, %v1381
    %v2438 = vpack.c.b16 %v1393, %v1382
    %v2439 = vpack.c.b16 %v1394, %v1383
    %v2440 = vpack.c.b16 %v1395, %v1384
    %v2441 = vpack.c.b16 %v1396, %v1385
    %v2442 = vpack.c.b16 %v1397, %v1386
    %v2443 = vpack.c.b16 %v1398, %v1387
    %v2444 = vpack.c.b16 %v1410, %v1399
    %v2445 = vpack.c.b16 %v1411, %v1400
    %v2446 = vpack.c.b16 %v1412, %v1401
    %v2447 = vpack.c.b16 %v1413, %v1402
    %v2448 = vpack.c.b16 %v1414, %v1403
    %v2449 = vpack.c.b16 %v1415, %v1404
    %v2450 = vpack.c.b16 %v1416, %v1405
    %v2451 = vpack.c.b16 %v1417, %v1406
    %v2452 = vpack.c.b16 %v1418, %v1407
    %v2453 = vpack.c.b16 %v1419, %v1408
    %v2454 = vpack.c.b16 %v1420, %v1409
    %v2455 = vpack.c.b16 %v1432, %v1421
    %v2456 = vpack.c.b16 %v1433, %v1422
    %v2457 = vpack.c.b16 %v1434, %v1423
    %v2458 = vpack.c.b16 %v1435, %v1424
    %v2459 = vpack.c.b16 %v1436, %v1425
    %v2460 = vpack.c.b16 %v1437, %v1426
    %v2461 = vpack.c.b16 %v1438, %v1427
    %v2462 = vpack.c.b16 %v1439, %v1428
    %v2463 = vpack.c.b16 %v1440, %v1429
    %v2464 = vpack.c.b16 %v1441, %v1430
    %v2465 = vpack.c.b16 %v1442, %v1431
    %v2466 = vpack.c.b16 %v1454, %v1443
    %v2467 = vpack.c.b16 %v1455, %v1444
    %v2468 = vpack.c.b16 %v1456, %v1445
    %v2469 = vpack.c.b16 %v1457, %v1446
    %v2470 = vpack.c.b16 %v1458, %v1447
    %v2471 = vpack.c.b16 %v1459, %v1448
    %v2472 = vpack.c.b16 %v1460, %v1449
    %v2473 = vpack.c.b16 %v1461, %v1450
    %v2474 = vpack.c.b16 %v1462, %v1451
    %v2475 = vpack.c.b16 %v1463, %v1452
    %v2476 = vpack.c.b16 %v1464, %v1453
    %v2477 = vpack.c.b16 %v1476, %v1465
    %v2478 = vpack.c.b16 %v1477, %v1466
    %v2479 = vpack.c.b16 %v1478, %v1467
    %v2480 = vpack.c.b16 %v1479, %v1468
    %v2481 = vpack.c.b16 %v1480, %v1469
    %v2482 = vpack.c.b16 %v1481, %v1470
    %v2483 = vpack.c.b16 %v1482, %v1471
    %v2484 = vpack.c.b16 %v1483, %v1472
    %v2485 = vpack.c.b16 %v1484, %v1473
    %v2486 = vpack.c.b16 %v1485, %v1474
    %v2487 = vpack.c.b16 %v1486, %v1475
    %v2488 = vpack.c.b16 %v1498, %v1487
    %v2489 = vpack.c.b16 %v1499, %v1488
    %v2490 = vpack.c.b16 %v1500, %v1489
    %v2491 = vpack.c.b16 %v1501, %v1490
    %v2492 = vpack.c.b16 %v1502, %v1491
    %v2493 = vpack.c.b16 %v1503, %v1492
    %v2494 = vpack.c.b16 %v1504, %v1493
    %v2495 = vpack.c.b16 %v1505, %v1494
    %v2496 = vpack.c.b16 %v1506, %v1495
    %v2497 = vpack.c.b16 %v1507, %v1496
    %v2498 = vpack.c.b16 %v1508, %v1497
    %v2499 = vpack.c.b16 %v1520, %v1509
    %v2500 = vpack.c.b16 %v1521, %v1510
    %v2501 = vpack.c.b16 %v1522, %v1511
    %v2502 = vpack.c.b16 %v1523, %v1512
    %v2503 = vpack.c.b16 %v1524, %v1513
    %v2504 = vpack.c.b16 %v1525, %v1514
    %v2505 = vpack.c.b16 %v1526, %v1515
    %v2506 = vpack.c.b16 %v1527, %v1516
    %v2507 = vpack.c.b16 %v1528, %v1517
    %v2508 = vpack.c.b16 %v1529, %v1518
    %v2509 = vpack.c.b16 %v1530, %v1519
    %v2510 = vpack.c.b16 %v1542, %v1531
    %v2511 = vpack.c.b16 %v1543, %v1532
    %v2512 = vpack.c.b16 %v1544, %v1533
    %v2513 = vpack.c.b16 %v1545, %v1534
    %v2514 = vpack.c.b16 %v1546, %v1535
    %v2515 = vpack.c.b16 %v1547, %v1536
    %v2516 = vpack.c.b16 %v1548, %v1537
    %v2517 = vpack.c.b16 %v1549, %v1538
    %v2518 = vpack.c.b16 %v1550, %v1539
    %v2519 = vpack.c.b16 %v1551, %v1540
    %v2520 = vpack.c.b16 %v1552, %v1541
    %v2521 = vpack.c.b16 %v1564, %v1553
    %v2522 = vpack.c.b16 %v1565, %v1554
    %v2523 = vpack.c.b16 %v1566, %v1555
    %v2524 = vpack.c.b16 %v1567, %v1556
    %v2525 = vpack.c.b16 %v1568, %v1557
    %v2526 = vpack.c.b16 %v1569, %v1558
    %v2527 = vpack.c.b16 %v1570, %v1559
    %v2528 = vpack.c.b16 %v1571, %v1560
    %v2529 = vpack.c.b16 %v1572, %v1561
    %v2530 = vpack.c.b16 %v1573, %v1562
    %v2531 = vpack.c.b16 %v1574, %v1563
    %v2532 = vpack.c.b16 %v1586, %v1575
    %v2533 = vpack.c.b16 %v1587, %v1576
    %v2534 = vpack.c.b16 %v1588, %v1577
    %v2535 = vpack.c.b16 %v1589, %v1578
    %v2536 = vpack.c.b16 %v1590, %v1579
    %v2537 = vpack.c.b16 %v1591, %v1580
    %v2538 = vpack.c.b16 %v1592, %v1581
    %v2539 = vpack.c.b16 %v1593, %v1582
    %v2540 = vpack.c.b16 %v1594, %v1583
    %v2541 = vpack.c.b16 %v1595, %v1584
    %v2542 = vpack.c.b16 %v1596, %v1585
    %v2543 = vpack.c.b16 %v1608, %v1597
    %v2544 = vpack.c.b16 %v1609, %v1598
    %v2545 = vpack.c.b16 %v1610, %v1599
    %v2546 = vpack.c.b16 %v1611, %v1600
    %v2547 = vpack.c.b16 %v1612, %v1601
    %v2548 = vpack.c.b16 %v1613, %v1602
    %v2549 = vpack.c.b16 %v1614, %v1603
    %v2550 = vpack.c.b16 %v1615, %v1604
    %v2551 = vpack.c.b16 %v1616, %v1605
    %v2552 = vpack.c.b16 %v1617, %v1606
    %v2553 = vpack.c.b16 %v1618, %v1607
    %v2554 = vpack.c.b16 %v1630, %v1619
    %v2555 = vpack.c.b16 %v1631, %v1620
    %v2556 = vpack.c.b16 %v1632, %v1621
    %v2557 = vpack.c.b16 %v1633, %v1622
    %v2558 = vpack.c.b16 %v1634, %v1623
    %v2559 = vpack.c.b16 %v1635, %v1624
    %v2560 = vpack.c.b16 %v1636, %v1625
    %v2561 = vpack.c.b16 %v1637, %v1626
    %v2562 = vpack.c.b16 %v1638, %v1627
    %v2563 = vpack.c.b16 %v1639, %v1628
    %v2564 = vpack.c.b16 %v1640, %v1629
    %v2565 = vpack.c.b16 %v1652, %v1641
    %v2566 = vpack.c.b16 %v1653, %v1642
    %v2567 = vpack.c.b16 %v1654, %v1643
    %v2568 = vpack.c.b16 %v1655, %v1644
    %v2569 = vpack.c.b16 %v1656, %v1645
    %v2570 = vpack.c.b16 %v1657, %v1646
    %v2571 = vpack.c.b16 %v1658, %v1647
    %v2572 = vpack.c.b16 %v1659, %v1648
    %v2573 = vpack.c.b16 %v1660, %v1649
    %v2574 = vpack.c.b16 %v1661, %v1650
    %v2575 = vpack.c.b16 %v1662, %v1651
    %v2576 = vpack.c.b16 %v1674, %v1663
    %v2577 = vpack.c.b16 %v1675, %v1664
    %v2578 = vpack.c.b16 %v1676, %v1665
    %v2579 = vpack.c.b16 %v1677, %v1666
    %v2580 = vpack.c.b16 %v1678, %v1667
    %v2581 = vpack.c.b16 %v1679, %v1668
    %v2582 = vpack.c.b16 %v1680, %v1669
    %v2583 = vpack.c.b16 %v1681, %v1670
    %v2584 = vpack.c.b16 %v1682, %v1671
    %v2585 = vpack.c.b16 %v1683, %v1672
    %v2586 = vpack.c.b16 %v1684, %v1673
    %v2587 = vpack.c.b16 %v1696, %v1685
    %v2588 = vpack.c.b16 %v1697, %v1686
    %v2589 = vpack.c.b16 %v1698, %v1687
    %v2590 = vpack.c.b16 %v1699, %v1688
    %v2591 = vpack.c.b16 %v1700, %v1689
    %v2592 = vpack.c.b16 %v1701, %v1690
    %v2593 = vpack.c.b16 %v1702, %v1691
    %v2594 = vpack.c.b16 %v1703, %v1692
    %v2595 = vpack.c.b16 %v1704, %v1693
    %v2596 = vpack.c.b16 %v1705, %v1694
    %v2597 = vpack.c.b16 %v1706, %v1695
    %v2598 = vpack.c.b16 %v1718, %v1707
    %v2599 = vpack.c.b16 %v1719, %v1708
    %v2600 = vpack.c.b16 %v1720, %v1709
    %v2601 = vpack.c.b16 %v1721, %v1710
    %v2602 = vpack.c.b16 %v1722, %v1711
    %v2603 = vpack.c.b16 %v1723, %v1712
    %v2604 = vpack.c.b16 %v1724, %v1713
    %v2605 = vpack.c.b16 %v1725, %v1714
    %v2606 = vpack.c.b16 %v1726, %v1715
    %v2607 = vpack.c.b16 %v1727, %v1716
    %v2608 = vpack.c.b16 %v1728, %v1717
    %v2609 = vpack.c.b16 %v1740, %v1729
    %v2610 = vpack.c.b16 %v1741, %v1730
    %v2611 = vpack.c.b16 %v1742, %v1731
    %v2612 = vpack.c.b16 %v1743, %v1732
    %v2613 = vpack.c.b16 %v1744, %v1733
    %v2614 = vpack.c.b16 %v1745, %v1734
    %v2615 = vpack.c.b16 %v1746, %v1735
    %v2616 = vpack.c.b16 %v1747, %v1736
    %v2617 = vpack.c.b16 %v1748, %v1737
    %v2618 = vpack.c.b16 %v1749, %v1738
    %v2619 = vpack.c.b16 %v1750, %v1739
    %v2620 = vpack.c.b16 %v1762, %v1751
    %v2621 = vpack.c.b16 %v1763, %v1752
    %v2622 = vpack.c.b16 %v1764, %v1753
    %v2623 = vpack.c.b16 %v1765, %v1754
    %v2624 = vpack.c.b16 %v1766, %v1755
    %v2625 = vpack.c.b16 %v1767, %v1756
    %v2626 = vpack.c.b16 %v1768, %v1757
    %v2627 = vpack.c.b16 %v1769, %v1758
    %v2628 = vpack.c.b16 %v1770, %v1759
    %v2629 = vpack.c.b16 %v1771, %v1760
    %v2630 = vpack.c.b16 %v1772, %v1761
    %v2631 = vpack.c.b16 %v1784, %v1773
    %v2632 = vpack.c.b16 %v1785, %v1774
    %v2633 = vpack.c.b16 %v1786, %v1775
    %v2634 = vpack.c.b16 %v1787, %v1776
    %v2635 = vpack.c.b16 %v1788, %v1777
    %v2636 = vpack.c.b16 %v1789, %v1778
    %v2637 = vpack.c.b16 %v1790, %v1779
    %v2638 = vpack.c.b16 %v1791, %v1780
    %v2639 = vpack.c.b16 %v1792, %v1781
    %v2640 = vpack.c.b16 %v1793, %v1782
    %v2641 = vpack.c.b16 %v1794, %v1783
    %v2642 = vpack.c.b16 %v1806, %v1795
    %v2643 = vpack.c.b16 %v1807, %v1796
    %v2644 = vpack.c.b16 %v1808, %v1797
    %v2645 = vpack.c.b16 %v1809, %v1798
    %v2646 = vpack.c.b16 %v1810, %v1799
    %v2647 = vpack.c.b16 %v1811, %v1800
    %v2648 = vpack.c.b16 %v1812, %v1801
    %v2649 = vpack.c.b16 %v1813, %v1802
    %v2650 = vpack.c.b16 %v1814, %v1803
    %v2651 = vpack.c.b16 %v1815, %v1804
    %v2652 = vpack.c.b16 %v1816, %v1805
    %v2653 = vpack.c.b16 %v1828, %v1817
    %v2654 = vpack.c.b16 %v1829, %v1818
    %v2655 = vpack.c.b16 %v1830, %v1819
    %v2656 = vpack.c.b16 %v1831, %v1820
    %v2657 = vpack.c.b16 %v1832, %v1821
    %v2658 = vpack.c.b16 %v1833, %v1822
    %v2659 = vpack.c.b16 %v1834, %v1823
    %v2660 = vpack.c.b16 %v1835, %v1824
    %v2661 = vpack.c.b16 %v1836, %v1825
    %v2662 = vpack.c.b16 %v1837, %v1826
    %v2663 = vpack.c.b16 %v1838, %v1827
    %v2664 = vpack.c.b16 %v1850, %v1839
    %v2665 = vpack.c.b16 %v1851, %v1840
    %v2666 = vpack.c.b16 %v1852, %v1841
    %v2667 = vpack.c.b16 %v1853, %v1842
    %v2668 = vpack.c.b16 %v1854, %v1843
    %v2669 = vpack.c.b16 %v1855, %v1844
    %v2670 = vpack.c.b16 %v1856, %v1845
    %v2671 = vpack.c.b16 %v1857, %v1846
    %v2672 = vpack.c.b16 %v1858, %v1847
    %v2673 = vpack.c.b16 %v1859, %v1848
    %v2674 = vpack.c.b16 %v1860, %v1849
    %v2675 = vpack.c.b16 %v1872, %v1861
    %v2676 = vpack.c.b16 %v1873, %v1862
    %v2677 = vpack.c.b16 %v1874, %v1863
    %v2678 = vpack.c.b16 %v1875, %v1864
    %v2679 = vpack.c.b16 %v1876, %v1865
    %v2680 = vpack.c.b16 %v1877, %v1866
    %v2681 = vpack.c.b16 %v1878, %v1867
    %v2682 = vpack.c.b16 %v1879, %v1868
    %v2683 = vpack.c.b16 %v1880, %v1869
    %v2684 = vpack.c.b16 %v1881, %v1870
    %v2685 = vpack.c.b16 %v1882, %v1871
    %v2686 = vpack.c.b16 %v1894, %v1883
    %v2687 = vpack.c.b16 %v1895, %v1884
    %v2688 = vpack.c.b16 %v1896, %v1885
    %v2689 = vpack.c.b16 %v1897, %v1886
    %v2690 = vpack.c.b16 %v1898, %v1887
    %v2691 = vpack.c.b16 %v1899, %v1888
    %v2692 = vpack.c.b16 %v1900, %v1889
    %v2693 = vpack.c.b16 %v1901, %v1890
    %v2694 = vpack.c.b16 %v1902, %v1891
    %v2695 = vpack.c.b16 %v1903, %v1892
    %v2696 = vpack.c.b16 %v1904, %v1893
    %v2697 = vpack.c.b16 %v1916, %v1905
    %v2698 = vpack.c.b16 %v1917, %v1906
    %v2699 = vpack.c.b16 %v1918, %v1907
    %v2700 = vpack.c.b16 %v1919, %v1908
    %v2701 = vpack.c.b16 %v1920, %v1909
    %v2702 = vpack.c.b16 %v1921, %v1910
    %v2703 = vpack.c.b16 %v1922, %v1911
    %v2704 = vpack.c.b16 %v1923, %v1912
    %v2705 = vpack.c.b16 %v1924, %v1913
    %v2706 = vpack.c.b16 %v1925, %v1914
    %v2707 = vpack.c.b16 %v1926, %v1915
    %v2708 = vpack.c.b16 %v1938, %v1927
    %v2709 = vpack.c.b16 %v1939, %v1928
    %v2710 = vpack.c.b16 %v1940, %v1929
    %v2711 = vpack.c.b16 %v1941, %v1930
    %v2712 = vpack.c.b16 %v1942, %v1931
    %v2713 = vpack.c.b16 %v1943, %v1932
    %v2714 = vpack.c.b16 %v1944, %v1933
    %v2715 = vpack.c.b16 %v1945, %v1934
    %v2716 = vpack.c.b16 %v1946, %v1935
    %v2717 = vpack.c.b16 %v1947, %v1936
    %v2718 = vpack.c.b16 %v1948, %v1937
    %v2719 = vpack.c.b16 %v1960, %v1949
    %v2720 = vpack.c.b16 %v1961, %v1950
    %v2721 = vpack.c.b16 %v1962, %v1951
    %v2722 = vpack.c.b16 %v1963, %v1952
    %v2723 = vpack.c.b16 %v1964, %v1953
    %v2724 = vpack.c.b16 %v1965, %v1954
    %v2725 = vpack.c.b16 %v1966, %v1955
    %v2726 = vpack.c.b16 %v1967, %v1956
    %v2727 = vpack.c.b16 %v1968, %v1957
    %v2728 = vpack.c.b16 %v1969, %v1958
    %v2729 = vpack.c.b16 %v1970, %v1959
    %v2730 = vpack.c.b16 %v1982, %v1971
    %v2731 = vpack.c.b16 %v1983, %v1972
    %v2732 = vpack.c.b16 %v1984, %v1973
    %v2733 = vpack.c.b16 %v1985, %v1974
    %v2734 = vpack.c.b16 %v1986, %v1975
    %v2735 = vpack.c.b16 %v1987, %v1976
    %v2736 = vpack.c.b16 %v1988, %v1977
    %v2737 = vpack.c.b16 %v1989, %v1978
    %v2738 = vpack.c.b16 %v1990, %v1979
    %v2739 = vpack.c.b16 %v1991, %v1980
    %v2740 = vpack.c.b16 %v1992, %v1981
    %v2741 = vpack.c.b16 %v2004, %v1993
    %v2742 = vpack.c.b16 %v2005, %v1994
    %v2743 = vpack.c.b16 %v2006, %v1995
    %v2744 = vpack.c.b16 %v2007, %v1996
    %v2745 = vpack.c.b16 %v2008, %v1997
    %v2746 = vpack.c.b16 %v2009, %v1998
    %v2747 = vpack.c.b16 %v2010, %v1999
    %v2748 = vpack.c.b16 %v2011, %v2000
    %v2749 = vpack.c.b16 %v2012, %v2001
    %v2750 = vpack.c.b16 %v2013, %v2002
    %v2751 = vpack.c.b16 %v2014, %v2003
    %v2752 = vpack.c.b16 %v2026, %v2015
    %v2753 = vpack.c.b16 %v2027, %v2016
    %v2754 = vpack.c.b16 %v2028, %v2017
    %v2755 = vpack.c.b16 %v2029, %v2018
    %v2756 = vpack.c.b16 %v2030, %v2019
    %v2757 = vpack.c.b16 %v2031, %v2020
    %v2758 = vpack.c.b16 %v2032, %v2021
    %v2759 = vpack.c.b16 %v2033, %v2022
    %v2760 = vpack.c.b16 %v2034, %v2023
    %v2761 = vpack.c.b16 %v2035, %v2024
    %v2762 = vpack.c.b16 %v2036, %v2025
    %v2763 = vpack.c.b16 %v2048, %v2037
    %v2764 = vpack.c.b16 %v2049, %v2038
    %v2765 = vpack.c.b16 %v2050, %v2039
    %v2766 = vpack.c.b16 %v2051, %v2040
    %v2767 = vpack.c.b16 %v2052, %v2041
    %v2768 = vpack.c.b16 %v2053, %v2042
    %v2769 = vpack.c.b16 %v2054, %v2043
    %v2770 = vpack.c.b16 %v2055, %v2044
    %v2771 = vpack.c.b16 %v2056, %v2045
    %v2772 = vpack.c.b16 %v2057, %v2046
    %v2773 = vpack.c.b16 %v2058, %v2047
    %v2774 = vpack.c.b16 %v2070, %v2059
    %v2775 = vpack.c.b16 %v2071, %v2060
    %v2776 = vpack.c.b16 %v2072, %v2061
    %v2777 = vpack.c.b16 %v2073, %v2062
    %v2778 = vpack.c.b16 %v2074, %v2063
    %v2779 = vpack.c.b16 %v2075, %v2064
    %v2780 = vpack.c.b16 %v2076, %v2065
    %v2781 = vpack.c.b16 %v2077, %v2066
    %v2782 = vpack.c.b16 %v2078, %v2067
    %v2783 = vpack.c.b16 %v2079, %v2068
    %v2784 = vpack.c.b16 %v2080, %v2069
    %v2785 = vpack.c.b16 %v2092, %v2081
    %v2786 = vpack.c.b16 %v2093, %v2082
    %v2787 = vpack.c.b16 %v2094, %v2083
    %v2788 = vpack.c.b16 %v2095, %v2084
    %v2789 = vpack.c.b16 %v2096, %v2085
    %v2790 = vpack.c.b16 %v2097, %v2086
    %v2791 = vpack.c.b16 %v2098, %v2087
    %v2792 = vpack.c.b16 %v2099, %v2088
    %v2793 = vpack.c.b16 %v2100, %v2089
    %v2794 = vpack.c.b16 %v2101, %v2090
    %v2795 = vpack.c.b16 %v2102, %v2091
    %v2796 = vpack.c.b16 %v2114, %v2103
    %v2797 = vpack.c.b16 %v2115, %v2104
    %v2798 = vpack.c.b16 %v2116, %v2105
    %v2799 = vpack.c.b16 %v2117, %v2106
    %v2800 = vpack.c.b16 %v2118, %v2107
    %v2801 = vpack.c.b16 %v2119, %v2108
    %v2802 = vpack.c.b16 %v2120, %v2109
    %v2803 = vpack.c.b16 %v2121, %v2110
    %v2804 = vpack.c.b16 %v2122, %v2111
    %v2805 = vpack.c.b16 %v2123, %v2112
    %v2806 = vpack.c.b16 %v2124, %v2113
    %v2807 = vpack.c.b16 %v2136, %v2125
    %v2808 = vpack.c.b16 %v2137, %v2126
    %v2809 = vpack.c.b16 %v2138, %v2127
    %v2810 = vpack.c.b16 %v2139, %v2128
    %v2811 = vpack.c.b16 %v2140, %v2129
    %v2812 = vpack.c.b16 %v2141, %v2130
    %v2813 = vpack.c.b16 %v2142, %v2131
    %v2814 = vpack.c.b16 %v2143, %v2132
    %v2815 = vpack.c.b16 %v2144, %v2133
    %v2816 = vpack.c.b16 %v2145, %v2134
    %v2817 = vpack.c.b16 %v2146, %v2135
    %v2818 = vpack.c.b16 %v2158, %v2147
    %v2819 = vpack.c.b16 %v2159, %v2148
    %v2820 = vpack.c.b16 %v2160, %v2149
    %v2821 = vpack.c.b16 %v2161, %v2150
    %v2822 = vpack.c.b16 %v2162, %v2151
    %v2823 = vpack.c.b16 %v2163, %v2152
    %v2824 = vpack.c.b16 %v2164, %v2153
    %v2825 = vpack.c.b16 %v2165, %v2154
    %v2826 = vpack.c.b16 %v2166, %v2155
    %v2827 = vpack.c.b16 %v2167, %v2156
    %v2828 = vpack.c.b16 %v2168, %v2157
    %v2829 = vpack.c.b16 %v2180, %v2169
    %v2830 = vpack.c.b16 %v2181, %v2170
    %v2831 = vpack.c.b16 %v2182, %v2171
    %v2832 = vpack.c.b16 %v2183, %v2172
    %v2833 = vpack.c.b16 %v2184, %v2173
    %v2834 = vpack.c.b16 %v2185, %v2174
    %v2835 = vpack.c.b16 %v2186, %v2175
    %v2836 = vpack.c.b16 %v2187, %v2176
    %v2837 = vpack.c.b16 %v2188, %v2177
    %v2838 = vpack.c.b16 %v2189, %v2178
    %v2839 = vpack.c.b16 %v2190, %v2179
    %v2840 = vpack.c.b16 %v2202, %v2191
    %v2841 = vpack.c.b16 %v2203, %v2192
    %v2842 = vpack.c.b16 %v2204, %v2193
    %v2843 = vpack.c.b16 %v2205, %v2194
    %v2844 = vpack.c.b16 %v2206, %v2195
    %v2845 = vpack.c.b16 %v2207, %v2196
    %v2846 = vpack.c.b16 %v2208, %v2197
    %v2847 = vpack.c.b16 %v2209, %v2198
    %v2848 = vpack.c.b16 %v2210, %v2199
    %v2849 = vpack.c.b16 %v2211, %v2200
    %v2850 = vpack.c.b16 %v2212, %v2201
    %v2851 = vpack.c.b16 %v2224, %v2213
    %v2852 = vpack.c.b16 %v2225, %v2214
    %v2853 = vpack.c.b16 %v2226, %v2215
    %v2854 = vpack.c.b16 %v2227, %v2216
    %v2855 = vpack.c.b16 %v2228, %v2217
    %v2856 = vpack.c.b16 %v2229, %v2218
    %v2857 = vpack.c.b16 %v2230, %v2219
    %v2858 = vpack.c.b16 %v2231, %v2220
    %v2859 = vpack.c.b16 %v2232, %v2221
    %v2860 = vpack.c.b16 %v2233, %v2222
    %v2861 = vpack.c.b16 %v2234, %v2223
    %v2862 = vpack.c.b16 %v2246, %v2235
    %v2863 = vpack.c.b16 %v2247, %v2236
    %v2864 = vpack.c.b16 %v2248, %v2237
    %v2865 = vpack.c.b16 %v2249, %v2238
    %v2866 = vpack.c.b16 %v2250, %v2239
    %v2867 = vpack.c.b16 %v2251, %v2240
    %v2868 = vpack.c.b16 %v2252, %v2241
    %v2869 = vpack.c.b16 %v2253, %v2242
    %v2870 = vpack.c.b16 %v2254, %v2243
    %v2871 = vpack.c.b16 %v2255, %v2244
    %v2872 = vpack.c.b16 %v2256, %v2245
    %v2873 = vpack.c.b16 %v2268, %v2257
    %v2874 = vpack.c.b16 %v2269, %v2258
    %v2875 = vpack.c.b16 %v2270, %v2259
    %v2876 = vpack.c.b16 %v2271, %v2260
    %v2877 = vpack.c.b16 %v2272, %v2261
    %v2878 = vpack.c.b16 %v2273, %v2262
    %v2879 = vpack.c.b16 %v2274, %v2263
    %v2880 = vpack.c.b16 %v2275, %v2264
    %v2881 = vpack.c.b16 %v2276, %v2265
    %v2882 = vpack.c.b16 %v2277, %v2266
    %v2883 = vpack.c.b16 %v2278, %v2267
    %v2884 = vpack.c.b16 %v2290, %v2279
    %v2885 = vpack.c.b16 %v2291, %v2280
    %v2886 = vpack.c.b16 %v2292, %v2281
    %v2887 = vpack.c.b16 %v2293, %v2282
    %v2888 = vpack.c.b16 %v2294, %v2283
    %v2889 = vpack.c.b16 %v2295, %v2284
    %v2890 = vpack.c.b16 %v2296, %v2285
    %v2891 = vpack.c.b16 %v2297, %v2286
    %v2892 = vpack.c.b16 %v2298, %v2287
    %v2893 = vpack.c.b16 %v2299, %v2288
    %v2894 = vpack.c.b16 %v2300, %v2289
    %v2895 = vpack.c.b16 %v2312, %v2301
    %v2896 = vpack.c.b16 %v2313, %v2302
    %v2897 = vpack.c.b16 %v2314, %v2303
    %v2898 = vpack.c.b16 %v2315, %v2304
    %v2899 = vpack.c.b16 %v2316, %v2305
    %v2900 = vpack.c.b16 %v2317, %v2306
    %v2901 = vpack.c.b16 %v2318, %v2307
    %v2902 = vpack.c.b16 %v2319, %v2308
    %v2903 = vpack.c.b16 %v2320, %v2309
    %v2904 = vpack.c.b16 %v2321, %v2310
    %v2905 = vpack.c.b16 %v2322, %v2311
    %v2906 = vpack.c.b16 %v2334, %v2323
    %v2907 = vpack.c.b16 %v2335, %v2324
    %v2908 = vpack.c.b16 %v2336, %v2325
    %v2909 = vpack.c.b16 %v2337, %v2326
    %v2910 = vpack.c.b16 %v2338, %v2327
    %v2911 = vpack.c.b16 %v2339, %v2328
    %v2912 = vpack.c.b16 %v2340, %v2329
    %v2913 = vpack.c.b16 %v2341, %v2330
    %v2914 = vpack.c.b16 %v2342, %v2331
    %v2915 = vpack.c.b16 %v2343, %v2332
    %v2916 = vpack.c.b16 %v2344, %v2333
    %v2917 = vpack.c.b16 %v2356, %v2345
    %v2918 = vpack.c.b16 %v2357, %v2346
    %v2919 = vpack.c.b16 %v2358, %v2347
    %v2920 = vpack.c.b16 %v2359, %v2348
    %v2921 = vpack.c.b16 %v2360, %v2349
    %v2922 = vpack.c.b16 %v2361, %v2350
    %v2923 = vpack.c.b16 %v2362, %v2351
    %v2924 = vpack.c.b16 %v2363, %v2352
    %v2925 = vpack.c.b16 %v2364, %v2353
    %v2926 = vpack.c.b16 %v2365, %v2354
    %v2927 = vpack.c.b16 %v2366, %v2355
    %v2928 = vpack.c.b16 %v2378, %v2367
    %v2929 = vpack.c.b16 %v2379, %v2368
    %v2930 = vpack.c.b16 %v2380, %v2369
    %v2931 = vpack.c.b16 %v2381, %v2370
    %v2932 = vpack.c.b16 %v2382, %v2371
    %v2933 = vpack.c.b16 %v2383, %v2372
    %v2934 = vpack.c.b16 %v2384, %v2373
    %v2935 = vpack.c.b16 %v2385, %v2374
    %v2936 = vpack.c.b16 %v2386, %v2375
    %v2937 = vpack.c.b16 %v2387, %v2376
    %v2938 = vpack.c.b16 %v2388, %v2377
    %v2939 = vpack.c.b16 %v2400, %v2389
    %v2940 = vpack.c.b16 %v2401, %v2390
    %v2941 = vpack.c.b16 %v2402, %v2391
    %v2942 = vpack.c.b16 %v2403, %v2392
    %v2943 = vpack.c.b16 %v2404, %v2393
    %v2944 = vpack.c.b16 %v2405, %v2394
    %v2945 = vpack.c.b16 %v2406, %v2395
    %v2946 = vpack.c.b16 %v2407, %v2396
    %v2947 = vpack.c.b16 %v2408, %v2397
    %v2948 = vpack.c.b16 %v2409, %v2398
    %v2949 = vpack.c.b16 %v2410, %v2399
    %vm3489 = vcmask 130048
    %v3491 = vsel %vm3489, %v97, 0
    %3493 = vmatprep.subr.bf16.mxu0 %v2412
    %3494 = vmatpush1.bf16.msra.mxu0 %v2411
    %3495 = vmatprep.subr.bf16.mxu0 %v2423
    %3496 = vmatpush1.bf16.msra.mxu0 %v2422
    %3497 = vmatprep.subr.bf16.mxu0 %v2434
    %3498 = vmatpush1.bf16.msra.mxu0 %v2433
    %3499 = vmatprep.subr.bf16.mxu0 %v2445
    %3500 = vmatpush1.bf16.msra.mxu0 %v2444
    %3501 = vmatprep.subr.bf16.mxu0 %v2456
    %3502 = vmatpush1.bf16.msra.mxu0 %v2455
    %3503 = vmatprep.subr.bf16.mxu0 %v2467
    %3504 = vmatpush1.bf16.msra.mxu0 %v2466
    %3505 = vmatprep.subr.bf16.mxu0 %v2478
    %3506 = vmatpush1.bf16.msra.mxu0 %v2477
    %3507 = vmatprep.subr.bf16.mxu0 %v2489
    %3508 = vmatpush1.bf16.msra.mxu0 %v2488
    %3509 = vmatprep.subr.bf16.mxu0 %v2500
    %3510 = vmatpush1.bf16.msra.mxu0 %v2499
    %3511 = vmatprep.subr.bf16.mxu0 %v2511
    %3512 = vmatpush1.bf16.msra.mxu0 %v2510
    %3513 = vmatprep.subr.bf16.mxu0 %v2522
    %3514 = vmatpush1.bf16.msra.mxu0 %v2521
    %3515 = vmatprep.subr.bf16.mxu0 %v2533
    %3516 = vmatpush1.bf16.msra.mxu0 %v2532
    %3517 = vmatprep.subr.bf16.mxu0 %v2544
    %3518 = vmatpush1.bf16.msra.mxu0 %v2543
    %3519 = vmatprep.subr.bf16.mxu0 %v2555
    %3520 = vmatpush1.bf16.msra.mxu0 %v2554
    %3521 = vmatprep.subr.bf16.mxu0 %v2566
    %3522 = vmatpush1.bf16.msra.mxu0 %v2565
    %3523 = vmatprep.subr.bf16.mxu0 %v2577
    %3524 = vmatpush1.bf16.msra.mxu0 %v2576
    %3525 = vmatprep.mubr.bf16.mxu0 %v92
    %3526 = vmatmul.mubr.bf16.gmra.mrb[0].mxu0 %v91
    %v3527 = vpop.f32.mrb[0].mxu0
    %v3528 = vadd.f32 %v693, %v3527
    %v3529 = vpop.f32.mrb[0].mxu0
    %v3530 = vadd.f32 %v697, %v3529
    %v3531 = vpop.f32.mrb[0].mxu0
    %v3532 = vpop.f32.mrb[0].mxu0
    %3533 = vdwg.mxu0
    %3534 = vmatprep.subr.bf16.mxu0 %v2588
    %3535 = vmatpush1.bf16.msra.mxu0 %v2587
    %3536 = vmatprep.subr.bf16.mxu0 %v2599
    %3537 = vmatpush1.bf16.msra.mxu0 %v2598
    %3538 = vmatprep.subr.bf16.mxu0 %v2610
    %3539 = vmatpush1.bf16.msra.mxu0 %v2609
    %3540 = vmatprep.subr.bf16.mxu0 %v2621
    %3541 = vmatpush1.bf16.msra.mxu0 %v2620
    %3542 = vmatprep.subr.bf16.mxu0 %v2632
    %3543 = vmatpush1.bf16.msra.mxu0 %v2631
    %3544 = vmatprep.subr.bf16.mxu0 %v2643
    %3545 = vmatpush1.bf16.msra.mxu0 %v2642
    %3546 = vmatprep.subr.bf16.mxu0 %v2654
    %3547 = vmatpush1.bf16.msra.mxu0 %v2653
    %3548 = vmatprep.subr.bf16.mxu0 %v2665
    %3549 = vmatpush1.bf16.msra.mxu0 %v2664
    %3550 = vmatprep.subr.bf16.mxu0 %v2676
    %3551 = vmatpush1.bf16.msra.mxu0 %v2675
    %3552 = vmatprep.subr.bf16.mxu0 %v2687
    %3553 = vmatpush1.bf16.msra.mxu0 %v2686
    %3554 = vmatprep.subr.bf16.mxu0 %v2698
    %3555 = vmatpush1.bf16.msra.mxu0 %v2697
    %3556 = vmatprep.subr.bf16.mxu0 %v2709
    %3557 = vmatpush1.bf16.msra.mxu0 %v2708
    %3558 = vmatprep.subr.bf16.mxu0 %v2720
    %3559 = vmatpush1.bf16.msra.mxu0 %v2719
    %3560 = vmatprep.subr.bf16.mxu0 %v2731
    %3561 = vmatpush1.bf16.msra.mxu0 %v2730
    %3562 = vmatprep.subr.bf16.mxu0 %v2742
    %3563 = vmatpush1.bf16.msra.mxu0 %v2741
    %3564 = vmatprep.subr.bf16.mxu0 %v2753
    %3565 = vmatpush1.bf16.msra.mxu0 %v2752
    %3566 = vmatprep.mubr.bf16.mxu0 %v94
    %3567 = vmatmul.mubr.bf16.gmra.mrb[0].mxu0 %v93
    %v3568 = vpop.f32.mrb[0].mxu0
    %v3569 = vadd.f32 %v3528, %v3568
    %v3570 = vpop.f32.mrb[0].mxu0
    %v3571 = vadd.f32 %v3530, %v3570
    %v3572 = vpop.f32.mrb[0].mxu0
    %v3573 = vpop.f32.mrb[0].mxu0
    %3574 = vdwg.mxu0
    %3575 = vmatprep.subr.bf16.mxu0 %v2764
    %3576 = vmatpush1.bf16.msra.mxu0 %v2763
    %3577 = vmatprep.subr.bf16.mxu0 %v2775
    %3578 = vmatpush1.bf16.msra.mxu0 %v2774
    %3579 = vmatprep.subr.bf16.mxu0 %v2786
    %3580 = vmatpush1.bf16.msra.mxu0 %v2785
    %3581 = vmatprep.subr.bf16.mxu0 %v2797
    %3582 = vmatpush1.bf16.msra.mxu0 %v2796
    %3583 = vmatprep.subr.bf16.mxu0 %v2808
    %3584 = vmatpush1.bf16.msra.mxu0 %v2807
    %3585 = vmatprep.subr.bf16.mxu0 %v2819
    %3586 = vmatpush1.bf16.msra.mxu0 %v2818
    %3587 = vmatprep.subr.bf16.mxu0 %v2830
    %3588 = vmatpush1.bf16.msra.mxu0 %v2829
    %3589 = vmatprep.subr.bf16.mxu0 %v2841
    %3590 = vmatpush1.bf16.msra.mxu0 %v2840
    %3591 = vmatprep.subr.bf16.mxu0 %v2852
    %3592 = vmatpush1.bf16.msra.mxu0 %v2851
    %3593 = vmatprep.subr.bf16.mxu0 %v2863
    %3594 = vmatpush1.bf16.msra.mxu0 %v2862
    %3595 = vmatprep.subr.bf16.mxu0 %v2874
    %3596 = vmatpush1.bf16.msra.mxu0 %v2873
    %3597 = vmatprep.subr.bf16.mxu0 %v2885
    %3598 = vmatpush1.bf16.msra.mxu0 %v2884
    %3599 = vmatprep.subr.bf16.mxu0 %v2896
    %3600 = vmatpush1.bf16.msra.mxu0 %v2895
    %3601 = vmatprep.subr.bf16.mxu0 %v2907
    %3602 = vmatpush1.bf16.msra.mxu0 %v2906
    %3603 = vmatprep.subr.bf16.mxu0 %v2918
    %3604 = vmatpush1.bf16.msra.mxu0 %v2917
    %3605 = vmatprep.subr.bf16.mxu0 %v2929
    %3606 = vmatpush1.bf16.msra.mxu0 %v2928
    %3607 = vmatprep.mubr.bf16.mxu0 %v96
    %3608 = vmatmul.mubr.bf16.gmra.mrb[0].mxu0 %v95
    %v3609 = vpop.f32.mrb[0].mxu0
    %v3610 = vadd.f32 %v3569, %v3609
    %v3611 = vpop.f32.mrb[0].mxu0
    %v3612 = vadd.f32 %v3571, %v3611
    %v3613 = vpop.f32.mrb[0].mxu0
    %v3614 = vpop.f32.mrb[0].mxu0
    %3615 = vdwg.mxu0
    %3616 = vmatprep.subr.bf16.mxu0 %v2940
    %3617 = vmatpush1.bf16.msra.mxu0 %v2939
    %3618 = vmatprep.subr.bf16.mxu0 0
    %3619 = vmatpush1.bf16.msra.mxu0 0
    %3620 = vmatprep.subr.bf16.mxu0 0
    %3621 = vmatpush1.bf16.msra.mxu0 0
    %3622 = vmatprep.subr.bf16.mxu0 0
    %3623 = vmatpush1.bf16.msra.mxu0 0
    %3624 = vmatprep.subr.bf16.mxu0 0
    %3625 = vmatpush1.bf16.msra.mxu0 0
    %3626 = vmatprep.subr.bf16.mxu0 0
    %3627 = vmatpush1.bf16.msra.mxu0 0
    %3628 = vmatprep.subr.bf16.mxu0 0
    %3629 = vmatpush1.bf16.msra.mxu0 0
    %3630 = vmatprep.subr.bf16.mxu0 0
    %3631 = vmatpush1.bf16.msra.mxu0 0
    %3632 = vmatprep.subr.bf16.mxu0 0
    %3633 = vmatpush1.bf16.msra.mxu0 0
    %3634 = vmatprep.subr.bf16.mxu0 0
    %3635 = vmatpush1.bf16.msra.mxu0 0
    %3636 = vmatprep.subr.bf16.mxu0 0
    %3637 = vmatpush1.bf16.msra.mxu0 0
    %3638 = vmatprep.subr.bf16.mxu0 0
    %3639 = vmatpush1.bf16.msra.mxu0 0
    %3640 = vmatprep.subr.bf16.mxu0 0
    %3641 = vmatpush1.bf16.msra.mxu0 0
    %3642 = vmatprep.subr.bf16.mxu0 0
    %3643 = vmatpush1.bf16.msra.mxu0 0
    %3644 = vmatprep.subr.bf16.mxu0 0
    %3645 = vmatpush1.bf16.msra.mxu0 0
    %3646 = vmatprep.subr.bf16.mxu0 0
    %3647 = vmatpush1.bf16.msra.mxu0 0
    %3648 = vmatprep.mubr.bf16.mxu0 0
    %3649 = vmatmul.mubr.bf16.gmra.mrb[0].mxu0 %v3491
    %v3650 = vpop.f32.mrb[0].mxu0
    %v3651 = vadd.f32 %v3610, %v3650
    %v3652 = vpop.f32.mrb[0].mxu0
    %v3653 = vadd.f32 %v3612, %v3652
    %v3654 = vpop.f32.mrb[0].mxu0
    %v3655 = vpop.f32.mrb[0].mxu0
    %3656 = vdwg.mxu0
    %3657 = vmatprep.subr.bf16.mxu0 %v2414
    %3658 = vmatpush1.bf16.msra.mxu0 %v2413
    %3659 = vmatprep.subr.bf16.mxu0 %v2425
    %3660 = vmatpush1.bf16.msra.mxu0 %v2424
    %3661 = vmatprep.subr.bf16.mxu0 %v2436
    %3662 = vmatpush1.bf16.msra.mxu0 %v2435
    %3663 = vmatprep.subr.bf16.mxu0 %v2447
    %3664 = vmatpush1.bf16.msra.mxu0 %v2446
    %3665 = vmatprep.subr.bf16.mxu0 %v2458
    %3666 = vmatpush1.bf16.msra.mxu0 %v2457
    %3667 = vmatprep.subr.bf16.mxu0 %v2469
    %3668 = vmatpush1.bf16.msra.mxu0 %v2468
    %3669 = vmatprep.subr.bf16.mxu0 %v2480
    %3670 = vmatpush1.bf16.msra.mxu0 %v2479
    %3671 = vmatprep.subr.bf16.mxu0 %v2491
    %3672 = vmatpush1.bf16.msra.mxu0 %v2490
    %3673 = vmatprep.subr.bf16.mxu0 %v2502
    %3674 = vmatpush1.bf16.msra.mxu0 %v2501
    %3675 = vmatprep.subr.bf16.mxu0 %v2513
    %3676 = vmatpush1.bf16.msra.mxu0 %v2512
    %3677 = vmatprep.subr.bf16.mxu0 %v2524
    %3678 = vmatpush1.bf16.msra.mxu0 %v2523
    %3679 = vmatprep.subr.bf16.mxu0 %v2535
    %3680 = vmatpush1.bf16.msra.mxu0 %v2534
    %3681 = vmatprep.subr.bf16.mxu0 %v2546
    %3682 = vmatpush1.bf16.msra.mxu0 %v2545
    %3683 = vmatprep.subr.bf16.mxu0 %v2557
    %3684 = vmatpush1.bf16.msra.mxu0 %v2556
    %3685 = vmatprep.subr.bf16.mxu0 %v2568
    %3686 = vmatpush1.bf16.msra.mxu0 %v2567
    %3687 = vmatprep.subr.bf16.mxu0 %v2579
    %3688 = vmatpush1.bf16.msra.mxu0 %v2578
    %3689 = vmatprep.mubr.bf16.mxu0 %v92
    %3690 = vmatmul.mubr.bf16.gmra.mrb[0].mxu0 %v91
    %v3691 = vpop.f32.mrb[0].mxu0
    %v3692 = vadd.f32 %v701, %v3691
    %v3693 = vpop.f32.mrb[0].mxu0
    %v3694 = vadd.f32 %v705, %v3693
    %v3695 = vpop.f32.mrb[0].mxu0
    %v3696 = vpop.f32.mrb[0].mxu0
    %3697 = vdwg.mxu0
    %3698 = vmatprep.subr.bf16.mxu0 %v2590
    %3699 = vmatpush1.bf16.msra.mxu0 %v2589
    %3700 = vmatprep.subr.bf16.mxu0 %v2601
    %3701 = vmatpush1.bf16.msra.mxu0 %v2600
    %3702 = vmatprep.subr.bf16.mxu0 %v2612
    %3703 = vmatpush1.bf16.msra.mxu0 %v2611
    %3704 = vmatprep.subr.bf16.mxu0 %v2623
    %3705 = vmatpush1.bf16.msra.mxu0 %v2622
    %3706 = vmatprep.subr.bf16.mxu0 %v2634
    %3707 = vmatpush1.bf16.msra.mxu0 %v2633
    %3708 = vmatprep.subr.bf16.mxu0 %v2645
    %3709 = vmatpush1.bf16.msra.mxu0 %v2644
    %3710 = vmatprep.subr.bf16.mxu0 %v2656
    %3711 = vmatpush1.bf16.msra.mxu0 %v2655
    %3712 = vmatprep.subr.bf16.mxu0 %v2667
    %3713 = vmatpush1.bf16.msra.mxu0 %v2666
    %3714 = vmatprep.subr.bf16.mxu0 %v2678
    %3715 = vmatpush1.bf16.msra.mxu0 %v2677
    %3716 = vmatprep.subr.bf16.mxu0 %v2689
    %3717 = vmatpush1.bf16.msra.mxu0 %v2688
    %3718 = vmatprep.subr.bf16.mxu0 %v2700
    %3719 = vmatpush1.bf16.msra.mxu0 %v2699
    %3720 = vmatprep.subr.bf16.mxu0 %v2711
    %3721 = vmatpush1.bf16.msra.mxu0 %v2710
    %3722 = vmatprep.subr.bf16.mxu0 %v2722
    %3723 = vmatpush1.bf16.msra.mxu0 %v2721
    %3724 = vmatprep.subr.bf16.mxu0 %v2733
    %3725 = vmatpush1.bf16.msra.mxu0 %v2732
    %3726 = vmatprep.subr.bf16.mxu0 %v2744
    %3727 = vmatpush1.bf16.msra.mxu0 %v2743
    %3728 = vmatprep.subr.bf16.mxu0 %v2755
    %3729 = vmatpush1.bf16.msra.mxu0 %v2754
    %3730 = vmatprep.mubr.bf16.mxu0 %v94
    %3731 = vmatmul.mubr.bf16.gmra.mrb[0].mxu0 %v93
    %v3732 = vpop.f32.mrb[0].mxu0
    %v3733 = vadd.f32 %v3692, %v3732
    %v3734 = vpop.f32.mrb[0].mxu0
    %v3735 = vadd.f32 %v3694, %v3734
    %v3736 = vpop.f32.mrb[0].mxu0
    %v3737 = vpop.f32.mrb[0].mxu0
    %3738 = vdwg.mxu0
    %3739 = vmatprep.subr.bf16.mxu0 %v2766
    %3740 = vmatpush1.bf16.msra.mxu0 %v2765
    %3741 = vmatprep.subr.bf16.mxu0 %v2777
    %3742 = vmatpush1.bf16.msra.mxu0 %v2776
    %3743 = vmatprep.subr.bf16.mxu0 %v2788
    %3744 = vmatpush1.bf16.msra.mxu0 %v2787
    %3745 = vmatprep.subr.bf16.mxu0 %v2799
    %3746 = vmatpush1.bf16.msra.mxu0 %v2798
    %3747 = vmatprep.subr.bf16.mxu0 %v2810
    %3748 = vmatpush1.bf16.msra.mxu0 %v2809
    %3749 = vmatprep.subr.bf16.mxu0 %v2821
    %3750 = vmatpush1.bf16.msra.mxu0 %v2820
    %3751 = vmatprep.subr.bf16.mxu0 %v2832
    %3752 = vmatpush1.bf16.msra.mxu0 %v2831
    %3753 = vmatprep.subr.bf16.mxu0 %v2843
    %3754 = vmatpush1.bf16.msra.mxu0 %v2842
    %3755 = vmatprep.subr.bf16.mxu0 %v2854
    %3756 = vmatpush1.bf16.msra.mxu0 %v2853
    %3757 = vmatprep.subr.bf16.mxu0 %v2865
    %3758 = vmatpush1.bf16.msra.mxu0 %v2864
    %3759 = vmatprep.subr.bf16.mxu0 %v2876
    %3760 = vmatpush1.bf16.msra.mxu0 %v2875
    %3761 = vmatprep.subr.bf16.mxu0 %v2887
    %3762 = vmatpush1.bf16.msra.mxu0 %v2886
    %3763 = vmatprep.subr.bf16.mxu0 %v2898
    %3764 = vmatpush1.bf16.msra.mxu0 %v2897
    %3765 = vmatprep.subr.bf16.mxu0 %v2909
    %3766 = vmatpush1.bf16.msra.mxu0 %v2908
    %3767 = vmatprep.subr.bf16.mxu0 %v2920
    %3768 = vmatpush1.bf16.msra.mxu0 %v2919
    %3769 = vmatprep.subr.bf16.mxu0 %v2931
    %3770 = vmatpush1.bf16.msra.mxu0 %v2930
    %3771 = vmatprep.mubr.bf16.mxu0 %v96
    %3772 = vmatmul.mubr.bf16.gmra.mrb[0].mxu0 %v95
    %v3773 = vpop.f32.mrb[0].mxu0
    %v3774 = vadd.f32 %v3733, %v3773
    %v3775 = vpop.f32.mrb[0].mxu0
    %v3776 = vadd.f32 %v3735, %v3775
    %v3777 = vpop.f32.mrb[0].mxu0
    %v3778 = vpop.f32.mrb[0].mxu0
    %3779 = vdwg.mxu0
    %3780 = vmatprep.subr.bf16.mxu0 %v2942
    %3781 = vmatpush1.bf16.msra.mxu0 %v2941
    %3782 = vmatprep.subr.bf16.mxu0 0
    %3783 = vmatpush1.bf16.msra.mxu0 0
    %3784 = vmatprep.subr.bf16.mxu0 0
    %3785 = vmatpush1.bf16.msra.mxu0 0
    %3786 = vmatprep.subr.bf16.mxu0 0
    %3787 = vmatpush1.bf16.msra.mxu0 0
    %3788 = vmatprep.subr.bf16.mxu0 0
    %3789 = vmatpush1.bf16.msra.mxu0 0
    %3790 = vmatprep.subr.bf16.mxu0 0
    %3791 = vmatpush1.bf16.msra.mxu0 0
    %3792 = vmatprep.subr.bf16.mxu0 0
    %3793 = vmatpush1.bf16.msra.mxu0 0
    %3794 = vmatprep.subr.bf16.mxu0 0
    %3795 = vmatpush1.bf16.msra.mxu0 0
    %3796 = vmatprep.subr.bf16.mxu0 0
    %3797 = vmatpush1.bf16.msra.mxu0 0
    %3798 = vmatprep.subr.bf16.mxu0 0
    %3799 = vmatpush1.bf16.msra.mxu0 0
    %3800 = vmatprep.subr.bf16.mxu0 0
    %3801 = vmatpush1.bf16.msra.mxu0 0
    %3802 = vmatprep.subr.bf16.mxu0 0
    %3803 = vmatpush1.bf16.msra.mxu0 0
    %3804 = vmatprep.subr.bf16.mxu0 0
    %3805 = vmatpush1.bf16.msra.mxu0 0
    %3806 = vmatprep.subr.bf16.mxu0 0
    %3807 = vmatpush1.bf16.msra.mxu0 0
    %3808 = vmatprep.subr.bf16.mxu0 0
    %3809 = vmatpush1.bf16.msra.mxu0 0
    %3810 = vmatprep.subr.bf16.mxu0 0
    %3811 = vmatpush1.bf16.msra.mxu0 0
    %3812 = vmatprep.mubr.bf16.mxu0 0
    %3813 = vmatmul.mubr.bf16.gmra.mrb[0].mxu0 %v3491
    %v3814 = vpop.f32.mrb[0].mxu0
    %v3815 = vadd.f32 %v3774, %v3814
    %v3816 = vpop.f32.mrb[0].mxu0
    %v3817 = vadd.f32 %v3776, %v3816
    %v3818 = vpop.f32.mrb[0].mxu0
    %v3819 = vpop.f32.mrb[0].mxu0
    %3820 = vdwg.mxu0
    %3821 = vmatprep.subr.bf16.mxu0 %v2416
    %3822 = vmatpush1.bf16.msra.mxu0 %v2415
    %3823 = vmatprep.subr.bf16.mxu0 %v2427
    %3824 = vmatpush1.bf16.msra.mxu0 %v2426
    %3825 = vmatprep.subr.bf16.mxu0 %v2438
    %3826 = vmatpush1.bf16.msra.mxu0 %v2437
    %3827 = vmatprep.subr.bf16.mxu0 %v2449
    %3828 = vmatpush1.bf16.msra.mxu0 %v2448
    %3829 = vmatprep.subr.bf16.mxu0 %v2460
    %3830 = vmatpush1.bf16.msra.mxu0 %v2459
    %3831 = vmatprep.subr.bf16.mxu0 %v2471
    %3832 = vmatpush1.bf16.msra.mxu0 %v2470
    %3833 = vmatprep.subr.bf16.mxu0 %v2482
    %3834 = vmatpush1.bf16.msra.mxu0 %v2481
    %3835 = vmatprep.subr.bf16.mxu0 %v2493
    %3836 = vmatpush1.bf16.msra.mxu0 %v2492
    %3837 = vmatprep.subr.bf16.mxu0 %v2504
    %3838 = vmatpush1.bf16.msra.mxu0 %v2503
    %3839 = vmatprep.subr.bf16.mxu0 %v2515
    %3840 = vmatpush1.bf16.msra.mxu0 %v2514
    %3841 = vmatprep.subr.bf16.mxu0 %v2526
    %3842 = vmatpush1.bf16.msra.mxu0 %v2525
    %3843 = vmatprep.subr.bf16.mxu0 %v2537
    %3844 = vmatpush1.bf16.msra.mxu0 %v2536
    %3845 = vmatprep.subr.bf16.mxu0 %v2548
    %3846 = vmatpush1.bf16.msra.mxu0 %v2547
    %3847 = vmatprep.subr.bf16.mxu0 %v2559
    %3848 = vmatpush1.bf16.msra.mxu0 %v2558
    %3849 = vmatprep.subr.bf16.mxu0 %v2570
    %3850 = vmatpush1.bf16.msra.mxu0 %v2569
    %3851 = vmatprep.subr.bf16.mxu0 %v2581
    %3852 = vmatpush1.bf16.msra.mxu0 %v2580
    %3853 = vmatprep.mubr.bf16.mxu0 %v92
    %3854 = vmatmul.mubr.bf16.gmra.mrb[0].mxu0 %v91
    %v3855 = vpop.f32.mrb[0].mxu0
    %v3856 = vadd.f32 %v709, %v3855
    %v3857 = vpop.f32.mrb[0].mxu0
    %v3858 = vadd.f32 %v713, %v3857
    %v3859 = vpop.f32.mrb[0].mxu0
    %v3860 = vpop.f32.mrb[0].mxu0
    %3861 = vdwg.mxu0
    %3862 = vmatprep.subr.bf16.mxu0 %v2592
    %3863 = vmatpush1.bf16.msra.mxu0 %v2591
    %3864 = vmatprep.subr.bf16.mxu0 %v2603
    %3865 = vmatpush1.bf16.msra.mxu0 %v2602
    %3866 = vmatprep.subr.bf16.mxu0 %v2614
    %3867 = vmatpush1.bf16.msra.mxu0 %v2613
    %3868 = vmatprep.subr.bf16.mxu0 %v2625
    %3869 = vmatpush1.bf16.msra.mxu0 %v2624
    %3870 = vmatprep.subr.bf16.mxu0 %v2636
    %3871 = vmatpush1.bf16.msra.mxu0 %v2635
    %3872 = vmatprep.subr.bf16.mxu0 %v2647
    %3873 = vmatpush1.bf16.msra.mxu0 %v2646
    %3874 = vmatprep.subr.bf16.mxu0 %v2658
    %3875 = vmatpush1.bf16.msra.mxu0 %v2657
    %3876 = vmatprep.subr.bf16.mxu0 %v2669
    %3877 = vmatpush1.bf16.msra.mxu0 %v2668
    %3878 = vmatprep.subr.bf16.mxu0 %v2680
    %3879 = vmatpush1.bf16.msra.mxu0 %v2679
    %3880 = vmatprep.subr.bf16.mxu0 %v2691
    %3881 = vmatpush1.bf16.msra.mxu0 %v2690
    %3882 = vmatprep.subr.bf16.mxu0 %v2702
    %3883 = vmatpush1.bf16.msra.mxu0 %v2701
    %3884 = vmatprep.subr.bf16.mxu0 %v2713
    %3885 = vmatpush1.bf16.msra.mxu0 %v2712
    %3886 = vmatprep.subr.bf16.mxu0 %v2724
    %3887 = vmatpush1.bf16.msra.mxu0 %v2723
    %3888 = vmatprep.subr.bf16.mxu0 %v2735
    %3889 = vmatpush1.bf16.msra.mxu0 %v2734
    %3890 = vmatprep.subr.bf16.mxu0 %v2746
    %3891 = vmatpush1.bf16.msra.mxu0 %v2745
    %3892 = vmatprep.subr.bf16.mxu0 %v2757
    %3893 = vmatpush1.bf16.msra.mxu0 %v2756
    %3894 = vmatprep.mubr.bf16.mxu0 %v94
    %3895 = vmatmul.mubr.bf16.gmra.mrb[0].mxu0 %v93
    %v3896 = vpop.f32.mrb[0].mxu0
    %v3897 = vadd.f32 %v3856, %v3896
    %v3898 = vpop.f32.mrb[0].mxu0
    %v3899 = vadd.f32 %v3858, %v3898
    %v3900 = vpop.f32.mrb[0].mxu0
    %v3901 = vpop.f32.mrb[0].mxu0
    %3902 = vdwg.mxu0
    %3903 = vmatprep.subr.bf16.mxu0 %v2768
    %3904 = vmatpush1.bf16.msra.mxu0 %v2767
    %3905 = vmatprep.subr.bf16.mxu0 %v2779
    %3906 = vmatpush1.bf16.msra.mxu0 %v2778
    %3907 = vmatprep.subr.bf16.mxu0 %v2790
    %3908 = vmatpush1.bf16.msra.mxu0 %v2789
    %3909 = vmatprep.subr.bf16.mxu0 %v2801
    %3910 = vmatpush1.bf16.msra.mxu0 %v2800
    %3911 = vmatprep.subr.bf16.mxu0 %v2812
    %3912 = vmatpush1.bf16.msra.mxu0 %v2811
    %3913 = vmatprep.subr.bf16.mxu0 %v2823
    %3914 = vmatpush1.bf16.msra.mxu0 %v2822
    %3915 = vmatprep.subr.bf16.mxu0 %v2834
    %3916 = vmatpush1.bf16.msra.mxu0 %v2833
    %3917 = vmatprep.subr.bf16.mxu0 %v2845
    %3918 = vmatpush1.bf16.msra.mxu0 %v2844
    %3919 = vmatprep.subr.bf16.mxu0 %v2856
    %3920 = vmatpush1.bf16.msra.mxu0 %v2855
    %3921 = vmatprep.subr.bf16.mxu0 %v2867
    %3922 = vmatpush1.bf16.msra.mxu0 %v2866
    %3923 = vmatprep.subr.bf16.mxu0 %v2878
    %3924 = vmatpush1.bf16.msra.mxu0 %v2877
    %3925 = vmatprep.subr.bf16.mxu0 %v2889
    %3926 = vmatpush1.bf16.msra.mxu0 %v2888
    %3927 = vmatprep.subr.bf16.mxu0 %v2900
    %3928 = vmatpush1.bf16.msra.mxu0 %v2899
    %3929 = vmatprep.subr.bf16.mxu0 %v2911
    %3930 = vmatpush1.bf16.msra.mxu0 %v2910
    %3931 = vmatprep.subr.bf16.mxu0 %v2922
    %3932 = vmatpush1.bf16.msra.mxu0 %v2921
    %3933 = vmatprep.subr.bf16.mxu0 %v2933
    %3934 = vmatpush1.bf16.msra.mxu0 %v2932
    %3935 = vmatprep.mubr.bf16.mxu0 %v96
    %3936 = vmatmul.mubr.bf16.gmra.mrb[0].mxu0 %v95
    %v3937 = vpop.f32.mrb[0].mxu0
    %v3938 = vadd.f32 %v3897, %v3937
    %v3939 = vpop.f32.mrb[0].mxu0
    %v3940 = vadd.f32 %v3899, %v3939
    %v3941 = vpop.f32.mrb[0].mxu0
    %v3942 = vpop.f32.mrb[0].mxu0
    %3943 = vdwg.mxu0
    %3944 = vmatprep.subr.bf16.mxu0 %v2944
    %3945 = vmatpush1.bf16.msra.mxu0 %v2943
    %3946 = vmatprep.subr.bf16.mxu0 0
    %3947 = vmatpush1.bf16.msra.mxu0 0
    %3948 = vmatprep.subr.bf16.mxu0 0
    %3949 = vmatpush1.bf16.msra.mxu0 0
    %3950 = vmatprep.subr.bf16.mxu0 0
    %3951 = vmatpush1.bf16.msra.mxu0 0
    %3952 = vmatprep.subr.bf16.mxu0 0
    %3953 = vmatpush1.bf16.msra.mxu0 0
    %3954 = vmatprep.subr.bf16.mxu0 0
    %3955 = vmatpush1.bf16.msra.mxu0 0
    %3956 = vmatprep.subr.bf16.mxu0 0
    %3957 = vmatpush1.bf16.msra.mxu0 0
    %3958 = vmatprep.subr.bf16.mxu0 0
    %3959 = vmatpush1.bf16.msra.mxu0 0
    %3960 = vmatprep.subr.bf16.mxu0 0
    %3961 = vmatpush1.bf16.msra.mxu0 0
    %3962 = vmatprep.subr.bf16.mxu0 0
    %3963 = vmatpush1.bf16.msra.mxu0 0
    %3964 = vmatprep.subr.bf16.mxu0 0
    %3965 = vmatpush1.bf16.msra.mxu0 0
    %3966 = vmatprep.subr.bf16.mxu0 0
    %3967 = vmatpush1.bf16.msra.mxu0 0
    %3968 = vmatprep.subr.bf16.mxu0 0
    %3969 = vmatpush1.bf16.msra.mxu0 0
    %3970 = vmatprep.subr.bf16.mxu0 0
    %3971 = vmatpush1.bf16.msra.mxu0 0
    %3972 = vmatprep.subr.bf16.mxu0 0
    %3973 = vmatpush1.bf16.msra.mxu0 0
    %3974 = vmatprep.subr.bf16.mxu0 0
    %3975 = vmatpush1.bf16.msra.mxu0 0
    %3976 = vmatprep.mubr.bf16.mxu0 0
    %3977 = vmatmul.mubr.bf16.gmra.mrb[0].mxu0 %v3491
    %v3978 = vpop.f32.mrb[0].mxu0
    %v3979 = vadd.f32 %v3938, %v3978
    %v3980 = vpop.f32.mrb[0].mxu0
    %v3981 = vadd.f32 %v3940, %v3980
    %v3982 = vpop.f32.mrb[0].mxu0
    %v3983 = vpop.f32.mrb[0].mxu0
    %3984 = vdwg.mxu0
    %3985 = vmatprep.subr.bf16.mxu0 %v2418
    %3986 = vmatpush1.bf16.msra.mxu0 %v2417
    %3987 = vmatprep.subr.bf16.mxu0 %v2429
    %3988 = vmatpush1.bf16.msra.mxu0 %v2428
    %3989 = vmatprep.subr.bf16.mxu0 %v2440
    %3990 = vmatpush1.bf16.msra.mxu0 %v2439
    %3991 = vmatprep.subr.bf16.mxu0 %v2451
    %3992 = vmatpush1.bf16.msra.mxu0 %v2450
    %3993 = vmatprep.subr.bf16.mxu0 %v2462
    %3994 = vmatpush1.bf16.msra.mxu0 %v2461
    %3995 = vmatprep.subr.bf16.mxu0 %v2473
    %3996 = vmatpush1.bf16.msra.mxu0 %v2472
    %3997 = vmatprep.subr.bf16.mxu0 %v2484
    %3998 = vmatpush1.bf16.msra.mxu0 %v2483
    %3999 = vmatprep.subr.bf16.mxu0 %v2495
    %4000 = vmatpush1.bf16.msra.mxu0 %v2494
    %4001 = vmatprep.subr.bf16.mxu0 %v2506
    %4002 = vmatpush1.bf16.msra.mxu0 %v2505
    %4003 = vmatprep.subr.bf16.mxu0 %v2517
    %4004 = vmatpush1.bf16.msra.mxu0 %v2516
    %4005 = vmatprep.subr.bf16.mxu0 %v2528
    %4006 = vmatpush1.bf16.msra.mxu0 %v2527
    %4007 = vmatprep.subr.bf16.mxu0 %v2539
    %4008 = vmatpush1.bf16.msra.mxu0 %v2538
    %4009 = vmatprep.subr.bf16.mxu0 %v2550
    %4010 = vmatpush1.bf16.msra.mxu0 %v2549
    %4011 = vmatprep.subr.bf16.mxu0 %v2561
    %4012 = vmatpush1.bf16.msra.mxu0 %v2560
    %4013 = vmatprep.subr.bf16.mxu0 %v2572
    %4014 = vmatpush1.bf16.msra.mxu0 %v2571
    %4015 = vmatprep.subr.bf16.mxu0 %v2583
    %4016 = vmatpush1.bf16.msra.mxu0 %v2582
    %4017 = vmatprep.mubr.bf16.mxu0 %v92
    %4018 = vmatmul.mubr.bf16.gmra.mrb[0].mxu0 %v91
    %v4019 = vpop.f32.mrb[0].mxu0
    %v4020 = vadd.f32 %v717, %v4019
    %v4021 = vpop.f32.mrb[0].mxu0
    %v4022 = vadd.f32 %v721, %v4021
    %v4023 = vpop.f32.mrb[0].mxu0
    %v4024 = vpop.f32.mrb[0].mxu0
    %4025 = vdwg.mxu0
    %4026 = vmatprep.subr.bf16.mxu0 %v2594
    %4027 = vmatpush1.bf16.msra.mxu0 %v2593
    %4028 = vmatprep.subr.bf16.mxu0 %v2605
    %4029 = vmatpush1.bf16.msra.mxu0 %v2604
    %4030 = vmatprep.subr.bf16.mxu0 %v2616
    %4031 = vmatpush1.bf16.msra.mxu0 %v2615
    %4032 = vmatprep.subr.bf16.mxu0 %v2627
    %4033 = vmatpush1.bf16.msra.mxu0 %v2626
    %4034 = vmatprep.subr.bf16.mxu0 %v2638
    %4035 = vmatpush1.bf16.msra.mxu0 %v2637
    %4036 = vmatprep.subr.bf16.mxu0 %v2649
    %4037 = vmatpush1.bf16.msra.mxu0 %v2648
    %4038 = vmatprep.subr.bf16.mxu0 %v2660
    %4039 = vmatpush1.bf16.msra.mxu0 %v2659
    %4040 = vmatprep.subr.bf16.mxu0 %v2671
    %4041 = vmatpush1.bf16.msra.mxu0 %v2670
    %4042 = vmatprep.subr.bf16.mxu0 %v2682
    %4043 = vmatpush1.bf16.msra.mxu0 %v2681
    %4044 = vmatprep.subr.bf16.mxu0 %v2693
    %4045 = vmatpush1.bf16.msra.mxu0 %v2692
    %4046 = vmatprep.subr.bf16.mxu0 %v2704
    %4047 = vmatpush1.bf16.msra.mxu0 %v2703
    %4048 = vmatprep.subr.bf16.mxu0 %v2715
    %4049 = vmatpush1.bf16.msra.mxu0 %v2714
    %4050 = vmatprep.subr.bf16.mxu0 %v2726
    %4051 = vmatpush1.bf16.msra.mxu0 %v2725
    %4052 = vmatprep.subr.bf16.mxu0 %v2737
    %4053 = vmatpush1.bf16.msra.mxu0 %v2736
    %4054 = vmatprep.subr.bf16.mxu0 %v2748
    %4055 = vmatpush1.bf16.msra.mxu0 %v2747
    %4056 = vmatprep.subr.bf16.mxu0 %v2759
    %4057 = vmatpush1.bf16.msra.mxu0 %v2758
    %4058 = vmatprep.mubr.bf16.mxu0 %v94
    %4059 = vmatmul.mubr.bf16.gmra.mrb[0].mxu0 %v93
    %v4060 = vpop.f32.mrb[0].mxu0
    %v4061 = vadd.f32 %v4020, %v4060
    %v4062 = vpop.f32.mrb[0].mxu0
    %v4063 = vadd.f32 %v4022, %v4062
    %v4064 = vpop.f32.mrb[0].mxu0
    %v4065 = vpop.f32.mrb[0].mxu0
    %4066 = vdwg.mxu0
    %4067 = vmatprep.subr.bf16.mxu0 %v2770
    %4068 = vmatpush1.bf16.msra.mxu0 %v2769
    %4069 = vmatprep.subr.bf16.mxu0 %v2781
    %4070 = vmatpush1.bf16.msra.mxu0 %v2780
    %4071 = vmatprep.subr.bf16.mxu0 %v2792
    %4072 = vmatpush1.bf16.msra.mxu0 %v2791
    %4073 = vmatprep.subr.bf16.mxu0 %v2803
    %4074 = vmatpush1.bf16.msra.mxu0 %v2802
    %4075 = vmatprep.subr.bf16.mxu0 %v2814
    %4076 = vmatpush1.bf16.msra.mxu0 %v2813
    %4077 = vmatprep.subr.bf16.mxu0 %v2825
    %4078 = vmatpush1.bf16.msra.mxu0 %v2824
    %4079 = vmatprep.subr.bf16.mxu0 %v2836
    %4080 = vmatpush1.bf16.msra.mxu0 %v2835
    %4081 = vmatprep.subr.bf16.mxu0 %v2847
    %4082 = vmatpush1.bf16.msra.mxu0 %v2846
    %4083 = vmatprep.subr.bf16.mxu0 %v2858
    %4084 = vmatpush1.bf16.msra.mxu0 %v2857
    %4085 = vmatprep.subr.bf16.mxu0 %v2869
    %4086 = vmatpush1.bf16.msra.mxu0 %v2868
    %4087 = vmatprep.subr.bf16.mxu0 %v2880
    %4088 = vmatpush1.bf16.msra.mxu0 %v2879
    %4089 = vmatprep.subr.bf16.mxu0 %v2891
    %4090 = vmatpush1.bf16.msra.mxu0 %v2890
    %4091 = vmatprep.subr.bf16.mxu0 %v2902
    %4092 = vmatpush1.bf16.msra.mxu0 %v2901
    %4093 = vmatprep.subr.bf16.mxu0 %v2913
    %4094 = vmatpush1.bf16.msra.mxu0 %v2912
    %4095 = vmatprep.subr.bf16.mxu0 %v2924
    %4096 = vmatpush1.bf16.msra.mxu0 %v2923
    %4097 = vmatprep.subr.bf16.mxu0 %v2935
    %4098 = vmatpush1.bf16.msra.mxu0 %v2934
    %4099 = vmatprep.mubr.bf16.mxu0 %v96
    %4100 = vmatmul.mubr.bf16.gmra.mrb[0].mxu0 %v95
    %v4101 = vpop.f32.mrb[0].mxu0
    %v4102 = vadd.f32 %v4061, %v4101
    %v4103 = vpop.f32.mrb[0].mxu0
    %v4104 = vadd.f32 %v4063, %v4103
    %v4105 = vpop.f32.mrb[0].mxu0
    %v4106 = vpop.f32.mrb[0].mxu0
    %4107 = vdwg.mxu0
    %4108 = vmatprep.subr.bf16.mxu0 %v2946
    %4109 = vmatpush1.bf16.msra.mxu0 %v2945
    %4110 = vmatprep.subr.bf16.mxu0 0
    %4111 = vmatpush1.bf16.msra.mxu0 0
    %4112 = vmatprep.subr.bf16.mxu0 0
    %4113 = vmatpush1.bf16.msra.mxu0 0
    %4114 = vmatprep.subr.bf16.mxu0 0
    %4115 = vmatpush1.bf16.msra.mxu0 0
    %4116 = vmatprep.subr.bf16.mxu0 0
    %4117 = vmatpush1.bf16.msra.mxu0 0
    %4118 = vmatprep.subr.bf16.mxu0 0
    %4119 = vmatpush1.bf16.msra.mxu0 0
    %4120 = vmatprep.subr.bf16.mxu0 0
    %4121 = vmatpush1.bf16.msra.mxu0 0
    %4122 = vmatprep.subr.bf16.mxu0 0
    %4123 = vmatpush1.bf16.msra.mxu0 0
    %4124 = vmatprep.subr.bf16.mxu0 0
    %4125 = vmatpush1.bf16.msra.mxu0 0
    %4126 = vmatprep.subr.bf16.mxu0 0
    %4127 = vmatpush1.bf16.msra.mxu0 0
    %4128 = vmatprep.subr.bf16.mxu0 0
    %4129 = vmatpush1.bf16.msra.mxu0 0
    %4130 = vmatprep.subr.bf16.mxu0 0
    %4131 = vmatpush1.bf16.msra.mxu0 0
    %4132 = vmatprep.subr.bf16.mxu0 0
    %4133 = vmatpush1.bf16.msra.mxu0 0
    %4134 = vmatprep.subr.bf16.mxu0 0
    %4135 = vmatpush1.bf16.msra.mxu0 0
    %4136 = vmatprep.subr.bf16.mxu0 0
    %4137 = vmatpush1.bf16.msra.mxu0 0
    %4138 = vmatprep.subr.bf16.mxu0 0
    %4139 = vmatpush1.bf16.msra.mxu0 0
    %4140 = vmatprep.mubr.bf16.mxu0 0
    %4141 = vmatmul.mubr.bf16.gmra.mrb[0].mxu0 %v3491
    %v4142 = vpop.f32.mrb[0].mxu0
    %v4143 = vadd.f32 %v4102, %v4142
    %v4144 = vpop.f32.mrb[0].mxu0
    %v4145 = vadd.f32 %v4104, %v4144
    %v4146 = vpop.f32.mrb[0].mxu0
    %v4147 = vpop.f32.mrb[0].mxu0
    %4148 = vdwg.mxu0
    %4149 = vmatprep.subr.bf16.mxu0 %v2420
    %4150 = vmatpush1.bf16.msra.mxu0 %v2419
    %4151 = vmatprep.subr.bf16.mxu0 %v2431
    %4152 = vmatpush1.bf16.msra.mxu0 %v2430
    %4153 = vmatprep.subr.bf16.mxu0 %v2442
    %4154 = vmatpush1.bf16.msra.mxu0 %v2441
    %4155 = vmatprep.subr.bf16.mxu0 %v2453
    %4156 = vmatpush1.bf16.msra.mxu0 %v2452
    %4157 = vmatprep.subr.bf16.mxu0 %v2464
    %4158 = vmatpush1.bf16.msra.mxu0 %v2463
    %4159 = vmatprep.subr.bf16.mxu0 %v2475
    %4160 = vmatpush1.bf16.msra.mxu0 %v2474
    %4161 = vmatprep.subr.bf16.mxu0 %v2486
    %4162 = vmatpush1.bf16.msra.mxu0 %v2485
    %4163 = vmatprep.subr.bf16.mxu0 %v2497
    %4164 = vmatpush1.bf16.msra.mxu0 %v2496
    %4165 = vmatprep.subr.bf16.mxu0 %v2508
    %4166 = vmatpush1.bf16.msra.mxu0 %v2507
    %4167 = vmatprep.subr.bf16.mxu0 %v2519
    %4168 = vmatpush1.bf16.msra.mxu0 %v2518
    %4169 = vmatprep.subr.bf16.mxu0 %v2530
    %4170 = vmatpush1.bf16.msra.mxu0 %v2529
    %4171 = vmatprep.subr.bf16.mxu0 %v2541
    %4172 = vmatpush1.bf16.msra.mxu0 %v2540
    %4173 = vmatprep.subr.bf16.mxu0 %v2552
    %4174 = vmatpush1.bf16.msra.mxu0 %v2551
    %4175 = vmatprep.subr.bf16.mxu0 %v2563
    %4176 = vmatpush1.bf16.msra.mxu0 %v2562
    %4177 = vmatprep.subr.bf16.mxu0 %v2574
    %4178 = vmatpush1.bf16.msra.mxu0 %v2573
    %4179 = vmatprep.subr.bf16.mxu0 %v2585
    %4180 = vmatpush1.bf16.msra.mxu0 %v2584
    %4181 = vmatprep.mubr.bf16.mxu0 %v92
    %4182 = vmatmul.mubr.bf16.gmra.mrb[0].mxu0 %v91
    %v4183 = vpop.f32.mrb[0].mxu0
    %v4184 = vadd.f32 %v725, %v4183
    %v4185 = vpop.f32.mrb[0].mxu0
    %v4186 = vadd.f32 %v729, %v4185
    %v4187 = vpop.f32.mrb[0].mxu0
    %v4188 = vpop.f32.mrb[0].mxu0
    %4189 = vdwg.mxu0
    %4190 = vmatprep.subr.bf16.mxu0 %v2596
    %4191 = vmatpush1.bf16.msra.mxu0 %v2595
    %4192 = vmatprep.subr.bf16.mxu0 %v2607
    %4193 = vmatpush1.bf16.msra.mxu0 %v2606
    %4194 = vmatprep.subr.bf16.mxu0 %v2618
    %4195 = vmatpush1.bf16.msra.mxu0 %v2617
    %4196 = vmatprep.subr.bf16.mxu0 %v2629
    %4197 = vmatpush1.bf16.msra.mxu0 %v2628
    %4198 = vmatprep.subr.bf16.mxu0 %v2640
    %4199 = vmatpush1.bf16.msra.mxu0 %v2639
    %4200 = vmatprep.subr.bf16.mxu0 %v2651
    %4201 = vmatpush1.bf16.msra.mxu0 %v2650
    %4202 = vmatprep.subr.bf16.mxu0 %v2662
    %4203 = vmatpush1.bf16.msra.mxu0 %v2661
    %4204 = vmatprep.subr.bf16.mxu0 %v2673
    %4205 = vmatpush1.bf16.msra.mxu0 %v2672
    %4206 = vmatprep.subr.bf16.mxu0 %v2684
    %4207 = vmatpush1.bf16.msra.mxu0 %v2683
    %4208 = vmatprep.subr.bf16.mxu0 %v2695
    %4209 = vmatpush1.bf16.msra.mxu0 %v2694
    %4210 = vmatprep.subr.bf16.mxu0 %v2706
    %4211 = vmatpush1.bf16.msra.mxu0 %v2705
    %4212 = vmatprep.subr.bf16.mxu0 %v2717
    %4213 = vmatpush1.bf16.msra.mxu0 %v2716
    %4214 = vmatprep.subr.bf16.mxu0 %v2728
    %4215 = vmatpush1.bf16.msra.mxu0 %v2727
    %4216 = vmatprep.subr.bf16.mxu0 %v2739
    %4217 = vmatpush1.bf16.msra.mxu0 %v2738
    %4218 = vmatprep.subr.bf16.mxu0 %v2750
    %4219 = vmatpush1.bf16.msra.mxu0 %v2749
    %4220 = vmatprep.subr.bf16.mxu0 %v2761
    %4221 = vmatpush1.bf16.msra.mxu0 %v2760
    %4222 = vmatprep.mubr.bf16.mxu0 %v94
    %4223 = vmatmul.mubr.bf16.gmra.mrb[0].mxu0 %v93
    %v4224 = vpop.f32.mrb[0].mxu0
    %v4225 = vadd.f32 %v4184, %v4224
    %v4226 = vpop.f32.mrb[0].mxu0
    %v4227 = vadd.f32 %v4186, %v4226
    %v4228 = vpop.f32.mrb[0].mxu0
    %v4229 = vpop.f32.mrb[0].mxu0
    %4230 = vdwg.mxu0
    %4231 = vmatprep.subr.bf16.mxu0 %v2772
    %4232 = vmatpush1.bf16.msra.mxu0 %v2771
    %4233 = vmatprep.subr.bf16.mxu0 %v2783
    %4234 = vmatpush1.bf16.msra.mxu0 %v2782
    %4235 = vmatprep.subr.bf16.mxu0 %v2794
    %4236 = vmatpush1.bf16.msra.mxu0 %v2793
    %4237 = vmatprep.subr.bf16.mxu0 %v2805
    %4238 = vmatpush1.bf16.msra.mxu0 %v2804
    %4239 = vmatprep.subr.bf16.mxu0 %v2816
    %4240 = vmatpush1.bf16.msra.mxu0 %v2815
    %4241 = vmatprep.subr.bf16.mxu0 %v2827
    %4242 = vmatpush1.bf16.msra.mxu0 %v2826
    %4243 = vmatprep.subr.bf16.mxu0 %v2838
    %4244 = vmatpush1.bf16.msra.mxu0 %v2837
    %4245 = vmatprep.subr.bf16.mxu0 %v2849
    %4246 = vmatpush1.bf16.msra.mxu0 %v2848
    %4247 = vmatprep.subr.bf16.mxu0 %v2860
    %4248 = vmatpush1.bf16.msra.mxu0 %v2859
    %4249 = vmatprep.subr.bf16.mxu0 %v2871
    %4250 = vmatpush1.bf16.msra.mxu0 %v2870
    %4251 = vmatprep.subr.bf16.mxu0 %v2882
    %4252 = vmatpush1.bf16.msra.mxu0 %v2881
    %4253 = vmatprep.subr.bf16.mxu0 %v2893
    %4254 = vmatpush1.bf16.msra.mxu0 %v2892
    %4255 = vmatprep.subr.bf16.mxu0 %v2904
    %4256 = vmatpush1.bf16.msra.mxu0 %v2903
    %4257 = vmatprep.subr.bf16.mxu0 %v2915
    %4258 = vmatpush1.bf16.msra.mxu0 %v2914
    %4259 = vmatprep.subr.bf16.mxu0 %v2926
    %4260 = vmatpush1.bf16.msra.mxu0 %v2925
    %4261 = vmatprep.subr.bf16.mxu0 %v2937
    %4262 = vmatpush1.bf16.msra.mxu0 %v2936
    %4263 = vmatprep.mubr.bf16.mxu0 %v96
    %4264 = vmatmul.mubr.bf16.gmra.mrb[0].mxu0 %v95
    %v4265 = vpop.f32.mrb[0].mxu0
    %v4266 = vadd.f32 %v4225, %v4265
    %v4267 = vpop.f32.mrb[0].mxu0
    %v4268 = vadd.f32 %v4227, %v4267
    %v4269 = vpop.f32.mrb[0].mxu0
    %v4270 = vpop.f32.mrb[0].mxu0
    %4271 = vdwg.mxu0
    %4272 = vmatprep.subr.bf16.mxu0 %v2948
    %4273 = vmatpush1.bf16.msra.mxu0 %v2947
    %4274 = vmatprep.subr.bf16.mxu0 0
    %4275 = vmatpush1.bf16.msra.mxu0 0
    %4276 = vmatprep.subr.bf16.mxu0 0
    %4277 = vmatpush1.bf16.msra.mxu0 0
    %4278 = vmatprep.subr.bf16.mxu0 0
    %4279 = vmatpush1.bf16.msra.mxu0 0
    %4280 = vmatprep.subr.bf16.mxu0 0
    %4281 = vmatpush1.bf16.msra.mxu0 0
    %4282 = vmatprep.subr.bf16.mxu0 0
    %4283 = vmatpush1.bf16.msra.mxu0 0
    %4284 = vmatprep.subr.bf16.mxu0 0
    %4285 = vmatpush1.bf16.msra.mxu0 0
    %4286 = vmatprep.subr.bf16.mxu0 0
    %4287 = vmatpush1.bf16.msra.mxu0 0
    %4288 = vmatprep.subr.bf16.mxu0 0
    %4289 = vmatpush1.bf16.msra.mxu0 0
    %4290 = vmatprep.subr.bf16.mxu0 0
    %4291 = vmatpush1.bf16.msra.mxu0 0
    %4292 = vmatprep.subr.bf16.mxu0 0
    %4293 = vmatpush1.bf16.msra.mxu0 0
    %4294 = vmatprep.subr.bf16.mxu0 0
    %4295 = vmatpush1.bf16.msra.mxu0 0
    %4296 = vmatprep.subr.bf16.mxu0 0
    %4297 = vmatpush1.bf16.msra.mxu0 0
    %4298 = vmatprep.subr.bf16.mxu0 0
    %4299 = vmatpush1.bf16.msra.mxu0 0
    %4300 = vmatprep.subr.bf16.mxu0 0
    %4301 = vmatpush1.bf16.msra.mxu0 0
    %4302 = vmatprep.subr.bf16.mxu0 0
    %4303 = vmatpush1.bf16.msra.mxu0 0
    %4304 = vmatprep.mubr.bf16.mxu0 0
    %4305 = vmatmul.mubr.bf16.gmra.mrb[0].mxu0 %v3491
    %v4306 = vpop.f32.mrb[0].mxu0
    %v4307 = vadd.f32 %v4266, %v4306
    %v4308 = vpop.f32.mrb[0].mxu0
    %v4309 = vadd.f32 %v4268, %v4308
    %v4310 = vpop.f32.mrb[0].mxu0
    %v4311 = vpop.f32.mrb[0].mxu0
    %4312 = vdwg.mxu0
    %4313 = vmatprep.subr.bf16.mxu0 0
    %4314 = vmatpush1.bf16.msra.mxu0 %v2421
    %4315 = vmatprep.subr.bf16.mxu0 0
    %4316 = vmatpush1.bf16.msra.mxu0 %v2432
    %4317 = vmatprep.subr.bf16.mxu0 0
    %4318 = vmatpush1.bf16.msra.mxu0 %v2443
    %4319 = vmatprep.subr.bf16.mxu0 0
    %4320 = vmatpush1.bf16.msra.mxu0 %v2454
    %4321 = vmatprep.subr.bf16.mxu0 0
    %4322 = vmatpush1.bf16.msra.mxu0 %v2465
    %4323 = vmatprep.subr.bf16.mxu0 0
    %4324 = vmatpush1.bf16.msra.mxu0 %v2476
    %4325 = vmatprep.subr.bf16.mxu0 0
    %4326 = vmatpush1.bf16.msra.mxu0 %v2487
    %4327 = vmatprep.subr.bf16.mxu0 0
    %4328 = vmatpush1.bf16.msra.mxu0 %v2498
    %4329 = vmatprep.subr.bf16.mxu0 0
    %4330 = vmatpush1.bf16.msra.mxu0 %v2509
    %4331 = vmatprep.subr.bf16.mxu0 0
    %4332 = vmatpush1.bf16.msra.mxu0 %v2520
    %4333 = vmatprep.subr.bf16.mxu0 0
    %4334 = vmatpush1.bf16.msra.mxu0 %v2531
    %4335 = vmatprep.subr.bf16.mxu0 0
    %4336 = vmatpush1.bf16.msra.mxu0 %v2542
    %4337 = vmatprep.subr.bf16.mxu0 0
    %4338 = vmatpush1.bf16.msra.mxu0 %v2553
    %4339 = vmatprep.subr.bf16.mxu0 0
    %4340 = vmatpush1.bf16.msra.mxu0 %v2564
    %4341 = vmatprep.subr.bf16.mxu0 0
    %4342 = vmatpush1.bf16.msra.mxu0 %v2575
    %4343 = vmatprep.subr.bf16.mxu0 0
    %4344 = vmatpush1.bf16.msra.mxu0 %v2586
    %4345 = vmatprep.mubr.bf16.mxu0 %v92
    %4346 = vmatmul.mubr.bf16.gmra.mrb[0].mxu0 %v91
    %v4347 = vpop.f32.mrb[0].mxu0
    %v4348 = vadd.f32 %v733, %v4347
    %v4349 = vpop.f32.mrb[0].mxu0
    %v4350 = vpop.f32.mrb[0].mxu0
    %v4351 = vpop.f32.mrb[0].mxu0
    %4352 = vdwg.mxu0
    %4353 = vmatprep.subr.bf16.mxu0 0
    %4354 = vmatpush1.bf16.msra.mxu0 %v2597
    %4355 = vmatprep.subr.bf16.mxu0 0
    %4356 = vmatpush1.bf16.msra.mxu0 %v2608
    %4357 = vmatprep.subr.bf16.mxu0 0
    %4358 = vmatpush1.bf16.msra.mxu0 %v2619
    %4359 = vmatprep.subr.bf16.mxu0 0
    %4360 = vmatpush1.bf16.msra.mxu0 %v2630
    %4361 = vmatprep.subr.bf16.mxu0 0
    %4362 = vmatpush1.bf16.msra.mxu0 %v2641
    %4363 = vmatprep.subr.bf16.mxu0 0
    %4364 = vmatpush1.bf16.msra.mxu0 %v2652
    %4365 = vmatprep.subr.bf16.mxu0 0
    %4366 = vmatpush1.bf16.msra.mxu0 %v2663
    %4367 = vmatprep.subr.bf16.mxu0 0
    %4368 = vmatpush1.bf16.msra.mxu0 %v2674
    %4369 = vmatprep.subr.bf16.mxu0 0
    %4370 = vmatpush1.bf16.msra.mxu0 %v2685
    %4371 = vmatprep.subr.bf16.mxu0 0
    %4372 = vmatpush1.bf16.msra.mxu0 %v2696
    %4373 = vmatprep.subr.bf16.mxu0 0
    %4374 = vmatpush1.bf16.msra.mxu0 %v2707
    %4375 = vmatprep.subr.bf16.mxu0 0
    %4376 = vmatpush1.bf16.msra.mxu0 %v2718
    %4377 = vmatprep.subr.bf16.mxu0 0
    %4378 = vmatpush1.bf16.msra.mxu0 %v2729
    %4379 = vmatprep.subr.bf16.mxu0 0
    %4380 = vmatpush1.bf16.msra.mxu0 %v2740
    %4381 = vmatprep.subr.bf16.mxu0 0
    %4382 = vmatpush1.bf16.msra.mxu0 %v2751
    %4383 = vmatprep.subr.bf16.mxu0 0
    %4384 = vmatpush1.bf16.msra.mxu0 %v2762
    %4385 = vmatprep.mubr.bf16.mxu0 %v94
    %4386 = vmatmul.mubr.bf16.gmra.mrb[0].mxu0 %v93
    %v4387 = vpop.f32.mrb[0].mxu0
    %v4388 = vadd.f32 %v4348, %v4387
    %v4389 = vpop.f32.mrb[0].mxu0
    %v4390 = vpop.f32.mrb[0].mxu0
    %v4391 = vpop.f32.mrb[0].mxu0
    %4392 = vdwg.mxu0
    %4393 = vmatprep.subr.bf16.mxu0 0
    %4394 = vmatpush1.bf16.msra.mxu0 %v2773
    %4395 = vmatprep.subr.bf16.mxu0 0
    %4396 = vmatpush1.bf16.msra.mxu0 %v2784
    %4397 = vmatprep.subr.bf16.mxu0 0
    %4398 = vmatpush1.bf16.msra.mxu0 %v2795
    %4399 = vmatprep.subr.bf16.mxu0 0
    %4400 = vmatpush1.bf16.msra.mxu0 %v2806
    %4401 = vmatprep.subr.bf16.mxu0 0
    %4402 = vmatpush1.bf16.msra.mxu0 %v2817
    %4403 = vmatprep.subr.bf16.mxu0 0
    %4404 = vmatpush1.bf16.msra.mxu0 %v2828
    %4405 = vmatprep.subr.bf16.mxu0 0
    %4406 = vmatpush1.bf16.msra.mxu0 %v2839
    %4407 = vmatprep.subr.bf16.mxu0 0
    %4408 = vmatpush1.bf16.msra.mxu0 %v2850
    %4409 = vmatprep.subr.bf16.mxu0 0
    %4410 = vmatpush1.bf16.msra.mxu0 %v2861
    %4411 = vmatprep.subr.bf16.mxu0 0
    %4412 = vmatpush1.bf16.msra.mxu0 %v2872
    %4413 = vmatprep.subr.bf16.mxu0 0
    %4414 = vmatpush1.bf16.msra.mxu0 %v2883
    %4415 = vmatprep.subr.bf16.mxu0 0
    %4416 = vmatpush1.bf16.msra.mxu0 %v2894
    %4417 = vmatprep.subr.bf16.mxu0 0
    %4418 = vmatpush1.bf16.msra.mxu0 %v2905
    %4419 = vmatprep.subr.bf16.mxu0 0
    %4420 = vmatpush1.bf16.msra.mxu0 %v2916
    %4421 = vmatprep.subr.bf16.mxu0 0
    %4422 = vmatpush1.bf16.msra.mxu0 %v2927
    %4423 = vmatprep.subr.bf16.mxu0 0
    %4424 = vmatpush1.bf16.msra.mxu0 %v2938
    %4425 = vmatprep.mubr.bf16.mxu0 %v96
    %4426 = vmatmul.mubr.bf16.gmra.mrb[0].mxu0 %v95
    %v4427 = vpop.f32.mrb[0].mxu0
    %v4428 = vadd.f32 %v4388, %v4427
    %v4429 = vpop.f32.mrb[0].mxu0
    %v4430 = vpop.f32.mrb[0].mxu0
    %v4431 = vpop.f32.mrb[0].mxu0
    %4432 = vdwg.mxu0
    %4433 = vmatprep.subr.bf16.mxu0 0
    %4434 = vmatpush1.bf16.msra.mxu0 %v2949
    %4435 = vmatprep.subr.bf16.mxu0 0
    %4436 = vmatpush1.bf16.msra.mxu0 0
    %4437 = vmatprep.subr.bf16.mxu0 0
    %4438 = vmatpush1.bf16.msra.mxu0 0
    %4439 = vmatprep.subr.bf16.mxu0 0
    %4440 = vmatpush1.bf16.msra.mxu0 0
    %4441 = vmatprep.subr.bf16.mxu0 0
    %4442 = vmatpush1.bf16.msra.mxu0 0
    %4443 = vmatprep.subr.bf16.mxu0 0
    %4444 = vmatpush1.bf16.msra.mxu0 0
    %4445 = vmatprep.subr.bf16.mxu0 0
    %4446 = vmatpush1.bf16.msra.mxu0 0
    %4447 = vmatprep.subr.bf16.mxu0 0
    %4448 = vmatpush1.bf16.msra.mxu0 0
    %4449 = vmatprep.subr.bf16.mxu0 0
    %4450 = vmatpush1.bf16.msra.mxu0 0
    %4451 = vmatprep.subr.bf16.mxu0 0
    %4452 = vmatpush1.bf16.msra.mxu0 0
    %4453 = vmatprep.subr.bf16.mxu0 0
    %4454 = vmatpush1.bf16.msra.mxu0 0
    %4455 = vmatprep.subr.bf16.mxu0 0
    %4456 = vmatpush1.bf16.msra.mxu0 0
    %4457 = vmatprep.subr.bf16.mxu0 0
    %4458 = vmatpush1.bf16.msra.mxu0 0
    %4459 = vmatprep.subr.bf16.mxu0 0
    %4460 = vmatpush1.bf16.msra.mxu0 0
    %4461 = vmatprep.subr.bf16.mxu0 0
    %4462 = vmatpush1.bf16.msra.mxu0 0
    %4463 = vmatprep.subr.bf16.mxu0 0
    %4464 = vmatpush1.bf16.msra.mxu0 0
    %4465 = vmatprep.mubr.bf16.mxu0 0
    %4466 = vmatmul.mubr.bf16.gmra.mrb[0].mxu0 %v3491
    %v4467 = vpop.f32.mrb[0].mxu0
    %v4468 = vadd.f32 %v4428, %v4467
    %v4469 = vpop.f32.mrb[0].mxu0
    %v4470 = vpop.f32.mrb[0].mxu0
    %v4471 = vpop.f32.mrb[0].mxu0
    %4472 = vdwg.mxu0
    %v4473 = vsub.f32 0.0, %v3651
    %v4474 = vsub.f32 0.0, %v3653
    %v4475 = vsub.f32 0.0, %v3815
    %v4476 = vsub.f32 0.0, %v3817
    %v4477 = vsub.f32 0.0, %v3979
    %v4478 = vsub.f32 0.0, %v3981
    %v4479 = vsub.f32 0.0, %v4143
    %v4480 = vsub.f32 0.0, %v4145
    %v4481 = vsub.f32 0.0, %v4307
    %v4482 = vsub.f32 0.0, %v4309
    %v4483 = vsub.f32 0.0, %v4468
    %v4484 = vmul.f32 %v4473, 1.442695
    %v4485 = vpow.pop %v4484
    %v4486 = vmul.f32 %v4474, 1.442695
    %v4487 = vpow.pop %v4486
    %v4488 = vmul.f32 %v4475, 1.442695
    %v4489 = vpow.pop %v4488
    %v4490 = vmul.f32 %v4476, 1.442695
    %v4491 = vpow.pop %v4490
    %v4492 = vmul.f32 %v4477, 1.442695
    %v4493 = vpow.pop %v4492
    %v4494 = vmul.f32 %v4478, 1.442695
    %v4495 = vpow.pop %v4494
    %v4496 = vmul.f32 %v4479, 1.442695
    %v4497 = vpow.pop %v4496
    %v4498 = vmul.f32 %v4480, 1.442695
    %v4499 = vpow.pop %v4498
    %v4500 = vmul.f32 %v4481, 1.442695
    %v4501 = vpow.pop %v4500
    %v4502 = vmul.f32 %v4482, 1.442695
    %v4503 = vpow.pop %v4502
    %v4504 = vmul.f32 %v4483, 1.442695
    %v4505 = vpow.pop %v4504
    %v4506 = vadd.f32 %v4485, 1.0
    %v4507 = vadd.f32 %v4487, 1.0
    %v4508 = vadd.f32 %v4489, 1.0
    %v4509 = vadd.f32 %v4491, 1.0
    %v4510 = vadd.f32 %v4493, 1.0
    %v4511 = vadd.f32 %v4495, 1.0
    %v4512 = vadd.f32 %v4497, 1.0
    %v4513 = vadd.f32 %v4499, 1.0
    %v4514 = vadd.f32 %v4501, 1.0
    %v4515 = vadd.f32 %v4503, 1.0
    %v4516 = vadd.f32 %v4505, 1.0
    %v4517 = vrcp.pop %v4506
    %v4518 = vrcp.pop %v4507
    %v4519 = vrcp.pop %v4508
    %v4520 = vrcp.pop %v4509
    %v4521 = vrcp.pop %v4510
    %v4522 = vrcp.pop %v4511
    %v4523 = vrcp.pop %v4512
    %v4524 = vrcp.pop %v4513
    %v4525 = vrcp.pop %v4514
    %v4526 = vrcp.pop %v4515
    %v4527 = vrcp.pop %v4516
    %v4528 = vpack.c.bf16 %v4517, %v4517
    %v4529 = vpack.c.bf16 %v4518, %v4518
    %v4530 = vpack.c.bf16 %v4519, %v4519
    %v4531 = vpack.c.bf16 %v4520, %v4520
    %v4532 = vpack.c.bf16 %v4521, %v4521
    %v4533 = vpack.c.bf16 %v4522, %v4522
    %v4534 = vpack.c.bf16 %v4523, %v4523
    %v4535 = vpack.c.bf16 %v4524, %v4524
    %v4536 = vpack.c.bf16 %v4525, %v4525
    %v4537 = vpack.c.bf16 %v4526, %v4526
    %v4538 = vpack.c.bf16 %v4527, %v4527
    %v4539 = vld [vmem:[#allocation8] sm:$0xf]
    %v4540 = vld [vmem:[#allocation8 + $0x4] sm:$0xf]
    %v4541 = vld [vmem:[#allocation8 + $0x8] sm:$0xf]
    %v4542 = vld [vmem:[#allocation8 + $0xc] sm:$0xf]
    %v4543 = vld [vmem:[#allocation8 + $0x10] sm:$0xf]
    %v4544 = vld [vmem:[#allocation8 + $0x14] sm:$0xf]
    %v4545 = vld [vmem:[#allocation8 + $0x18] sm:$0xf]
    %v4546 = vld [vmem:[#allocation8 + $0x1c] sm:$0xf]
    %v4547 = vld [vmem:[#allocation8 + $0x20] sm:$0xf]
    %v4548 = vld [vmem:[#allocation8 + $0x24] sm:$0xf]
    %v4549 = vld [vmem:[#allocation8 + $0x28] sm:$0xf]
    %v4550 = vld [vmem:[#allocation8 + $0x2c] sm:$0xf]
    %v4551 = vld [vmem:[#allocation8 + $0x30] sm:$0xf]
    %v4552 = vld [vmem:[#allocation8 + $0x34] sm:$0xf]
    %v4553 = vld [vmem:[#allocation8 + $0x38] sm:$0xf]
    %v4554 = vld [vmem:[#allocation8 + $0x3c] sm:$0xf]
    %v4555 = vld [vmem:[#allocation8 + $0x40] sm:$0xf]
    %v4556 = vld [vmem:[#allocation8 + $0x44] sm:$0xf]
    %v4557 = vld [vmem:[#allocation8 + $0x48] sm:$0xf]
    %v4558 = vld [vmem:[#allocation8 + $0x4c] sm:$0xf]
    %v4559 = vld [vmem:[#allocation8 + $0x50] sm:$0xf]
    %v4560 = vld [vmem:[#allocation8 + $0x54] sm:$0xf]
    %v4561 = vld [vmem:[#allocation8 + $0x58] sm:$0xf]
    %v4562 = vld [vmem:[#allocation8 + $0x5c] sm:$0xf]
    %v4563 = vld [vmem:[#allocation8 + $0x60] sm:$0xf]
    %v4564 = vld [vmem:[#allocation8 + $0x64] sm:$0xf]
    %v4565 = vld [vmem:[#allocation8 + $0x68] sm:$0xf]
    %v4566 = vld [vmem:[#allocation8 + $0x6c] sm:$0xf]
    %v4567 = vld [vmem:[#allocation8 + $0x70] sm:$0xf]
    %v4568 = vld [vmem:[#allocation8 + $0x74] sm:$0xf]
    %v4569 = vld [vmem:[#allocation8 + $0x78] sm:$0xf]
    %v4570 = vld [vmem:[#allocation8 + $0x7c] sm:$0xf]
    %v4571 = vld [vmem:[#allocation8 + $0x80] sm:$0xf]
    %v4572 = vld [vmem:[#allocation8 + $0x84] sm:$0xf]
    %v4573 = vld [vmem:[#allocation8 + $0x88] sm:$0xf]
    %v4574 = vld [vmem:[#allocation8 + $0x8c] sm:$0xf]
    %v4575 = vld [vmem:[#allocation8 + $0x90] sm:$0xf]
    %v4576 = vld [vmem:[#allocation8 + $0x94] sm:$0xf]
    %v4577 = vld [vmem:[#allocation8 + $0x98] sm:$0xf]
    %v4578 = vld [vmem:[#allocation8 + $0x9c] sm:$0xf]
    %v4579 = vld [vmem:[#allocation8 + $0xa0] sm:$0xf]
    %v4580 = vld [vmem:[#allocation8 + $0xa4] sm:$0xf]
    %v4581 = vld [vmem:[#allocation8 + $0xa8] sm:$0xf]
    %v4582 = vld [vmem:[#allocation8 + $0xac] sm:$0xf]
    %v4583 = vld [vmem:[#allocation8 + $0xb0] sm:$0xf]
    %v4584 = vld [vmem:[#allocation8 + $0xb4] sm:$0xf]
    %v4585 = vld [vmem:[#allocation8 + $0xb8] sm:$0xf]
    %v4586 = vld [vmem:[#allocation8 + $0xbc] sm:$0xf]
    %v4587 = vld [vmem:[#allocation8 + $0xc0] sm:$0xf]
    %v4588 = vld [vmem:[#allocation8 + $0xc4] sm:$0xf]
    %v4589 = vld [vmem:[#allocation8 + $0xc8] sm:$0xf]
    %v4590 = vld [vmem:[#allocation8 + $0xcc] sm:$0xf]
    %v4591 = vld [vmem:[#allocation8 + $0xd0] sm:$0xf]
    %v4592 = vld [vmem:[#allocation8 + $0xd4] sm:$0xf]
    %v4593 = vld [vmem:[#allocation8 + $0xd8] sm:$0xf]
    %v4594 = vld [vmem:[#allocation8 + $0xdc] sm:$0xf]
    %v4595 = vld [vmem:[#allocation8 + $0xe0] sm:$0xf]
    %v4596 = vld [vmem:[#allocation8 + $0xe4] sm:$0xf]
    %v4597 = vld [vmem:[#allocation8 + $0xe8] sm:$0xf]
    %v4598 = vld [vmem:[#allocation8 + $0xec] sm:$0xf]
    %v4599 = vld [vmem:[#allocation8 + $0xf0] sm:$0xf]
    %v4600 = vld [vmem:[#allocation8 + $0xf4] sm:$0xf]
    %v4601 = vld [vmem:[#allocation8 + $0xf8] sm:$0xf]
    %v4602 = vld [vmem:[#allocation8 + $0xfc] sm:$0xf]
    %v4603 = vld [vmem:[#allocation8 + $0x100] sm:$0xf]
    %v4604 = vld [vmem:[#allocation8 + $0x104] sm:$0xf]
    %v4605 = vld [vmem:[#allocation8 + $0x108] sm:$0xf]
    %v4606 = vld [vmem:[#allocation8 + $0x10c] sm:$0xf]
    %v4607 = vld [vmem:[#allocation8 + $0x110] sm:$0xf]
    %v4608 = vld [vmem:[#allocation8 + $0x114] sm:$0xf]
    %v4609 = vld [vmem:[#allocation8 + $0x118] sm:$0xf]
    %v4610 = vld [vmem:[#allocation8 + $0x11c] sm:$0xf]
    %v4611 = vld [vmem:[#allocation8 + $0x120] sm:$0xf]
    %v4612 = vld [vmem:[#allocation8 + $0x124] sm:$0xf]
    %v4613 = vld [vmem:[#allocation8 + $0x128] sm:$0xf]
    %v4614 = vld [vmem:[#allocation8 + $0x12c] sm:$0xf]
    %v4615 = vld [vmem:[#allocation8 + $0x130] sm:$0xf]
    %v4616 = vld [vmem:[#allocation8 + $0x134] sm:$0xf]
    %v4617 = vld [vmem:[#allocation8 + $0x138] sm:$0xf]
    %v4618 = vld [vmem:[#allocation8 + $0x13c] sm:$0xf]
    %v4619 = vld [vmem:[#allocation8 + $0x140] sm:$0xf]
    %v4620 = vld [vmem:[#allocation8 + $0x144] sm:$0xf]
    %v4621 = vld [vmem:[#allocation8 + $0x148] sm:$0xf]
    %v4622 = vld [vmem:[#allocation8 + $0x14c] sm:$0xf]
    %v4623 = vld [vmem:[#allocation8 + $0x150] sm:$0xf]
    %v4624 = vld [vmem:[#allocation8 + $0x154] sm:$0xf]
    %v4625 = vld [vmem:[#allocation8 + $0x158] sm:$0xf]
    %v4626 = vld [vmem:[#allocation8 + $0x15c] sm:$0xf]
    %v4627 = vld [vmem:[#allocation8 + $0x160] sm:$0xf]
    %v4628 = vld [vmem:[#allocation8 + $0x164] sm:$0xf]
    %v4629 = vld [vmem:[#allocation8 + $0x168] sm:$0xf]
    %v4630 = vld [vmem:[#allocation8 + $0x16c] sm:$0xf]
    %v4631 = vld [vmem:[#allocation8 + $0x170] sm:$0xf]
    %v4632 = vld [vmem:[#allocation8 + $0x174] sm:$0xf]
    %v4633 = vld [vmem:[#allocation8 + $0x178] sm:$0xf]
    %v4634 = vld [vmem:[#allocation8 + $0x17c] sm:$0xf]
    %v4635 = vld [vmem:[#allocation8 + $0x180] sm:$0xf]
    %v4636 = vld [vmem:[#allocation8 + $0x184] sm:$0xf]
    %v4637 = vld [vmem:[#allocation8 + $0x188] sm:$0xf]
    %v4638 = vld [vmem:[#allocation8 + $0x18c] sm:$0xf]
    %v4639 = vld [vmem:[#allocation8 + $0x190] sm:$0xf]
    %v4640 = vld [vmem:[#allocation8 + $0x194] sm:$0xf]
    %v4641 = vld [vmem:[#allocation8 + $0x198] sm:$0xf]
    %v4642 = vld [vmem:[#allocation8 + $0x19c] sm:$0xf]
    %v4643 = vld [vmem:[#allocation8 + $0x1a0] sm:$0xf]
    %v4644 = vld [vmem:[#allocation8 + $0x1a4] sm:$0xf]
    %v4645 = vld [vmem:[#allocation8 + $0x1a8] sm:$0xf]
    %v4646 = vld [vmem:[#allocation8 + $0x1ac] sm:$0xf]
    %v4647 = vld [vmem:[#allocation8 + $0x1b0] sm:$0xf]
    %v4648 = vld [vmem:[#allocation8 + $0x1b4] sm:$0xf]
    %v4649 = vld [vmem:[#allocation8 + $0x1b8] sm:$0xf]
    %v4650 = vld [vmem:[#allocation8 + $0x1bc] sm:$0xf]
    %v4651 = vld [vmem:[#allocation8 + $0x1c0] sm:$0xf]
    %v4652 = vld [vmem:[#allocation8 + $0x1c4] sm:$0xf]
    %v4653 = vld [vmem:[#allocation8 + $0x1c8] sm:$0xf]
    %v4654 = vld [vmem:[#allocation8 + $0x1cc] sm:$0xf]
    %v4655 = vld [vmem:[#allocation8 + $0x1d0] sm:$0xf]
    %v4656 = vld [vmem:[#allocation8 + $0x1d4] sm:$0xf]
    %v4657 = vld [vmem:[#allocation8 + $0x1d8] sm:$0xf]
    %v4658 = vld [vmem:[#allocation8 + $0x1dc] sm:$0xf]
    %v4659 = vld [vmem:[#allocation8 + $0x1e0] sm:$0xf]
    %v4660 = vld [vmem:[#allocation8 + $0x1e4] sm:$0xf]
    %v4661 = vld [vmem:[#allocation8 + $0x1e8] sm:$0xf]
    %v4662 = vld [vmem:[#allocation8 + $0x1ec] sm:$0xf]
    %v4663 = vld [vmem:[#allocation8 + $0x1f0] sm:$0xf]
    %v4664 = vld [vmem:[#allocation8 + $0x1f4] sm:$0xf]
    %v4665 = vld [vmem:[#allocation8 + $0x1f8] sm:$0xf]
    %v4666 = vld [vmem:[#allocation8 + $0x1fc] sm:$0xf]
    %v4667 = vld [vmem:[#allocation8 + $0x200] sm:$0xf]
    %v4668 = vld [vmem:[#allocation8 + $0x204] sm:$0xf]
    %v4669 = vld [vmem:[#allocation8 + $0x208] sm:$0xf]
    %v4670 = vld [vmem:[#allocation8 + $0x20c] sm:$0xf]
    %v4671 = vld [vmem:[#allocation8 + $0x210] sm:$0xf]
    %v4672 = vld [vmem:[#allocation8 + $0x214] sm:$0xf]
    %v4673 = vld [vmem:[#allocation8 + $0x218] sm:$0xf]
    %v4674 = vld [vmem:[#allocation8 + $0x21c] sm:$0xf]
    %v4675 = vld [vmem:[#allocation8 + $0x220] sm:$0xf]
    %v4676 = vld [vmem:[#allocation8 + $0x224] sm:$0xf]
    %v4677 = vld [vmem:[#allocation8 + $0x228] sm:$0xf]
    %v4678 = vld [vmem:[#allocation8 + $0x22c] sm:$0xf]
    %v4679 = vld [vmem:[#allocation8 + $0x230] sm:$0xf]
    %v4680 = vld [vmem:[#allocation8 + $0x234] sm:$0xf]
    %v4681 = vld [vmem:[#allocation8 + $0x238] sm:$0xf]
    %v4682 = vld [vmem:[#allocation8 + $0x23c] sm:$0xf]
    %v4683 = vld [vmem:[#allocation8 + $0x240] sm:$0xf]
    %v4684 = vld [vmem:[#allocation8 + $0x244] sm:$0xf]
    %v4685 = vld [vmem:[#allocation8 + $0x248] sm:$0xf]
    %v4686 = vld [vmem:[#allocation8 + $0x24c] sm:$0xf]
    %v4687 = vld [vmem:[#allocation8 + $0x250] sm:$0xf]
    %v4688 = vld [vmem:[#allocation8 + $0x254] sm:$0xf]
    %v4689 = vld [vmem:[#allocation8 + $0x258] sm:$0xf]
    %v4690 = vld [vmem:[#allocation8 + $0x25c] sm:$0xf]
    %v4691 = vld [vmem:[#allocation8 + $0x260] sm:$0xf]
    %v4692 = vld [vmem:[#allocation8 + $0x264] sm:$0xf]
    %v4693 = vld [vmem:[#allocation8 + $0x268] sm:$0xf]
    %v4694 = vld [vmem:[#allocation8 + $0x26c] sm:$0xf]
    %v4695 = vld [vmem:[#allocation8 + $0x270] sm:$0xf]
    %v4696 = vld [vmem:[#allocation8 + $0x274] sm:$0xf]
    %v4697 = vld [vmem:[#allocation8 + $0x278] sm:$0xf]
    %v4698 = vld [vmem:[#allocation8 + $0x27c] sm:$0xf]
    %v4699 = vld [vmem:[#allocation8 + $0x280] sm:$0xf]
    %v4700 = vld [vmem:[#allocation8 + $0x284] sm:$0xf]
    %v4701 = vld [vmem:[#allocation8 + $0x288] sm:$0xf]
    %v4702 = vld [vmem:[#allocation8 + $0x28c] sm:$0xf]
    %v4703 = vld [vmem:[#allocation8 + $0x290] sm:$0xf]
    %v4704 = vld [vmem:[#allocation8 + $0x294] sm:$0xf]
    %v4705 = vld [vmem:[#allocation8 + $0x298] sm:$0xf]
    %v4706 = vld [vmem:[#allocation8 + $0x29c] sm:$0xf]
    %v4707 = vld [vmem:[#allocation8 + $0x2a0] sm:$0xf]
    %v4708 = vld [vmem:[#allocation8 + $0x2a4] sm:$0xf]
    %v4709 = vld [vmem:[#allocation8 + $0x2a8] sm:$0xf]
    %v4710 = vld [vmem:[#allocation8 + $0x2ac] sm:$0xf]
    %v4711 = vld [vmem:[#allocation8 + $0x2b0] sm:$0xf]
    %v4712 = vld [vmem:[#allocation8 + $0x2b4] sm:$0xf]
    %v4713 = vld [vmem:[#allocation8 + $0x2b8] sm:$0xf]
    %v4714 = vld [vmem:[#allocation8 + $0x2bc] sm:$0xf]
    %v4715 = vld [vmem:[#allocation10] sm:$0x1]
    %v4717 = vlaneseq
    %v4718 = vshrl.u32 %v4717, 7
    %v4719 = vsub.s32 0, %v4718
    %v4720 = vrot.slane %v4715, %v4719
    %v4898 = vunpack.c.l.b16 %v4539
    %v4899 = vunpack.c.l.b16 %v4540
    %v4900 = vunpack.c.l.b16 %v4541
    %v4901 = vunpack.c.l.b16 %v4542
    %v4902 = vunpack.c.l.b16 %v4543
    %v4903 = vunpack.c.l.b16 %v4544
    %v4904 = vunpack.c.l.b16 %v4545
    %v4905 = vunpack.c.l.b16 %v4546
    %v4906 = vunpack.c.l.b16 %v4547
    %v4907 = vunpack.c.l.b16 %v4548
    %v4908 = vunpack.c.l.b16 %v4549
    %v4909 = vunpack.c.l.b16 %v4550
    %v4910 = vunpack.c.l.b16 %v4551
    %v4911 = vunpack.c.l.b16 %v4552
    %v4912 = vunpack.c.l.b16 %v4553
    %v4913 = vunpack.c.l.b16 %v4554
    %v4914 = vunpack.c.l.b16 %v4555
    %v4915 = vunpack.c.l.b16 %v4556
    %v4916 = vunpack.c.l.b16 %v4557
    %v4917 = vunpack.c.l.b16 %v4558
    %v4918 = vunpack.c.l.b16 %v4559
    %v4919 = vunpack.c.l.b16 %v4560
    %v4920 = vunpack.c.l.b16 %v4561
    %v4921 = vunpack.c.l.b16 %v4562
    %v4922 = vunpack.c.l.b16 %v4563
    %v4923 = vunpack.c.l.b16 %v4564
    %v4924 = vunpack.c.l.b16 %v4565
    %v4925 = vunpack.c.l.b16 %v4566
    %v4926 = vunpack.c.l.b16 %v4567
    %v4927 = vunpack.c.l.b16 %v4568
    %v4928 = vunpack.c.l.b16 %v4569
    %v4929 = vunpack.c.l.b16 %v4570
    %v4930 = vunpack.c.l.b16 %v4571
    %v4931 = vunpack.c.l.b16 %v4572
    %v4932 = vunpack.c.l.b16 %v4573
    %v4933 = vunpack.c.l.b16 %v4574
    %v4934 = vunpack.c.l.b16 %v4575
    %v4935 = vunpack.c.l.b16 %v4576
    %v4936 = vunpack.c.l.b16 %v4577
    %v4937 = vunpack.c.l.b16 %v4578
    %v4938 = vunpack.c.l.b16 %v4579
    %v4939 = vunpack.c.l.b16 %v4580
    %v4940 = vunpack.c.l.b16 %v4581
    %v4941 = vunpack.c.l.b16 %v4582
    %v4942 = vunpack.c.l.b16 %v4583
    %v4943 = vunpack.c.l.b16 %v4584
    %v4944 = vunpack.c.l.b16 %v4585
    %v4945 = vunpack.c.l.b16 %v4586
    %v4946 = vunpack.c.l.b16 %v4587
    %v4947 = vunpack.c.l.b16 %v4588
    %v4948 = vunpack.c.l.b16 %v4589
    %v4949 = vunpack.c.l.b16 %v4590
    %v4950 = vunpack.c.l.b16 %v4591
    %v4951 = vunpack.c.l.b16 %v4592
    %v4952 = vunpack.c.l.b16 %v4593
    %v4953 = vunpack.c.l.b16 %v4594
    %v4954 = vunpack.c.l.b16 %v4595
    %v4955 = vunpack.c.l.b16 %v4596
    %v4956 = vunpack.c.l.b16 %v4597
    %v4957 = vunpack.c.l.b16 %v4598
    %v4958 = vunpack.c.l.b16 %v4599
    %v4959 = vunpack.c.l.b16 %v4600
    %v4960 = vunpack.c.l.b16 %v4601
    %v4961 = vunpack.c.l.b16 %v4602
    %v4962 = vunpack.c.l.b16 %v4603
    %v4963 = vunpack.c.l.b16 %v4604
    %v4964 = vunpack.c.l.b16 %v4605
    %v4965 = vunpack.c.l.b16 %v4606
    %v4966 = vunpack.c.l.b16 %v4607
    %v4967 = vunpack.c.l.b16 %v4608
    %v4968 = vunpack.c.l.b16 %v4609
    %v4969 = vunpack.c.l.b16 %v4610
    %v4970 = vunpack.c.l.b16 %v4611
    %v4971 = vunpack.c.l.b16 %v4612
    %v4972 = vunpack.c.l.b16 %v4613
    %v4973 = vunpack.c.l.b16 %v4614
    %v4974 = vunpack.c.l.b16 %v4615
    %v4975 = vunpack.c.l.b16 %v4616
    %v4976 = vunpack.c.l.b16 %v4617
    %v4977 = vunpack.c.l.b16 %v4618
    %v4978 = vunpack.c.l.b16 %v4619
    %v4979 = vunpack.c.l.b16 %v4620
    %v4980 = vunpack.c.l.b16 %v4621
    %v4981 = vunpack.c.l.b16 %v4622
    %v4982 = vunpack.c.l.b16 %v4623
    %v4983 = vunpack.c.l.b16 %v4624
    %v4984 = vunpack.c.l.b16 %v4625
    %v4985 = vunpack.c.l.b16 %v4626
    %v4986 = vunpack.c.l.b16 %v4627
    %v4987 = vunpack.c.l.b16 %v4628
    %v4988 = vunpack.c.l.b16 %v4629
    %v4989 = vunpack.c.l.b16 %v4630
    %v4990 = vunpack.c.l.b16 %v4631
    %v4991 = vunpack.c.l.b16 %v4632
    %v4992 = vunpack.c.l.b16 %v4633
    %v4993 = vunpack.c.l.b16 %v4634
    %v4994 = vunpack.c.l.b16 %v4635
    %v4995 = vunpack.c.l.b16 %v4636
    %v4996 = vunpack.c.l.b16 %v4637
    %v4997 = vunpack.c.l.b16 %v4638
    %v4998 = vunpack.c.l.b16 %v4639
    %v4999 = vunpack.c.l.b16 %v4640
    %v5000 = vunpack.c.l.b16 %v4641
    %v5001 = vunpack.c.l.b16 %v4642
    %v5002 = vunpack.c.l.b16 %v4643
    %v5003 = vunpack.c.l.b16 %v4644
    %v5004 = vunpack.c.l.b16 %v4645
    %v5005 = vunpack.c.l.b16 %v4646
    %v5006 = vunpack.c.l.b16 %v4647
    %v5007 = vunpack.c.l.b16 %v4648
    %v5008 = vunpack.c.l.b16 %v4649
    %v5009 = vunpack.c.l.b16 %v4650
    %v5010 = vunpack.c.l.b16 %v4651
    %v5011 = vunpack.c.l.b16 %v4652
    %v5012 = vunpack.c.l.b16 %v4653
    %v5013 = vunpack.c.l.b16 %v4654
    %v5014 = vunpack.c.l.b16 %v4655
    %v5015 = vunpack.c.l.b16 %v4656
    %v5016 = vunpack.c.l.b16 %v4657
    %v5017 = vunpack.c.l.b16 %v4658
    %v5018 = vunpack.c.l.b16 %v4659
    %v5019 = vunpack.c.l.b16 %v4660
    %v5020 = vunpack.c.l.b16 %v4661
    %v5021 = vunpack.c.l.b16 %v4662
    %v5022 = vunpack.c.l.b16 %v4663
    %v5023 = vunpack.c.l.b16 %v4664
    %v5024 = vunpack.c.l.b16 %v4665
    %v5025 = vunpack.c.l.b16 %v4666
    %v5026 = vunpack.c.l.b16 %v4667
    %v5027 = vunpack.c.l.b16 %v4668
    %v5028 = vunpack.c.l.b16 %v4669
    %v5029 = vunpack.c.l.b16 %v4670
    %v5030 = vunpack.c.l.b16 %v4671
    %v5031 = vunpack.c.l.b16 %v4672
    %v5032 = vunpack.c.l.b16 %v4673
    %v5033 = vunpack.c.l.b16 %v4674
    %v5034 = vunpack.c.l.b16 %v4675
    %v5035 = vunpack.c.l.b16 %v4676
    %v5036 = vunpack.c.l.b16 %v4677
    %v5037 = vunpack.c.l.b16 %v4678
    %v5038 = vunpack.c.l.b16 %v4679
    %v5039 = vunpack.c.l.b16 %v4680
    %v5040 = vunpack.c.l.b16 %v4681
    %v5041 = vunpack.c.l.b16 %v4682
    %v5042 = vunpack.c.l.b16 %v4683
    %v5043 = vunpack.c.l.b16 %v4684
    %v5044 = vunpack.c.l.b16 %v4685
    %v5045 = vunpack.c.l.b16 %v4686
    %v5046 = vunpack.c.l.b16 %v4687
    %v5047 = vunpack.c.l.b16 %v4688
    %v5048 = vunpack.c.l.b16 %v4689
    %v5049 = vunpack.c.l.b16 %v4690
    %v5050 = vunpack.c.l.b16 %v4691
    %v5051 = vunpack.c.l.b16 %v4692
    %v5052 = vunpack.c.l.b16 %v4693
    %v5053 = vunpack.c.l.b16 %v4694
    %v5054 = vunpack.c.l.b16 %v4695
    %v5055 = vunpack.c.l.b16 %v4696
    %v5056 = vunpack.c.l.b16 %v4697
    %v5057 = vunpack.c.l.b16 %v4698
    %v5058 = vunpack.c.l.b16 %v4699
    %v5059 = vunpack.c.l.b16 %v4700
    %v5060 = vunpack.c.l.b16 %v4701
    %v5061 = vunpack.c.l.b16 %v4702
    %v5062 = vunpack.c.l.b16 %v4703
    %v5063 = vunpack.c.l.b16 %v4704
    %v5064 = vunpack.c.l.b16 %v4705
    %v5065 = vunpack.c.l.b16 %v4706
    %v5066 = vunpack.c.l.b16 %v4707
    %v5067 = vunpack.c.l.b16 %v4708
    %v5068 = vunpack.c.l.b16 %v4709
    %v5069 = vunpack.c.l.b16 %v4710
    %v5070 = vunpack.c.l.b16 %v4711
    %v5071 = vunpack.c.l.b16 %v4712
    %v5072 = vunpack.c.l.b16 %v4713
    %v5073 = vunpack.c.l.b16 %v4714
    %v5074 = vpack.c.b16 %v4899, %v4898
    %v5075 = vpack.c.b16 %v4901, %v4900
    %v5076 = vpack.c.b16 %v4903, %v4902
    %v5077 = vpack.c.b16 %v4905, %v4904
    %v5078 = vpack.c.b16 %v4907, %v4906
    %v5079 = vpack.c.b16 %v4909, %v4908
    %v5080 = vpack.c.b16 %v4911, %v4910
    %v5081 = vpack.c.b16 %v4913, %v4912
    %v5082 = vpack.c.b16 %v4915, %v4914
    %v5083 = vpack.c.b16 %v4917, %v4916
    %v5084 = vpack.c.b16 %v4919, %v4918
    %v5085 = vpack.c.b16 %v4921, %v4920
    %v5086 = vpack.c.b16 %v4923, %v4922
    %v5087 = vpack.c.b16 %v4925, %v4924
    %v5088 = vpack.c.b16 %v4927, %v4926
    %v5089 = vpack.c.b16 %v4929, %v4928
    %v5090 = vpack.c.b16 %v4931, %v4930
    %v5091 = vpack.c.b16 %v4933, %v4932
    %v5092 = vpack.c.b16 %v4935, %v4934
    %v5093 = vpack.c.b16 %v4937, %v4936
    %v5094 = vpack.c.b16 %v4939, %v4938
    %v5095 = vpack.c.b16 %v4941, %v4940
    %v5096 = vpack.c.b16 %v4943, %v4942
    %v5097 = vpack.c.b16 %v4945, %v4944
    %v5098 = vpack.c.b16 %v4947, %v4946
    %v5099 = vpack.c.b16 %v4949, %v4948
    %v5100 = vpack.c.b16 %v4951, %v4950
    %v5101 = vpack.c.b16 %v4953, %v4952
    %v5102 = vpack.c.b16 %v4955, %v4954
    %v5103 = vpack.c.b16 %v4957, %v4956
    %v5104 = vpack.c.b16 %v4959, %v4958
    %v5105 = vpack.c.b16 %v4961, %v4960
    %v5106 = vpack.c.b16 %v4963, %v4962
    %v5107 = vpack.c.b16 %v4965, %v4964
    %v5108 = vpack.c.b16 %v4967, %v4966
    %v5109 = vpack.c.b16 %v4969, %v4968
    %v5110 = vpack.c.b16 %v4971, %v4970
    %v5111 = vpack.c.b16 %v4973, %v4972
    %v5112 = vpack.c.b16 %v4975, %v4974
    %v5113 = vpack.c.b16 %v4977, %v4976
    %v5114 = vpack.c.b16 %v4979, %v4978
    %v5115 = vpack.c.b16 %v4981, %v4980
    %v5116 = vpack.c.b16 %v4983, %v4982
    %v5117 = vpack.c.b16 %v4985, %v4984
    %v5118 = vpack.c.b16 %v4987, %v4986
    %v5119 = vpack.c.b16 %v4989, %v4988
    %v5120 = vpack.c.b16 %v4991, %v4990
    %v5121 = vpack.c.b16 %v4993, %v4992
    %v5122 = vpack.c.b16 %v4995, %v4994
    %v5123 = vpack.c.b16 %v4997, %v4996
    %v5124 = vpack.c.b16 %v4999, %v4998
    %v5125 = vpack.c.b16 %v5001, %v5000
    %v5126 = vpack.c.b16 %v5003, %v5002
    %v5127 = vpack.c.b16 %v5005, %v5004
    %v5128 = vpack.c.b16 %v5007, %v5006
    %v5129 = vpack.c.b16 %v5009, %v5008
    %v5130 = vpack.c.b16 %v5011, %v5010
    %v5131 = vpack.c.b16 %v5013, %v5012
    %v5132 = vpack.c.b16 %v5015, %v5014
    %v5133 = vpack.c.b16 %v5017, %v5016
    %v5134 = vpack.c.b16 %v5019, %v5018
    %v5135 = vpack.c.b16 %v5021, %v5020
    %v5136 = vpack.c.b16 %v5023, %v5022
    %v5137 = vpack.c.b16 %v5025, %v5024
    %v5138 = vpack.c.b16 %v5027, %v5026
    %v5139 = vpack.c.b16 %v5029, %v5028
    %v5140 = vpack.c.b16 %v5031, %v5030
    %v5141 = vpack.c.b16 %v5033, %v5032
    %v5142 = vpack.c.b16 %v5035, %v5034
    %v5143 = vpack.c.b16 %v5037, %v5036
    %v5144 = vpack.c.b16 %v5039, %v5038
    %v5145 = vpack.c.b16 %v5041, %v5040
    %v5146 = vpack.c.b16 %v5043, %v5042
    %v5147 = vpack.c.b16 %v5045, %v5044
    %v5148 = vpack.c.b16 %v5047, %v5046
    %v5149 = vpack.c.b16 %v5049, %v5048
    %v5150 = vpack.c.b16 %v5051, %v5050
    %v5151 = vpack.c.b16 %v5053, %v5052
    %v5152 = vpack.c.b16 %v5055, %v5054
    %v5153 = vpack.c.b16 %v5057, %v5056
    %v5154 = vpack.c.b16 %v5059, %v5058
    %v5155 = vpack.c.b16 %v5061, %v5060
    %v5156 = vpack.c.b16 %v5063, %v5062
    %v5157 = vpack.c.b16 %v5065, %v5064
    %v5158 = vpack.c.b16 %v5067, %v5066
    %v5159 = vpack.c.b16 %v5069, %v5068
    %v5160 = vpack.c.b16 %v5071, %v5070
    %v5161 = vpack.c.b16 %v5073, %v5072
    %5250 = vmatprep.subr.bf16.mxu0 0
    %5251 = vmatpush1.bf16.msra.mxu0 %v5074
    %5252 = vmatprep.subr.bf16.mxu0 0
    %5253 = vmatpush1.bf16.msra.mxu0 %v5075
    %5254 = vmatprep.subr.bf16.mxu0 0
    %5255 = vmatpush1.bf16.msra.mxu0 %v5076
    %5256 = vmatprep.subr.bf16.mxu0 0
    %5257 = vmatpush1.bf16.msra.mxu0 %v5077
    %5258 = vmatprep.subr.bf16.mxu0 0
    %5259 = vmatpush1.bf16.msra.mxu0 %v5078
    %5260 = vmatprep.subr.bf16.mxu0 0
    %5261 = vmatpush1.bf16.msra.mxu0 %v5079
    %5262 = vmatprep.subr.bf16.mxu0 0
    %5263 = vmatpush1.bf16.msra.mxu0 %v5080
    %5264 = vmatprep.subr.bf16.mxu0 0
    %5265 = vmatpush1.bf16.msra.mxu0 %v5081
    %5266 = vmatprep.subr.bf16.mxu0 0
    %5267 = vmatpush1.bf16.msra.mxu0 %v5082
    %5268 = vmatprep.subr.bf16.mxu0 0
    %5269 = vmatpush1.bf16.msra.mxu0 %v5083
    %5270 = vmatprep.subr.bf16.mxu0 0
    %5271 = vmatpush1.bf16.msra.mxu0 %v5084
    %5272 = vmatprep.subr.bf16.mxu0 0
    %5273 = vmatpush1.bf16.msra.mxu0 %v5085
    %5274 = vmatprep.subr.bf16.mxu0 0
    %5275 = vmatpush1.bf16.msra.mxu0 %v5086
    %5276 = vmatprep.subr.bf16.mxu0 0
    %5277 = vmatpush1.bf16.msra.mxu0 %v5087
    %5278 = vmatprep.subr.bf16.mxu0 0
    %5279 = vmatpush1.bf16.msra.mxu0 %v5088
    %5280 = vmatprep.subr.bf16.mxu0 0
    %5281 = vmatpush1.bf16.msra.mxu0 %v5089
    %5282 = vmatprep.mubr.bf16.mxu0 %v4529
    %5283 = vmatmul.mubr.bf16.gmra.mrb[0].mxu0 %v4528
    %v5284 = vpop.f32.mrb[0].mxu0
    %v5285 = vadd.f32 %v4720, %v5284
    %v5286 = vpop.f32.mrb[0].mxu0
    %v5287 = vpop.f32.mrb[0].mxu0
    %v5288 = vpop.f32.mrb[0].mxu0
    %5289 = vdwg.mxu0
    %5290 = vmatprep.subr.bf16.mxu0 0
    %5291 = vmatpush1.bf16.msra.mxu0 %v5090
    %5292 = vmatprep.subr.bf16.mxu0 0
    %5293 = vmatpush1.bf16.msra.mxu0 %v5091
    %5294 = vmatprep.subr.bf16.mxu0 0
    %5295 = vmatpush1.bf16.msra.mxu0 %v5092
    %5296 = vmatprep.subr.bf16.mxu0 0
    %5297 = vmatpush1.bf16.msra.mxu0 %v5093
    %5298 = vmatprep.subr.bf16.mxu0 0
    %5299 = vmatpush1.bf16.msra.mxu0 %v5094
    %5300 = vmatprep.subr.bf16.mxu0 0
    %5301 = vmatpush1.bf16.msra.mxu0 %v5095
    %5302 = vmatprep.subr.bf16.mxu0 0
    %5303 = vmatpush1.bf16.msra.mxu0 %v5096
    %5304 = vmatprep.subr.bf16.mxu0 0
    %5305 = vmatpush1.bf16.msra.mxu0 %v5097
    %5306 = vmatprep.subr.bf16.mxu0 0
    %5307 = vmatpush1.bf16.msra.mxu0 %v5098
    %5308 = vmatprep.subr.bf16.mxu0 0
    %5309 = vmatpush1.bf16.msra.mxu0 %v5099
    %5310 = vmatprep.subr.bf16.mxu0 0
    %5311 = vmatpush1.bf16.msra.mxu0 %v5100
    %5312 = vmatprep.subr.bf16.mxu0 0
    %5313 = vmatpush1.bf16.msra.mxu0 %v5101
    %5314 = vmatprep.subr.bf16.mxu0 0
    %5315 = vmatpush1.bf16.msra.mxu0 %v5102
    %5316 = vmatprep.subr.bf16.mxu0 0
    %5317 = vmatpush1.bf16.msra.mxu0 %v5103
    %5318 = vmatprep.subr.bf16.mxu0 0
    %5319 = vmatpush1.bf16.msra.mxu0 %v5104
    %5320 = vmatprep.subr.bf16.mxu0 0
    %5321 = vmatpush1.bf16.msra.mxu0 %v5105
    %5322 = vmatprep.mubr.bf16.mxu0 %v4531
    %5323 = vmatmul.mubr.bf16.gmra.mrb[0].mxu0 %v4530
    %v5324 = vpop.f32.mrb[0].mxu0
    %v5325 = vadd.f32 %v5285, %v5324
    %v5326 = vpop.f32.mrb[0].mxu0
    %v5327 = vpop.f32.mrb[0].mxu0
    %v5328 = vpop.f32.mrb[0].mxu0
    %5329 = vdwg.mxu0
    %5330 = vmatprep.subr.bf16.mxu0 0
    %5331 = vmatpush1.bf16.msra.mxu0 %v5106
    %5332 = vmatprep.subr.bf16.mxu0 0
    %5333 = vmatpush1.bf16.msra.mxu0 %v5107
    %5334 = vmatprep.subr.bf16.mxu0 0
    %5335 = vmatpush1.bf16.msra.mxu0 %v5108
    %5336 = vmatprep.subr.bf16.mxu0 0
    %5337 = vmatpush1.bf16.msra.mxu0 %v5109
    %5338 = vmatprep.subr.bf16.mxu0 0
    %5339 = vmatpush1.bf16.msra.mxu0 %v5110
    %5340 = vmatprep.subr.bf16.mxu0 0
    %5341 = vmatpush1.bf16.msra.mxu0 %v5111
    %5342 = vmatprep.subr.bf16.mxu0 0
    %5343 = vmatpush1.bf16.msra.mxu0 %v5112
    %5344 = vmatprep.subr.bf16.mxu0 0
    %5345 = vmatpush1.bf16.msra.mxu0 %v5113
    %5346 = vmatprep.subr.bf16.mxu0 0
    %5347 = vmatpush1.bf16.msra.mxu0 %v5114
    %5348 = vmatprep.subr.bf16.mxu0 0
    %5349 = vmatpush1.bf16.msra.mxu0 %v5115
    %5350 = vmatprep.subr.bf16.mxu0 0
    %5351 = vmatpush1.bf16.msra.mxu0 %v5116
    %5352 = vmatprep.subr.bf16.mxu0 0
    %5353 = vmatpush1.bf16.msra.mxu0 %v5117
    %5354 = vmatprep.subr.bf16.mxu0 0
    %5355 = vmatpush1.bf16.msra.mxu0 %v5118
    %5356 = vmatprep.subr.bf16.mxu0 0
    %5357 = vmatpush1.bf16.msra.mxu0 %v5119
    %5358 = vmatprep.subr.bf16.mxu0 0
    %5359 = vmatpush1.bf16.msra.mxu0 %v5120
    %5360 = vmatprep.subr.bf16.mxu0 0
    %5361 = vmatpush1.bf16.msra.mxu0 %v5121
    %5362 = vmatprep.mubr.bf16.mxu0 %v4533
    %5363 = vmatmul.mubr.bf16.gmra.mrb[0].mxu0 %v4532
    %v5364 = vpop.f32.mrb[0].mxu0
    %v5365 = vadd.f32 %v5325, %v5364
    %v5366 = vpop.f32.mrb[0].mxu0
    %v5367 = vpop.f32.mrb[0].mxu0
    %v5368 = vpop.f32.mrb[0].mxu0
    %5369 = vdwg.mxu0
    %5370 = vmatprep.subr.bf16.mxu0 0
    %5371 = vmatpush1.bf16.msra.mxu0 %v5122
    %5372 = vmatprep.subr.bf16.mxu0 0
    %5373 = vmatpush1.bf16.msra.mxu0 %v5123
    %5374 = vmatprep.subr.bf16.mxu0 0
    %5375 = vmatpush1.bf16.msra.mxu0 %v5124
    %5376 = vmatprep.subr.bf16.mxu0 0
    %5377 = vmatpush1.bf16.msra.mxu0 %v5125
    %5378 = vmatprep.subr.bf16.mxu0 0
    %5379 = vmatpush1.bf16.msra.mxu0 %v5126
    %5380 = vmatprep.subr.bf16.mxu0 0
    %5381 = vmatpush1.bf16.msra.mxu0 %v5127
    %5382 = vmatprep.subr.bf16.mxu0 0
    %5383 = vmatpush1.bf16.msra.mxu0 %v5128
    %5384 = vmatprep.subr.bf16.mxu0 0
    %5385 = vmatpush1.bf16.msra.mxu0 %v5129
    %5386 = vmatprep.subr.bf16.mxu0 0
    %5387 = vmatpush1.bf16.msra.mxu0 %v5130
    %5388 = vmatprep.subr.bf16.mxu0 0
    %5389 = vmatpush1.bf16.msra.mxu0 %v5131
    %5390 = vmatprep.subr.bf16.mxu0 0
    %5391 = vmatpush1.bf16.msra.mxu0 %v5132
    %5392 = vmatprep.subr.bf16.mxu0 0
    %5393 = vmatpush1.bf16.msra.mxu0 %v5133
    %5394 = vmatprep.subr.bf16.mxu0 0
    %5395 = vmatpush1.bf16.msra.mxu0 %v5134
    %5396 = vmatprep.subr.bf16.mxu0 0
    %5397 = vmatpush1.bf16.msra.mxu0 %v5135
    %5398 = vmatprep.subr.bf16.mxu0 0
    %5399 = vmatpush1.bf16.msra.mxu0 %v5136
    %5400 = vmatprep.subr.bf16.mxu0 0
    %5401 = vmatpush1.bf16.msra.mxu0 %v5137
    %5402 = vmatprep.mubr.bf16.mxu0 %v4535
    %5403 = vmatmul.mubr.bf16.gmra.mrb[0].mxu0 %v4534
    %v5404 = vpop.f32.mrb[0].mxu0
    %v5405 = vadd.f32 %v5365, %v5404
    %v5406 = vpop.f32.mrb[0].mxu0
    %v5407 = vpop.f32.mrb[0].mxu0
    %v5408 = vpop.f32.mrb[0].mxu0
    %5409 = vdwg.mxu0
    %5410 = vmatprep.subr.bf16.mxu0 0
    %5411 = vmatpush1.bf16.msra.mxu0 %v5138
    %5412 = vmatprep.subr.bf16.mxu0 0
    %5413 = vmatpush1.bf16.msra.mxu0 %v5139
    %5414 = vmatprep.subr.bf16.mxu0 0
    %5415 = vmatpush1.bf16.msra.mxu0 %v5140
    %5416 = vmatprep.subr.bf16.mxu0 0
    %5417 = vmatpush1.bf16.msra.mxu0 %v5141
    %5418 = vmatprep.subr.bf16.mxu0 0
    %5419 = vmatpush1.bf16.msra.mxu0 %v5142
    %5420 = vmatprep.subr.bf16.mxu0 0
    %5421 = vmatpush1.bf16.msra.mxu0 %v5143
    %5422 = vmatprep.subr.bf16.mxu0 0
    %5423 = vmatpush1.bf16.msra.mxu0 %v5144
    %5424 = vmatprep.subr.bf16.mxu0 0
    %5425 = vmatpush1.bf16.msra.mxu0 %v5145
    %5426 = vmatprep.subr.bf16.mxu0 0
    %5427 = vmatpush1.bf16.msra.mxu0 %v5146
    %5428 = vmatprep.subr.bf16.mxu0 0
    %5429 = vmatpush1.bf16.msra.mxu0 %v5147
    %5430 = vmatprep.subr.bf16.mxu0 0
    %5431 = vmatpush1.bf16.msra.mxu0 %v5148
    %5432 = vmatprep.subr.bf16.mxu0 0
    %5433 = vmatpush1.bf16.msra.mxu0 %v5149
    %5434 = vmatprep.subr.bf16.mxu0 0
    %5435 = vmatpush1.bf16.msra.mxu0 %v5150
    %5436 = vmatprep.subr.bf16.mxu0 0
    %5437 = vmatpush1.bf16.msra.mxu0 %v5151
    %5438 = vmatprep.subr.bf16.mxu0 0
    %5439 = vmatpush1.bf16.msra.mxu0 %v5152
    %5440 = vmatprep.subr.bf16.mxu0 0
    %5441 = vmatpush1.bf16.msra.mxu0 %v5153
    %5442 = vmatprep.mubr.bf16.mxu0 %v4537
    %5443 = vmatmul.mubr.bf16.gmra.mrb[0].mxu0 %v4536
    %v5444 = vpop.f32.mrb[0].mxu0
    %v5445 = vadd.f32 %v5405, %v5444
    %v5446 = vpop.f32.mrb[0].mxu0
    %v5447 = vpop.f32.mrb[0].mxu0
    %v5448 = vpop.f32.mrb[0].mxu0
    %5449 = vdwg.mxu0
    %5450 = vmatprep.subr.bf16.mxu0 0
    %5451 = vmatpush1.bf16.msra.mxu0 %v5154
    %5452 = vmatprep.subr.bf16.mxu0 0
    %5453 = vmatpush1.bf16.msra.mxu0 %v5155
    %5454 = vmatprep.subr.bf16.mxu0 0
    %5455 = vmatpush1.bf16.msra.mxu0 %v5156
    %5456 = vmatprep.subr.bf16.mxu0 0
    %5457 = vmatpush1.bf16.msra.mxu0 %v5157
    %5458 = vmatprep.subr.bf16.mxu0 0
    %5459 = vmatpush1.bf16.msra.mxu0 %v5158
    %5460 = vmatprep.subr.bf16.mxu0 0
    %5461 = vmatpush1.bf16.msra.mxu0 %v5159
    %5462 = vmatprep.subr.bf16.mxu0 0
    %5463 = vmatpush1.bf16.msra.mxu0 %v5160
    %5464 = vmatprep.subr.bf16.mxu0 0
    %5465 = vmatpush1.bf16.msra.mxu0 %v5161
    %5466 = vmatprep.subr.bf16.mxu0 0
    %5467 = vmatpush1.bf16.msra.mxu0 0
    %5468 = vmatprep.subr.bf16.mxu0 0
    %5469 = vmatpush1.bf16.msra.mxu0 0
    %5470 = vmatprep.subr.bf16.mxu0 0
    %5471 = vmatpush1.bf16.msra.mxu0 0
    %5472 = vmatprep.subr.bf16.mxu0 0
    %5473 = vmatpush1.bf16.msra.mxu0 0
    %5474 = vmatprep.subr.bf16.mxu0 0
    %5475 = vmatpush1.bf16.msra.mxu0 0
    %5476 = vmatprep.subr.bf16.mxu0 0
    %5477 = vmatpush1.bf16.msra.mxu0 0
    %5478 = vmatprep.subr.bf16.mxu0 0
    %5479 = vmatpush1.bf16.msra.mxu0 0
    %5480 = vmatprep.subr.bf16.mxu0 0
    %5481 = vmatpush1.bf16.msra.mxu0 0
    %5482 = vmatprep.mubr.bf16.mxu0 0
    %5483 = vmatmul.mubr.bf16.gmra.mrb[0].mxu0 %v4538
    %v5484 = vpop.f32.mrb[0].mxu0
    %v5485 = vadd.f32 %v5445, %v5484
    %v5486 = vpop.f32.mrb[0].mxu0
    %v5487 = vpop.f32.mrb[0].mxu0
    %v5488 = vpop.f32.mrb[0].mxu0
    %5489 = vdwg.mxu0
    %5490 = vmax.xlane.f32.xlu0 %v5485
    %v5491 = vpop.xlane.xlu0 %5490
    %v5492 = vsub.f32 %v5485, %v5491
    %v5493 = vmul.f32 %v5492, 1.442695
    %v5494 = vpow.pop %v5493
    %5495 = vadd.xlane.f32.xlu0 %v5494
    %v5496 = vpop.xlane.xlu0 %5495
    %v5497 = vrcp.pop %v5496
    %v5498 = vmul.f32 %v5494, %v5497
    %5499 = vst [vmem:[#allocation11] sm:$0xff] %v5498
    // Predicated region
    $region42: #{net_forward.1} parent=1 // pred_check
      _
    $region43: #{net_forward.1} parent=1 // pred_check_branch
      %5501 = sbr.rel (0) target = $region45
    $region44: #{net_forward.1} parent=1 // pred_region
      %s5503 = ssub.s32 128, 128
      %5504 = vsyncadd [#allocation4], %s5503
      %s5506 = sshll.u32 [#allocation11], 4
      %s5507 = int_to_ptr.vmem [resolvable:$true] %s5506
      %5509 = dma.vmem_to_hbm [thread:$0]  %s5507, 128, %s5, [#allocation4]
    $region45: #{net_forward.1} parent=1 // pred_fallthru
      _
    // Predicated region
    $region46: #{net_forward.1} parent=1 // pred_check
      _
    $region47: #{net_forward.1} parent=1 // pred_check_branch
      %5511 = sbr.rel (0) target = $region49
    $region48: #{net_forward.1} parent=1 // pred_region
      %5512 = dma.done [#allocation4], 128
    $region49: #{net_forward.1} parent=1 // pred_fallthru
      _
    %5513 = vsyncpa [#allocation3], 1
    %5514 = vsyncpa [#allocation6], 1
    %5515 = vsyncpa [#allocation9], 1
    %5516 = vsyncpa [#allocation4], 1

</llo_original>
